<compile_context>
chip_gen: v6e
topology: v6e:2x2x1
jax: 0.10.0
libtpu: 0.0.40
codegen_flags: <defaults>
</compile_context>

<pallas_src>
import functools
import math

import jax
import jax.numpy as jnp
from jax import lax
from jax.experimental import pallas as pl
from jax.experimental.pallas import tpu as pltpu

# ---------------- config (small, deterministic "bert-like" model) ------------
CFG = dict(
    vocab=64,        # vocab size
    max_pos=16,      # max position embeddings
    hidden=32,       # hidden size (bert-base: 768)
    heads=4,         # attention heads (bert-base: 12)
    head_dim=8,      # hidden // heads
    inter=64,        # FFN intermediate size (bert-base: 3072)
    layers=2,        # encoder layers (bert-base: 12)
    n_classes=3,     # sentiment classes
)

_LOGIT_PAD = 128                     # lane-dense classifier output width
_GELU_C = 0.7978845608028654         # sqrt(2/pi), hoisted


# ------------------------------ kernel helpers --------------------------------
def _layer_norm(x, g, b):
    # single-pass statistics: E[x] and E[x^2]
    mu = jnp.mean(x, axis=-1, keepdims=True)
    ms = jnp.mean(x * x, axis=-1, keepdims=True)
    var = ms - mu * mu
    return (x - mu) * lax.rsqrt(var + 1e-12) * g + b


def _gelu_tanh(x):
    # tanh-approx GELU: tanh goes to the EUP slot (cheap vs erf polynomial).
    return 0.5 * x * (1.0 + jnp.tanh(_GELU_C * (x + 0.044715 * x * x * x)))


# ---------------------------- fused Pallas kernel -----------------------------
def _fused_bert_kernel(ids_ref,                      # SMEM scalar prefetch (B,S)
                       mask_ref, emb_ref,
                       wqkv_ref, wo_ref, w1_ref, w2_ref,
                       lvec_ref, mvec_ref, wp_ref, wc_ref,
                       o_ref,
                       *, seq, heads, head_dim, layers, vocab, inter):
    hidden = heads * head_dim
    scale = 1.0 / math.sqrt(head_dim)
    b = pl.program_id(0)

    # ---- packed non-layer vectors: (8, 128) f32 ----
    mv = mvec_ref[...]
    emb_g = mv[0:1, :hidden]          # embedding LayerNorm gamma
    emb_b = mv[1:2, :hidden]          # embedding LayerNorm beta
    bp = mv[2:3, :hidden]             # pooler bias
    bc = mv[3:4, :]                   # classifier bias (lane-dense, padded)

    # ---- in-kernel embedding gather as a one-hot MXU matmul (no XLA gather) --
    table = emb_ref[...]                                        # (V+P, H) f32
    lane_ids = lax.broadcasted_iota(jnp.int32, (seq, vocab), 1)
    row_ids = lax.broadcasted_iota(jnp.int32, (seq, vocab), 0)
    onehot = jnp.zeros((seq, vocab), jnp.float32)
    for s in range(seq):                                        # static unroll
        tok = ids_ref[b, s]                                     # SMEM scalar
        onehot = onehot + ((row_ids == s) & (lane_ids == tok)).astype(jnp.float32)
    x = jnp.dot(onehot, table[:vocab, :], preferred_element_type=jnp.float32)
    x = x + table[vocab:vocab + seq, :]     # + (position + token-type-0) rows
    x = _layer_norm(x, emb_g, emb_b)
    # embedding / hidden dropouts: identity in eval mode.

    # ---- additive attention bias, broadcast ONCE (hoisted out of the loop) ---
    bias = (1.0 - mask_ref[...]) * -10000.0                     # (1, 1, S)
    bias_b = jnp.broadcast_to(bias, (heads, seq, seq))

    for l in range(layers):                                     # static unroll
        lv = lvec_ref[l]                                        # (8, 128) f32

        # ---- fused QKV projection: one (S,H)@(H,3H) bf16 MXU pass ----
        qkv = jnp.dot(x.astype(jnp.bfloat16), wqkv_ref[l],
                      preferred_element_type=jnp.float32) + lv[0:1, :3 * hidden]
        q = qkv[:, 0 * hidden:1 * hidden]
        k = qkv[:, 1 * hidden:2 * hidden]
        v = qkv[:, 2 * hidden:3 * hidden]

        # ---- all heads batched: one score einsum + one context einsum ----
        qh = jnp.stack([q[:, h * head_dim:(h + 1) * head_dim]
                        for h in range(heads)], axis=0)         # (h, S, Dh)
        kh = jnp.stack([k[:, h * head_dim:(h + 1) * head_dim]
                        for h in range(heads)], axis=0)
        vh = jnp.stack([v[:, h * head_dim:(h + 1) * head_dim]
                        for h in range(heads)], axis=0)
        sc = jnp.einsum("hqd,hkd->hqk", qh, kh,
                        preferred_element_type=jnp.float32) * scale + bias_b
        mx = jnp.max(sc, axis=-1, keepdims=True)
        p = jnp.exp(sc - mx)
        p = p * pl.reciprocal(jnp.sum(p, axis=-1, keepdims=True), approx=True)
        ctx = jnp.einsum("hqk,hkd->hqd", p, vh,
                         preferred_element_type=jnp.float32)    # (h, S, Dh)

        # ---- ONE output projection on the concatenated context ----
        ctx_cat = jnp.concatenate([ctx[h] for h in range(heads)], axis=1)
        attn = jnp.dot(ctx_cat.astype(jnp.bfloat16), wo_ref[l],
                       preferred_element_type=jnp.float32) + lv[1:2, :hidden]

        # residual + LayerNorm
        x = _layer_norm(x + attn, lv[4:5, :hidden], lv[5:6, :hidden])

        # ---- FFN: GELU(x@W1 + b1)@W2 + b2, residual, LayerNorm ----
        h1 = jnp.dot(x.astype(jnp.bfloat16), w1_ref[l],
                     preferred_element_type=jnp.float32) + lv[2:3, :inter]
        h1 = _gelu_tanh(h1)
        ffn = jnp.dot(h1.astype(jnp.bfloat16), w2_ref[l],
                      preferred_element_type=jnp.float32) + lv[3:4, :hidden]
        x = _layer_norm(x + ffn, lv[6:7, :hidden], lv[7:8, :hidden])

    # ---- BERT pooler on [CLS] + dropout(eval: identity) + classifier ----
    cls = x[0:1, :]                                             # (1, H)
    pooled = jnp.tanh(jnp.dot(cls.astype(jnp.bfloat16), wp_ref[...],
                              preferred_element_type=jnp.float32) + bp)
    # TODO(synk): training-mode dropout (p=0.3) would use pltpu.prng_* masking.
    logits = jnp.dot(pooled.astype(jnp.bfloat16), wc_ref[...],
                     preferred_element_type=jnp.float32) + bc   # (1, 128)
    o_ref[0] = logits                                           # lane-dense write


# -------------------------- parameter construction ---------------------------
def make_params(key):
    H, I, V, P, C, L = (CFG["hidden"], CFG["inter"], CFG["vocab"],
                        CFG["max_pos"], CFG["n_classes"], CFG["layers"])
    assert CFG["heads"] * CFG["head_dim"] == H
    ks = iter(jax.random.split(key, 16 + 12 * L))

    def nrm(shape):
        return 0.02 * jax.random.normal(next(ks), shape, dtype=jnp.float32)

    # embedding table: word rows, then (position + token-type-0) rows pre-added.
    word_emb = nrm((V, H))
    pos_emb = nrm((P, H))
    type_emb = nrm((2, H))
    emb_table = jnp.concatenate([word_emb, pos_emb + type_emb[0][None, :]], 0)

    wqkv, wo, w1, w2 = [], [], [], []
    lvec = jnp.zeros((L, 8, 128), jnp.float32)      # packed per-layer vectors
    for l in range(L):
        wq, wk, wv = nrm((H, H)), nrm((H, H)), nrm((H, H))
        wqkv.append(jnp.concatenate([wq, wk, wv], axis=1))        # (H, 3H)
        wo.append(nrm((H, H)))
        w1.append(nrm((H, I)))
        w2.append(nrm((I, H)))
        lvec = lvec.at[l, 0, :3 * H].set(nrm((3 * H,)))           # bqkv
        lvec = lvec.at[l, 1, :H].set(nrm((H,)))                   # bo
        lvec = lvec.at[l, 2, :I].set(nrm((I,)))                   # b1
        lvec = lvec.at[l, 3, :H].set(nrm((H,)))                   # b2
        lvec = lvec.at[l, 4, :H].set(jnp.ones((H,)))              # ln1 gamma
        lvec = lvec.at[l, 5, :H].set(jnp.zeros((H,)))             # ln1 beta
        lvec = lvec.at[l, 6, :H].set(jnp.ones((H,)))              # ln2 gamma
        lvec = lvec.at[l, 7, :H].set(jnp.zeros((H,)))             # ln2 beta

    wp = nrm((H, H))                                              # pooler
    wc = nrm((H, C))                                              # self.out
    wc_pad = jnp.zeros((H, _LOGIT_PAD), jnp.float32).at[:, :C].set(wc)

    mvec = jnp.zeros((8, 128), jnp.float32)         # packed non-layer vectors
    mvec = mvec.at[0, :H].set(jnp.ones((H,)))                     # emb LN gamma
    mvec = mvec.at[1, :H].set(jnp.zeros((H,)))                    # emb LN beta
    mvec = mvec.at[2, :H].set(nrm((H,)))                          # pooler bias
    mvec = mvec.at[3, :C].set(nrm((C,)))                          # classifier bias

    return dict(
        emb_table=emb_table,                                      # f32 (V+P, H)
        wqkv=jnp.stack(wqkv).astype(jnp.bfloat16),                # (L, H, 3H)
        wo=jnp.stack(wo).astype(jnp.bfloat16),                    # (L, H, H)
        w1=jnp.stack(w1).astype(jnp.bfloat16),                    # (L, H, I)
        w2=jnp.stack(w2).astype(jnp.bfloat16),                    # (L, I, H)
        wp=wp.astype(jnp.bfloat16),                               # (H, H)
        wc_pad=wc_pad.astype(jnp.bfloat16),                       # (H, 128)
        layer_vecs=lvec,                                          # f32 (L, 8, 128)
        misc_vecs=mvec,                                           # f32 (8, 128)
    )


# ------------------------------ forward pass ----------------------------------
def sentiment_classifier_forward(params, input_ids, attention_mask):
    B, S = input_ids.shape
    H, I, V, P, C, L = (CFG["hidden"], CFG["inter"], CFG["vocab"],
                        CFG["max_pos"], CFG["n_classes"], CFG["layers"])
    nH, Dh = CFG["heads"], CFG["head_dim"]
    assert S <= P

    kernel = functools.partial(_fused_bert_kernel, seq=S, heads=nH,
                               head_dim=Dh, layers=L, vocab=V, inter=I)

    grid_spec = pltpu.PrefetchScalarGridSpec(
        num_scalar_prefetch=1,            # input_ids -> SMEM
        grid=(B,),                        # one program per batch element
        in_specs=[
            pl.BlockSpec((1, 1, S), lambda b, ids: (b, 0, 0)),          # mask
            pl.BlockSpec((V + P, H), lambda b, ids: (0, 0)),            # emb table
            pl.BlockSpec((L, H, 3 * H), lambda b, ids: (0, 0, 0)),      # wqkv
            pl.BlockSpec((L, H, H), lambda b, ids: (0, 0, 0)),          # wo
            pl.BlockSpec((L, H, I), lambda b, ids: (0, 0, 0)),          # w1
            pl.BlockSpec((L, I, H), lambda b, ids: (0, 0, 0)),          # w2
            pl.BlockSpec((L, 8, 128), lambda b, ids: (0, 0, 0)),        # layer vecs
            pl.BlockSpec((8, 128), lambda b, ids: (0, 0)),              # misc vecs
            pl.BlockSpec((H, H), lambda b, ids: (0, 0)),                # wp
            pl.BlockSpec((H, _LOGIT_PAD), lambda b, ids: (0, 0)),       # wc_pad
        ],
        out_specs=pl.BlockSpec((1, 1, _LOGIT_PAD), lambda b, ids: (b, 0, 0)),
    )

    logits_pad = pl.pallas_call(
        kernel,
        out_shape=jax.ShapeDtypeStruct((B, 1, _LOGIT_PAD), jnp.float32),
        grid_spec=grid_spec,
        compiler_params=pltpu.CompilerParams(
            dimension_semantics=("parallel",),       # v7x: batch across both TCs
            vmem_limit_bytes=32 * 1024 * 1024),      # generous; footprint ~100 KiB
    )(
        input_ids.astype(jnp.int32),                              # scalar prefetch
        attention_mask.astype(jnp.float32).reshape(B, 1, S),
        params["emb_table"],
        params["wqkv"], params["wo"], params["w1"], params["w2"],
        params["layer_vecs"], params["misc_vecs"],
        params["wp"], params["wc_pad"],
    )
    return logits_pad[:, 0, :C]


# --------------------------------- main ---------------------------------------
if __name__ == "__main__":
    key = jax.random.PRNGKey(0)
    kp, ki = jax.random.split(key)
    params = make_params(kp)

    B, S = 2, 8
    input_ids = jax.random.randint(ki, (B, S), 0, CFG["vocab"], dtype=jnp.int32)
    attention_mask = jnp.array([[1, 1, 1, 1, 1, 1, 0, 0],
                                [1, 1, 1, 1, 0, 0, 0, 0]], dtype=jnp.int32)

    logits = jax.jit(sentiment_classifier_forward)(params, input_ids,
                                                   attention_mask)
    logits = jax.block_until_ready(logits)
    assert logits.shape == (B, CFG["n_classes"])
    assert bool(jnp.all(jnp.isfinite(logits)))
    print("KERNEL_OK")
</pallas_src>

<mosaic_0001>
module attributes {stable_mosaic.version = 11 : i64} {
  func.func @_fused_bert_kernel(%arg0: i32, %arg1: memref<2x8xi32, #tpu.memory_space<smem>>, %arg2: memref<1x1x8xf32, #tpu.memory_space<vmem>>, %arg3: memref<80x32xf32, #tpu.memory_space<vmem>>, %arg4: memref<2x32x96xbf16, #tpu.memory_space<vmem>>, %arg5: memref<2x32x32xbf16, #tpu.memory_space<vmem>>, %arg6: memref<2x32x64xbf16, #tpu.memory_space<vmem>>, %arg7: memref<2x64x32xbf16, #tpu.memory_space<vmem>>, %arg8: memref<2x8x128xf32, #tpu.memory_space<vmem>>, %arg9: memref<8x128xf32, #tpu.memory_space<vmem>>, %arg10: memref<32x32xbf16, #tpu.memory_space<vmem>>, %arg11: memref<32x128xbf16, #tpu.memory_space<vmem>>, %arg12: memref<1x1x128xf32, #tpu.memory_space<vmem>>) attributes {dimension_semantics = [#tpu.dimension_semantics<parallel>], iteration_bounds = array<i64: 2>, scalar_prefetch = 1 : i64, scratch_operands = 0 : i64, tpu.core_type = #tpu.core_type<tc>, window_params = [{transform_indices = @transform_0, window_bounds = array<i64: 1, 1, 8>}, {pipeline_mode = #tpu.pipeline_mode<synchronous>, transform_indices = @transform_1, window_bounds = array<i64: 80, 32>}, {pipeline_mode = #tpu.pipeline_mode<synchronous>, transform_indices = @transform_2, window_bounds = array<i64: 2, 32, 96>}, {pipeline_mode = #tpu.pipeline_mode<synchronous>, transform_indices = @transform_3, window_bounds = array<i64: 2, 32, 32>}, {pipeline_mode = #tpu.pipeline_mode<synchronous>, transform_indices = @transform_4, window_bounds = array<i64: 2, 32, 64>}, {pipeline_mode = #tpu.pipeline_mode<synchronous>, transform_indices = @transform_5, window_bounds = array<i64: 2, 64, 32>}, {pipeline_mode = #tpu.pipeline_mode<synchronous>, transform_indices = @transform_6, window_bounds = array<i64: 2, 8, 128>}, {pipeline_mode = #tpu.pipeline_mode<synchronous>, transform_indices = @transform_7, window_bounds = array<i64: 8, 128>}, {pipeline_mode = #tpu.pipeline_mode<synchronous>, transform_indices = @transform_8, window_bounds = array<i64: 32, 32>}, {pipeline_mode = #tpu.pipeline_mode<synchronous>, transform_indices = @transform_9, window_bounds = array<i64: 32, 128>}, {transform_indices = @transform_10, window_bounds = array<i64: 1, 1, 128>}]} {
    %c0 = arith.constant 0 : index
    %c0_0 = arith.constant 0 : index
    %0 = vector.load %arg9[%c0, %c0_0] : memref<8x128xf32, #tpu.memory_space<vmem>>, vector<8x128xf32>
    %1 = vector.extract_strided_slice %0 {offsets = [0, 0], sizes = [1, 32], strides = [1, 1]} : vector<8x128xf32> to vector<1x32xf32>
    %2 = vector.extract_strided_slice %0 {offsets = [1, 0], sizes = [1, 32], strides = [1, 1]} : vector<8x128xf32> to vector<1x32xf32>
    %3 = vector.extract_strided_slice %0 {offsets = [2, 0], sizes = [1, 32], strides = [1, 1]} : vector<8x128xf32> to vector<1x32xf32>
    %4 = vector.extract_strided_slice %0 {offsets = [3, 0], sizes = [1, 128], strides = [1, 1]} : vector<8x128xf32> to vector<1x128xf32>
    %c0_1 = arith.constant 0 : index
    %c0_2 = arith.constant 0 : index
    %5 = vector.load %arg3[%c0_1, %c0_2] : memref<80x32xf32, #tpu.memory_space<vmem>>, vector<80x32xf32>
    %6 = tpu.iota {dimensions = array<i32: 1>} : vector<8x64xi32>
    %7 = tpu.iota {dimensions = array<i32: 0>} : vector<8x64xi32>
    %cst = arith.constant 0.000000e+00 : f32
    %8 = vector.broadcast %cst : f32 to vector<8x64xf32>
    %9 = arith.index_cast %arg0 : i32 to index
    %c0_3 = arith.constant 0 : index
    %10 = memref.load %arg1[%9, %c0_3] : memref<2x8xi32, #tpu.memory_space<smem>>
    %c0_i32 = arith.constant 0 : i32
    %11 = vector.broadcast %c0_i32 : i32 to vector<8x64xi32>
    %12 = arith.cmpi eq, %7, %11 : vector<8x64xi32>
    %13 = vector.broadcast %10 : i32 to vector<8x64xi32>
    %14 = arith.cmpi eq, %6, %13 : vector<8x64xi32>
    %15 = arith.andi %12, %14 : vector<8x64xi1>
    %16 = arith.extui %15 : vector<8x64xi1> to vector<8x64xi32>
    %17 = arith.sitofp %16 : vector<8x64xi32> to vector<8x64xf32>
    %18 = arith.addf %8, %17 : vector<8x64xf32>
    %19 = arith.index_cast %arg0 : i32 to index
    %c1 = arith.constant 1 : index
    %20 = memref.load %arg1[%19, %c1] : memref<2x8xi32, #tpu.memory_space<smem>>
    %c1_i32 = arith.constant 1 : i32
    %21 = vector.broadcast %c1_i32 : i32 to vector<8x64xi32>
    %22 = arith.cmpi eq, %7, %21 : vector<8x64xi32>
    %23 = vector.broadcast %20 : i32 to vector<8x64xi32>
    %24 = arith.cmpi eq, %6, %23 : vector<8x64xi32>
    %25 = arith.andi %22, %24 : vector<8x64xi1>
    %26 = arith.extui %25 : vector<8x64xi1> to vector<8x64xi32>
    %27 = arith.sitofp %26 : vector<8x64xi32> to vector<8x64xf32>
    %28 = arith.addf %18, %27 : vector<8x64xf32>
    %29 = arith.index_cast %arg0 : i32 to index
    %c2 = arith.constant 2 : index
    %30 = memref.load %arg1[%29, %c2] : memref<2x8xi32, #tpu.memory_space<smem>>
    %c2_i32 = arith.constant 2 : i32
    %31 = vector.broadcast %c2_i32 : i32 to vector<8x64xi32>
    %32 = arith.cmpi eq, %7, %31 : vector<8x64xi32>
    %33 = vector.broadcast %30 : i32 to vector<8x64xi32>
    %34 = arith.cmpi eq, %6, %33 : vector<8x64xi32>
    %35 = arith.andi %32, %34 : vector<8x64xi1>
    %36 = arith.extui %35 : vector<8x64xi1> to vector<8x64xi32>
    %37 = arith.sitofp %36 : vector<8x64xi32> to vector<8x64xf32>
    %38 = arith.addf %28, %37 : vector<8x64xf32>
    %39 = arith.index_cast %arg0 : i32 to index
    %c3 = arith.constant 3 : index
    %40 = memref.load %arg1[%39, %c3] : memref<2x8xi32, #tpu.memory_space<smem>>
    %c3_i32 = arith.constant 3 : i32
    %41 = vector.broadcast %c3_i32 : i32 to vector<8x64xi32>
    %42 = arith.cmpi eq, %7, %41 : vector<8x64xi32>
    %43 = vector.broadcast %40 : i32 to vector<8x64xi32>
    %44 = arith.cmpi eq, %6, %43 : vector<8x64xi32>
    %45 = arith.andi %42, %44 : vector<8x64xi1>
    %46 = arith.extui %45 : vector<8x64xi1> to vector<8x64xi32>
    %47 = arith.sitofp %46 : vector<8x64xi32> to vector<8x64xf32>
    %48 = arith.addf %38, %47 : vector<8x64xf32>
    %49 = arith.index_cast %arg0 : i32 to index
    %c4 = arith.constant 4 : index
    %50 = memref.load %arg1[%49, %c4] : memref<2x8xi32, #tpu.memory_space<smem>>
    %c4_i32 = arith.constant 4 : i32
    %51 = vector.broadcast %c4_i32 : i32 to vector<8x64xi32>
    %52 = arith.cmpi eq, %7, %51 : vector<8x64xi32>
    %53 = vector.broadcast %50 : i32 to vector<8x64xi32>
    %54 = arith.cmpi eq, %6, %53 : vector<8x64xi32>
    %55 = arith.andi %52, %54 : vector<8x64xi1>
    %56 = arith.extui %55 : vector<8x64xi1> to vector<8x64xi32>
    %57 = arith.sitofp %56 : vector<8x64xi32> to vector<8x64xf32>
    %58 = arith.addf %48, %57 : vector<8x64xf32>
    %59 = arith.index_cast %arg0 : i32 to index
    %c5 = arith.constant 5 : index
    %60 = memref.load %arg1[%59, %c5] : memref<2x8xi32, #tpu.memory_space<smem>>
    %c5_i32 = arith.constant 5 : i32
    %61 = vector.broadcast %c5_i32 : i32 to vector<8x64xi32>
    %62 = arith.cmpi eq, %7, %61 : vector<8x64xi32>
    %63 = vector.broadcast %60 : i32 to vector<8x64xi32>
    %64 = arith.cmpi eq, %6, %63 : vector<8x64xi32>
    %65 = arith.andi %62, %64 : vector<8x64xi1>
    %66 = arith.extui %65 : vector<8x64xi1> to vector<8x64xi32>
    %67 = arith.sitofp %66 : vector<8x64xi32> to vector<8x64xf32>
    %68 = arith.addf %58, %67 : vector<8x64xf32>
    %69 = arith.index_cast %arg0 : i32 to index
    %c6 = arith.constant 6 : index
    %70 = memref.load %arg1[%69, %c6] : memref<2x8xi32, #tpu.memory_space<smem>>
    %c6_i32 = arith.constant 6 : i32
    %71 = vector.broadcast %c6_i32 : i32 to vector<8x64xi32>
    %72 = arith.cmpi eq, %7, %71 : vector<8x64xi32>
    %73 = vector.broadcast %70 : i32 to vector<8x64xi32>
    %74 = arith.cmpi eq, %6, %73 : vector<8x64xi32>
    %75 = arith.andi %72, %74 : vector<8x64xi1>
    %76 = arith.extui %75 : vector<8x64xi1> to vector<8x64xi32>
    %77 = arith.sitofp %76 : vector<8x64xi32> to vector<8x64xf32>
    %78 = arith.addf %68, %77 : vector<8x64xf32>
    %79 = arith.index_cast %arg0 : i32 to index
    %c7 = arith.constant 7 : index
    %80 = memref.load %arg1[%79, %c7] : memref<2x8xi32, #tpu.memory_space<smem>>
    %c7_i32 = arith.constant 7 : i32
    %81 = vector.broadcast %c7_i32 : i32 to vector<8x64xi32>
    %82 = arith.cmpi eq, %7, %81 : vector<8x64xi32>
    %83 = vector.broadcast %80 : i32 to vector<8x64xi32>
    %84 = arith.cmpi eq, %6, %83 : vector<8x64xi32>
    %85 = arith.andi %82, %84 : vector<8x64xi1>
    %86 = arith.extui %85 : vector<8x64xi1> to vector<8x64xi32>
    %87 = arith.sitofp %86 : vector<8x64xi32> to vector<8x64xf32>
    %88 = arith.addf %78, %87 : vector<8x64xf32>
    %89 = vector.extract_strided_slice %5 {offsets = [0, 0], sizes = [64, 32], strides = [1, 1]} : vector<80x32xf32> to vector<64x32xf32>
    %cst_4 = arith.constant dense<0.000000e+00> : vector<8x32xf32>
    %90 = tpu.matmul %88, %89, %cst_4 {dimension_numbers = #tpu.dot_dimension_numbers<[1], [0], [0], [1], [0, 0, 1, 1], [], []>} : vector<8x64xf32>, vector<64x32xf32>, vector<8x32xf32> -> vector<8x32xf32>
    %91 = vector.extract_strided_slice %5 {offsets = [64, 0], sizes = [8, 32], strides = [1, 1]} : vector<80x32xf32> to vector<8x32xf32>
    %92 = arith.addf %90, %91 : vector<8x32xf32>
    %cst_5 = arith.constant dense<0.000000e+00> : vector<8xf32>
    %93 = vector.multi_reduction <add>, %92, %cst_5 [1] : vector<8x32xf32> to vector<8xf32>
    %94 = vector.shape_cast %93 : vector<8xf32> to vector<8x1xf32>
    %cst_6 = arith.constant 3.200000e+01 : f32
    %95 = vector.broadcast %cst_6 : f32 to vector<8x1xf32>
    %96 = arith.divf %94, %95 : vector<8x1xf32>
    %97 = arith.mulf %92, %92 : vector<8x32xf32>
    %cst_7 = arith.constant dense<0.000000e+00> : vector<8xf32>
    %98 = vector.multi_reduction <add>, %97, %cst_7 [1] : vector<8x32xf32> to vector<8xf32>
    %99 = vector.shape_cast %98 : vector<8xf32> to vector<8x1xf32>
    %cst_8 = arith.constant 3.200000e+01 : f32
    %100 = vector.broadcast %cst_8 : f32 to vector<8x1xf32>
    %101 = arith.divf %99, %100 : vector<8x1xf32>
    %102 = arith.mulf %96, %96 : vector<8x1xf32>
    %103 = arith.subf %101, %102 : vector<8x1xf32>
    %104 = vector.broadcast %96 : vector<8x1xf32> to vector<8x32xf32>
    %105 = arith.subf %92, %104 : vector<8x32xf32>
    %cst_9 = arith.constant 9.99999996E-13 : f32
    %106 = vector.broadcast %cst_9 : f32 to vector<8x1xf32>
    %107 = arith.addf %103, %106 : vector<8x1xf32>
    %108 = math.rsqrt %107 : vector<8x1xf32>
    %109 = vector.broadcast %108 : vector<8x1xf32> to vector<8x32xf32>
    %110 = arith.mulf %105, %109 : vector<8x32xf32>
    %111 = vector.broadcast %1 : vector<1x32xf32> to vector<8x32xf32>
    %112 = arith.mulf %110, %111 : vector<8x32xf32>
    %113 = vector.broadcast %2 : vector<1x32xf32> to vector<8x32xf32>
    %114 = arith.addf %112, %113 : vector<8x32xf32>
    %c0_10 = arith.constant 0 : index
    %c0_11 = arith.constant 0 : index
    %c0_12 = arith.constant 0 : index
    %115 = vector.load %arg2[%c0_10, %c0_11, %c0_12] : memref<1x1x8xf32, #tpu.memory_space<vmem>>, vector<1x1x8xf32>
    %cst_13 = arith.constant 1.000000e+00 : f32
    %116 = vector.broadcast %cst_13 : f32 to vector<1x1x8xf32>
    %117 = arith.subf %116, %115 : vector<1x1x8xf32>
    %cst_14 = arith.constant -1.000000e+04 : f32
    %118 = vector.broadcast %cst_14 : f32 to vector<1x1x8xf32>
    %119 = arith.mulf %117, %118 : vector<1x1x8xf32>
    %120 = vector.shape_cast %119 : vector<1x1x8xf32> to vector<1x1x8xf32>
    %121 = vector.broadcast %120 : vector<1x1x8xf32> to vector<4x8x8xf32>
    %c0_15 = arith.constant 0 : index
    %c0_16 = arith.constant 0 : index
    %c0_17 = arith.constant 0 : index
    %122 = vector.load %arg8[%c0_15, %c0_16, %c0_17] : memref<2x8x128xf32, #tpu.memory_space<vmem>>, vector<1x8x128xf32>
    %123 = vector.shape_cast %122 : vector<1x8x128xf32> to vector<8x128xf32>
    %124 = arith.truncf %114 : vector<8x32xf32> to vector<8x32xbf16>
    %c0_18 = arith.constant 0 : index
    %c0_19 = arith.constant 0 : index
    %c0_20 = arith.constant 0 : index
    %125 = vector.load %arg4[%c0_18, %c0_19, %c0_20] : memref<2x32x96xbf16, #tpu.memory_space<vmem>>, vector<1x32x96xbf16>
    %126 = vector.shape_cast %125 : vector<1x32x96xbf16> to vector<32x96xbf16>
    %cst_21 = arith.constant dense<0.000000e+00> : vector<8x96xf32>
    %127 = tpu.matmul %124, %126, %cst_21 {dimension_numbers = #tpu.dot_dimension_numbers<[1], [0], [0], [1], [0, 0, 1, 1], [], []>} : vector<8x32xbf16>, vector<32x96xbf16>, vector<8x96xf32> -> vector<8x96xf32>
    %128 = vector.extract_strided_slice %123 {offsets = [0, 0], sizes = [1, 96], strides = [1, 1]} : vector<8x128xf32> to vector<1x96xf32>
    %129 = vector.broadcast %128 : vector<1x96xf32> to vector<8x96xf32>
    %130 = arith.addf %127, %129 : vector<8x96xf32>
    %131 = vector.extract_strided_slice %130 {offsets = [0, 0], sizes = [8, 32], strides = [1, 1]} : vector<8x96xf32> to vector<8x32xf32>
    %132 = vector.extract_strided_slice %130 {offsets = [0, 32], sizes = [8, 32], strides = [1, 1]} : vector<8x96xf32> to vector<8x32xf32>
    %133 = vector.extract_strided_slice %130 {offsets = [0, 64], sizes = [8, 32], strides = [1, 1]} : vector<8x96xf32> to vector<8x32xf32>
    %134 = vector.extract_strided_slice %131 {offsets = [0, 0], sizes = [8, 8], strides = [1, 1]} : vector<8x32xf32> to vector<8x8xf32>
    %135 = vector.extract_strided_slice %131 {offsets = [0, 8], sizes = [8, 8], strides = [1, 1]} : vector<8x32xf32> to vector<8x8xf32>
    %136 = vector.extract_strided_slice %131 {offsets = [0, 16], sizes = [8, 8], strides = [1, 1]} : vector<8x32xf32> to vector<8x8xf32>
    %137 = vector.extract_strided_slice %131 {offsets = [0, 24], sizes = [8, 8], strides = [1, 1]} : vector<8x32xf32> to vector<8x8xf32>
    %138 = vector.shape_cast %134 : vector<8x8xf32> to vector<1x8x8xf32>
    %139 = vector.shape_cast %135 : vector<8x8xf32> to vector<1x8x8xf32>
    %140 = vector.shape_cast %136 : vector<8x8xf32> to vector<1x8x8xf32>
    %141 = vector.shape_cast %137 : vector<8x8xf32> to vector<1x8x8xf32>
    %142 = tpu.concatenate %138, %139, %140, %141 in 0 : vector<1x8x8xf32>, vector<1x8x8xf32>, vector<1x8x8xf32>, vector<1x8x8xf32> -> vector<4x8x8xf32>
    %143 = vector.extract_strided_slice %132 {offsets = [0, 0], sizes = [8, 8], strides = [1, 1]} : vector<8x32xf32> to vector<8x8xf32>
    %144 = vector.extract_strided_slice %132 {offsets = [0, 8], sizes = [8, 8], strides = [1, 1]} : vector<8x32xf32> to vector<8x8xf32>
    %145 = vector.extract_strided_slice %132 {offsets = [0, 16], sizes = [8, 8], strides = [1, 1]} : vector<8x32xf32> to vector<8x8xf32>
    %146 = vector.extract_strided_slice %132 {offsets = [0, 24], sizes = [8, 8], strides = [1, 1]} : vector<8x32xf32> to vector<8x8xf32>
    %147 = vector.shape_cast %143 : vector<8x8xf32> to vector<1x8x8xf32>
    %148 = vector.shape_cast %144 : vector<8x8xf32> to vector<1x8x8xf32>
    %149 = vector.shape_cast %145 : vector<8x8xf32> to vector<1x8x8xf32>
    %150 = vector.shape_cast %146 : vector<8x8xf32> to vector<1x8x8xf32>
    %151 = tpu.concatenate %147, %148, %149, %150 in 0 : vector<1x8x8xf32>, vector<1x8x8xf32>, vector<1x8x8xf32>, vector<1x8x8xf32> -> vector<4x8x8xf32>
    %152 = vector.extract_strided_slice %133 {offsets = [0, 0], sizes = [8, 8], strides = [1, 1]} : vector<8x32xf32> to vector<8x8xf32>
    %153 = vector.extract_strided_slice %133 {offsets = [0, 8], sizes = [8, 8], strides = [1, 1]} : vector<8x32xf32> to vector<8x8xf32>
    %154 = vector.extract_strided_slice %133 {offsets = [0, 16], sizes = [8, 8], strides = [1, 1]} : vector<8x32xf32> to vector<8x8xf32>
    %155 = vector.extract_strided_slice %133 {offsets = [0, 24], sizes = [8, 8], strides = [1, 1]} : vector<8x32xf32> to vector<8x8xf32>
    %156 = vector.shape_cast %152 : vector<8x8xf32> to vector<1x8x8xf32>
    %157 = vector.shape_cast %153 : vector<8x8xf32> to vector<1x8x8xf32>
    %158 = vector.shape_cast %154 : vector<8x8xf32> to vector<1x8x8xf32>
    %159 = vector.shape_cast %155 : vector<8x8xf32> to vector<1x8x8xf32>
    %160 = tpu.concatenate %156, %157, %158, %159 in 0 : vector<1x8x8xf32>, vector<1x8x8xf32>, vector<1x8x8xf32>, vector<1x8x8xf32> -> vector<4x8x8xf32>
    "tpu.trace_start"() <{level = 10 : i32, message = "hqd,hkd->hqk"}> : () -> ()
    %cst_22 = arith.constant dense<0.000000e+00> : vector<4x8x8xf32>
    %161 = tpu.matmul %142, %151, %cst_22 {dimension_numbers = #tpu.dot_dimension_numbers<[2], [2], [1], [1], [0, 0, 0, 1, 1, 1], [0], [0]>} : vector<4x8x8xf32>, vector<4x8x8xf32>, vector<4x8x8xf32> -> vector<4x8x8xf32>
    "tpu.trace_stop"() : () -> ()
    %cst_23 = arith.constant 0.353553385 : f32
    %162 = vector.broadcast %cst_23 : f32 to vector<4x8x8xf32>
    %163 = arith.mulf %161, %162 : vector<4x8x8xf32>
    %164 = arith.addf %163, %121 : vector<4x8x8xf32>
    %cst_24 = arith.constant dense<0xFF800000> : vector<4x8xf32>
    %165 = vector.multi_reduction <maximumf>, %164, %cst_24 [2] : vector<4x8x8xf32> to vector<4x8xf32>
    %166 = vector.shape_cast %165 : vector<4x8xf32> to vector<4x8x1xf32>
    %167 = vector.broadcast %166 : vector<4x8x1xf32> to vector<4x8x8xf32>
    %168 = arith.subf %164, %167 : vector<4x8x8xf32>
    %169 = math.exp %168 : vector<4x8x8xf32>
    %cst_25 = arith.constant dense<0.000000e+00> : vector<4x8xf32>
    %170 = vector.multi_reduction <add>, %169, %cst_25 [2] : vector<4x8x8xf32> to vector<4x8xf32>
    %171 = vector.shape_cast %170 : vector<4x8xf32> to vector<4x8x1xf32>
    %172 = tpu.reciprocal %171 {approx = true} : vector<4x8x1xf32> -> vector<4x8x1xf32>
    %173 = vector.broadcast %172 : vector<4x8x1xf32> to vector<4x8x8xf32>
    %174 = arith.mulf %169, %173 : vector<4x8x8xf32>
    "tpu.trace_start"() <{level = 10 : i32, message = "hqk,hkd->hqd"}> : () -> ()
    %cst_26 = arith.constant dense<0.000000e+00> : vector<4x8x8xf32>
    %175 = tpu.matmul %174, %160, %cst_26 {dimension_numbers = #tpu.dot_dimension_numbers<[2], [1], [1], [2], [0, 0, 0, 1, 1, 2], [0], [0]>} : vector<4x8x8xf32>, vector<4x8x8xf32>, vector<4x8x8xf32> -> vector<4x8x8xf32>
    "tpu.trace_stop"() : () -> ()
    %176 = vector.extract_strided_slice %175 {offsets = [0, 0, 0], sizes = [1, 8, 8], strides = [1, 1, 1]} : vector<4x8x8xf32> to vector<1x8x8xf32>
    %177 = vector.shape_cast %176 : vector<1x8x8xf32> to vector<8x8xf32>
    %178 = vector.extract_strided_slice %175 {offsets = [1, 0, 0], sizes = [1, 8, 8], strides = [1, 1, 1]} : vector<4x8x8xf32> to vector<1x8x8xf32>
    %179 = vector.shape_cast %178 : vector<1x8x8xf32> to vector<8x8xf32>
    %180 = vector.extract_strided_slice %175 {offsets = [2, 0, 0], sizes = [1, 8, 8], strides = [1, 1, 1]} : vector<4x8x8xf32> to vector<1x8x8xf32>
    %181 = vector.shape_cast %180 : vector<1x8x8xf32> to vector<8x8xf32>
    %182 = vector.extract_strided_slice %175 {offsets = [3, 0, 0], sizes = [1, 8, 8], strides = [1, 1, 1]} : vector<4x8x8xf32> to vector<1x8x8xf32>
    %183 = vector.shape_cast %182 : vector<1x8x8xf32> to vector<8x8xf32>
    %184 = tpu.concatenate %177, %179, %181, %183 in 1 : vector<8x8xf32>, vector<8x8xf32>, vector<8x8xf32>, vector<8x8xf32> -> vector<8x32xf32>
    %185 = arith.truncf %184 : vector<8x32xf32> to vector<8x32xbf16>
    %c0_27 = arith.constant 0 : index
    %c0_28 = arith.constant 0 : index
    %c0_29 = arith.constant 0 : index
    %186 = vector.load %arg5[%c0_27, %c0_28, %c0_29] : memref<2x32x32xbf16, #tpu.memory_space<vmem>>, vector<1x32x32xbf16>
    %187 = vector.shape_cast %186 : vector<1x32x32xbf16> to vector<32x32xbf16>
    %cst_30 = arith.constant dense<0.000000e+00> : vector<8x32xf32>
    %188 = tpu.matmul %185, %187, %cst_30 {dimension_numbers = #tpu.dot_dimension_numbers<[1], [0], [0], [1], [0, 0, 1, 1], [], []>} : vector<8x32xbf16>, vector<32x32xbf16>, vector<8x32xf32> -> vector<8x32xf32>
    %189 = vector.extract_strided_slice %123 {offsets = [1, 0], sizes = [1, 32], strides = [1, 1]} : vector<8x128xf32> to vector<1x32xf32>
    %190 = vector.broadcast %189 : vector<1x32xf32> to vector<8x32xf32>
    %191 = arith.addf %188, %190 : vector<8x32xf32>
    %192 = arith.addf %114, %191 : vector<8x32xf32>
    %193 = vector.extract_strided_slice %123 {offsets = [4, 0], sizes = [1, 32], strides = [1, 1]} : vector<8x128xf32> to vector<1x32xf32>
    %194 = vector.extract_strided_slice %123 {offsets = [5, 0], sizes = [1, 32], strides = [1, 1]} : vector<8x128xf32> to vector<1x32xf32>
    %cst_31 = arith.constant dense<0.000000e+00> : vector<8xf32>
    %195 = vector.multi_reduction <add>, %192, %cst_31 [1] : vector<8x32xf32> to vector<8xf32>
    %196 = vector.shape_cast %195 : vector<8xf32> to vector<8x1xf32>
    %cst_32 = arith.constant 3.200000e+01 : f32
    %197 = vector.broadcast %cst_32 : f32 to vector<8x1xf32>
    %198 = arith.divf %196, %197 : vector<8x1xf32>
    %199 = arith.mulf %192, %192 : vector<8x32xf32>
    %cst_33 = arith.constant dense<0.000000e+00> : vector<8xf32>
    %200 = vector.multi_reduction <add>, %199, %cst_33 [1] : vector<8x32xf32> to vector<8xf32>
    %201 = vector.shape_cast %200 : vector<8xf32> to vector<8x1xf32>
    %cst_34 = arith.constant 3.200000e+01 : f32
    %202 = vector.broadcast %cst_34 : f32 to vector<8x1xf32>
    %203 = arith.divf %201, %202 : vector<8x1xf32>
    %204 = arith.mulf %198, %198 : vector<8x1xf32>
    %205 = arith.subf %203, %204 : vector<8x1xf32>
    %206 = vector.broadcast %198 : vector<8x1xf32> to vector<8x32xf32>
    %207 = arith.subf %192, %206 : vector<8x32xf32>
    %cst_35 = arith.constant 9.99999996E-13 : f32
    %208 = vector.broadcast %cst_35 : f32 to vector<8x1xf32>
    %209 = arith.addf %205, %208 : vector<8x1xf32>
    %210 = math.rsqrt %209 : vector<8x1xf32>
    %211 = vector.broadcast %210 : vector<8x1xf32> to vector<8x32xf32>
    %212 = arith.mulf %207, %211 : vector<8x32xf32>
    %213 = vector.broadcast %193 : vector<1x32xf32> to vector<8x32xf32>
    %214 = arith.mulf %212, %213 : vector<8x32xf32>
    %215 = vector.broadcast %194 : vector<1x32xf32> to vector<8x32xf32>
    %216 = arith.addf %214, %215 : vector<8x32xf32>
    %217 = arith.truncf %216 : vector<8x32xf32> to vector<8x32xbf16>
    %c0_36 = arith.constant 0 : index
    %c0_37 = arith.constant 0 : index
    %c0_38 = arith.constant 0 : index
    %218 = vector.load %arg6[%c0_36, %c0_37, %c0_38] : memref<2x32x64xbf16, #tpu.memory_space<vmem>>, vector<1x32x64xbf16>
    %219 = vector.shape_cast %218 : vector<1x32x64xbf16> to vector<32x64xbf16>
    %cst_39 = arith.constant dense<0.000000e+00> : vector<8x64xf32>
    %220 = tpu.matmul %217, %219, %cst_39 {dimension_numbers = #tpu.dot_dimension_numbers<[1], [0], [0], [1], [0, 0, 1, 1], [], []>} : vector<8x32xbf16>, vector<32x64xbf16>, vector<8x64xf32> -> vector<8x64xf32>
    %221 = vector.extract_strided_slice %123 {offsets = [2, 0], sizes = [1, 64], strides = [1, 1]} : vector<8x128xf32> to vector<1x64xf32>
    %222 = vector.broadcast %221 : vector<1x64xf32> to vector<8x64xf32>
    %223 = arith.addf %220, %222 : vector<8x64xf32>
    %cst_40 = arith.constant 5.000000e-01 : f32
    %224 = vector.broadcast %cst_40 : f32 to vector<8x64xf32>
    %225 = arith.mulf %224, %223 : vector<8x64xf32>
    %cst_41 = arith.constant 4.471500e-02 : f32
    %226 = vector.broadcast %cst_41 : f32 to vector<8x64xf32>
    %227 = arith.mulf %226, %223 : vector<8x64xf32>
    %228 = arith.mulf %227, %223 : vector<8x64xf32>
    %229 = arith.mulf %228, %223 : vector<8x64xf32>
    %230 = arith.addf %223, %229 : vector<8x64xf32>
    %cst_42 = arith.constant 0.797884583 : f32
    %231 = vector.broadcast %cst_42 : f32 to vector<8x64xf32>
    %232 = arith.mulf %231, %230 : vector<8x64xf32>
    %233 = math.tanh %232 : vector<8x64xf32>
    %cst_43 = arith.constant 1.000000e+00 : f32
    %234 = vector.broadcast %cst_43 : f32 to vector<8x64xf32>
    %235 = arith.addf %234, %233 : vector<8x64xf32>
    %236 = arith.mulf %225, %235 : vector<8x64xf32>
    %237 = arith.truncf %236 : vector<8x64xf32> to vector<8x64xbf16>
    %c0_44 = arith.constant 0 : index
    %c0_45 = arith.constant 0 : index
    %c0_46 = arith.constant 0 : index
    %238 = vector.load %arg7[%c0_44, %c0_45, %c0_46] : memref<2x64x32xbf16, #tpu.memory_space<vmem>>, vector<1x64x32xbf16>
    %239 = vector.shape_cast %238 : vector<1x64x32xbf16> to vector<64x32xbf16>
    %cst_47 = arith.constant dense<0.000000e+00> : vector<8x32xf32>
    %240 = tpu.matmul %237, %239, %cst_47 {dimension_numbers = #tpu.dot_dimension_numbers<[1], [0], [0], [1], [0, 0, 1, 1], [], []>} : vector<8x64xbf16>, vector<64x32xbf16>, vector<8x32xf32> -> vector<8x32xf32>
    %241 = vector.extract_strided_slice %123 {offsets = [3, 0], sizes = [1, 32], strides = [1, 1]} : vector<8x128xf32> to vector<1x32xf32>
    %242 = vector.broadcast %241 : vector<1x32xf32> to vector<8x32xf32>
    %243 = arith.addf %240, %242 : vector<8x32xf32>
    %244 = arith.addf %216, %243 : vector<8x32xf32>
    %245 = vector.extract_strided_slice %123 {offsets = [6, 0], sizes = [1, 32], strides = [1, 1]} : vector<8x128xf32> to vector<1x32xf32>
    %246 = vector.extract_strided_slice %123 {offsets = [7, 0], sizes = [1, 32], strides = [1, 1]} : vector<8x128xf32> to vector<1x32xf32>
    %cst_48 = arith.constant dense<0.000000e+00> : vector<8xf32>
    %247 = vector.multi_reduction <add>, %244, %cst_48 [1] : vector<8x32xf32> to vector<8xf32>
    %248 = vector.shape_cast %247 : vector<8xf32> to vector<8x1xf32>
    %cst_49 = arith.constant 3.200000e+01 : f32
    %249 = vector.broadcast %cst_49 : f32 to vector<8x1xf32>
    %250 = arith.divf %248, %249 : vector<8x1xf32>
    %251 = arith.mulf %244, %244 : vector<8x32xf32>
    %cst_50 = arith.constant dense<0.000000e+00> : vector<8xf32>
    %252 = vector.multi_reduction <add>, %251, %cst_50 [1] : vector<8x32xf32> to vector<8xf32>
    %253 = vector.shape_cast %252 : vector<8xf32> to vector<8x1xf32>
    %cst_51 = arith.constant 3.200000e+01 : f32
    %254 = vector.broadcast %cst_51 : f32 to vector<8x1xf32>
    %255 = arith.divf %253, %254 : vector<8x1xf32>
    %256 = arith.mulf %250, %250 : vector<8x1xf32>
    %257 = arith.subf %255, %256 : vector<8x1xf32>
    %258 = vector.broadcast %250 : vector<8x1xf32> to vector<8x32xf32>
    %259 = arith.subf %244, %258 : vector<8x32xf32>
    %cst_52 = arith.constant 9.99999996E-13 : f32
    %260 = vector.broadcast %cst_52 : f32 to vector<8x1xf32>
    %261 = arith.addf %257, %260 : vector<8x1xf32>
    %262 = math.rsqrt %261 : vector<8x1xf32>
    %263 = vector.broadcast %262 : vector<8x1xf32> to vector<8x32xf32>
    %264 = arith.mulf %259, %263 : vector<8x32xf32>
    %265 = vector.broadcast %245 : vector<1x32xf32> to vector<8x32xf32>
    %266 = arith.mulf %264, %265 : vector<8x32xf32>
    %267 = vector.broadcast %246 : vector<1x32xf32> to vector<8x32xf32>
    %268 = arith.addf %266, %267 : vector<8x32xf32>
    %c1_53 = arith.constant 1 : index
    %c0_54 = arith.constant 0 : index
    %c0_55 = arith.constant 0 : index
    %269 = vector.load %arg8[%c1_53, %c0_54, %c0_55] : memref<2x8x128xf32, #tpu.memory_space<vmem>>, vector<1x8x128xf32>
    %270 = vector.shape_cast %269 : vector<1x8x128xf32> to vector<8x128xf32>
    %271 = arith.truncf %268 : vector<8x32xf32> to vector<8x32xbf16>
    %c1_56 = arith.constant 1 : index
    %c0_57 = arith.constant 0 : index
    %c0_58 = arith.constant 0 : index
    %272 = vector.load %arg4[%c1_56, %c0_57, %c0_58] : memref<2x32x96xbf16, #tpu.memory_space<vmem>>, vector<1x32x96xbf16>
    %273 = vector.shape_cast %272 : vector<1x32x96xbf16> to vector<32x96xbf16>
    %cst_59 = arith.constant dense<0.000000e+00> : vector<8x96xf32>
    %274 = tpu.matmul %271, %273, %cst_59 {dimension_numbers = #tpu.dot_dimension_numbers<[1], [0], [0], [1], [0, 0, 1, 1], [], []>} : vector<8x32xbf16>, vector<32x96xbf16>, vector<8x96xf32> -> vector<8x96xf32>
    %275 = vector.extract_strided_slice %270 {offsets = [0, 0], sizes = [1, 96], strides = [1, 1]} : vector<8x128xf32> to vector<1x96xf32>
    %276 = vector.broadcast %275 : vector<1x96xf32> to vector<8x96xf32>
    %277 = arith.addf %274, %276 : vector<8x96xf32>
    %278 = vector.extract_strided_slice %277 {offsets = [0, 0], sizes = [8, 32], strides = [1, 1]} : vector<8x96xf32> to vector<8x32xf32>
    %279 = vector.extract_strided_slice %277 {offsets = [0, 32], sizes = [8, 32], strides = [1, 1]} : vector<8x96xf32> to vector<8x32xf32>
    %280 = vector.extract_strided_slice %277 {offsets = [0, 64], sizes = [8, 32], strides = [1, 1]} : vector<8x96xf32> to vector<8x32xf32>
    %281 = vector.extract_strided_slice %278 {offsets = [0, 0], sizes = [8, 8], strides = [1, 1]} : vector<8x32xf32> to vector<8x8xf32>
    %282 = vector.extract_strided_slice %278 {offsets = [0, 8], sizes = [8, 8], strides = [1, 1]} : vector<8x32xf32> to vector<8x8xf32>
    %283 = vector.extract_strided_slice %278 {offsets = [0, 16], sizes = [8, 8], strides = [1, 1]} : vector<8x32xf32> to vector<8x8xf32>
    %284 = vector.extract_strided_slice %278 {offsets = [0, 24], sizes = [8, 8], strides = [1, 1]} : vector<8x32xf32> to vector<8x8xf32>
    %285 = vector.shape_cast %281 : vector<8x8xf32> to vector<1x8x8xf32>
    %286 = vector.shape_cast %282 : vector<8x8xf32> to vector<1x8x8xf32>
    %287 = vector.shape_cast %283 : vector<8x8xf32> to vector<1x8x8xf32>
    %288 = vector.shape_cast %284 : vector<8x8xf32> to vector<1x8x8xf32>
    %289 = tpu.concatenate %285, %286, %287, %288 in 0 : vector<1x8x8xf32>, vector<1x8x8xf32>, vector<1x8x8xf32>, vector<1x8x8xf32> -> vector<4x8x8xf32>
    %290 = vector.extract_strided_slice %279 {offsets = [0, 0], sizes = [8, 8], strides = [1, 1]} : vector<8x32xf32> to vector<8x8xf32>
    %291 = vector.extract_strided_slice %279 {offsets = [0, 8], sizes = [8, 8], strides = [1, 1]} : vector<8x32xf32> to vector<8x8xf32>
    %292 = vector.extract_strided_slice %279 {offsets = [0, 16], sizes = [8, 8], strides = [1, 1]} : vector<8x32xf32> to vector<8x8xf32>
    %293 = vector.extract_strided_slice %279 {offsets = [0, 24], sizes = [8, 8], strides = [1, 1]} : vector<8x32xf32> to vector<8x8xf32>
    %294 = vector.shape_cast %290 : vector<8x8xf32> to vector<1x8x8xf32>
    %295 = vector.shape_cast %291 : vector<8x8xf32> to vector<1x8x8xf32>
    %296 = vector.shape_cast %292 : vector<8x8xf32> to vector<1x8x8xf32>
    %297 = vector.shape_cast %293 : vector<8x8xf32> to vector<1x8x8xf32>
    %298 = tpu.concatenate %294, %295, %296, %297 in 0 : vector<1x8x8xf32>, vector<1x8x8xf32>, vector<1x8x8xf32>, vector<1x8x8xf32> -> vector<4x8x8xf32>
    %299 = vector.extract_strided_slice %280 {offsets = [0, 0], sizes = [8, 8], strides = [1, 1]} : vector<8x32xf32> to vector<8x8xf32>
    %300 = vector.extract_strided_slice %280 {offsets = [0, 8], sizes = [8, 8], strides = [1, 1]} : vector<8x32xf32> to vector<8x8xf32>
    %301 = vector.extract_strided_slice %280 {offsets = [0, 16], sizes = [8, 8], strides = [1, 1]} : vector<8x32xf32> to vector<8x8xf32>
    %302 = vector.extract_strided_slice %280 {offsets = [0, 24], sizes = [8, 8], strides = [1, 1]} : vector<8x32xf32> to vector<8x8xf32>
    %303 = vector.shape_cast %299 : vector<8x8xf32> to vector<1x8x8xf32>
    %304 = vector.shape_cast %300 : vector<8x8xf32> to vector<1x8x8xf32>
    %305 = vector.shape_cast %301 : vector<8x8xf32> to vector<1x8x8xf32>
    %306 = vector.shape_cast %302 : vector<8x8xf32> to vector<1x8x8xf32>
    %307 = tpu.concatenate %303, %304, %305, %306 in 0 : vector<1x8x8xf32>, vector<1x8x8xf32>, vector<1x8x8xf32>, vector<1x8x8xf32> -> vector<4x8x8xf32>
    "tpu.trace_start"() <{level = 10 : i32, message = "hqd,hkd->hqk"}> : () -> ()
    %cst_60 = arith.constant dense<0.000000e+00> : vector<4x8x8xf32>
    %308 = tpu.matmul %289, %298, %cst_60 {dimension_numbers = #tpu.dot_dimension_numbers<[2], [2], [1], [1], [0, 0, 0, 1, 1, 1], [0], [0]>} : vector<4x8x8xf32>, vector<4x8x8xf32>, vector<4x8x8xf32> -> vector<4x8x8xf32>
    "tpu.trace_stop"() : () -> ()
    %cst_61 = arith.constant 0.353553385 : f32
    %309 = vector.broadcast %cst_61 : f32 to vector<4x8x8xf32>
    %310 = arith.mulf %308, %309 : vector<4x8x8xf32>
    %311 = arith.addf %310, %121 : vector<4x8x8xf32>
    %cst_62 = arith.constant dense<0xFF800000> : vector<4x8xf32>
    %312 = vector.multi_reduction <maximumf>, %311, %cst_62 [2] : vector<4x8x8xf32> to vector<4x8xf32>
    %313 = vector.shape_cast %312 : vector<4x8xf32> to vector<4x8x1xf32>
    %314 = vector.broadcast %313 : vector<4x8x1xf32> to vector<4x8x8xf32>
    %315 = arith.subf %311, %314 : vector<4x8x8xf32>
    %316 = math.exp %315 : vector<4x8x8xf32>
    %cst_63 = arith.constant dense<0.000000e+00> : vector<4x8xf32>
    %317 = vector.multi_reduction <add>, %316, %cst_63 [2] : vector<4x8x8xf32> to vector<4x8xf32>
    %318 = vector.shape_cast %317 : vector<4x8xf32> to vector<4x8x1xf32>
    %319 = tpu.reciprocal %318 {approx = true} : vector<4x8x1xf32> -> vector<4x8x1xf32>
    %320 = vector.broadcast %319 : vector<4x8x1xf32> to vector<4x8x8xf32>
    %321 = arith.mulf %316, %320 : vector<4x8x8xf32>
    "tpu.trace_start"() <{level = 10 : i32, message = "hqk,hkd->hqd"}> : () -> ()
    %cst_64 = arith.constant dense<0.000000e+00> : vector<4x8x8xf32>
    %322 = tpu.matmul %321, %307, %cst_64 {dimension_numbers = #tpu.dot_dimension_numbers<[2], [1], [1], [2], [0, 0, 0, 1, 1, 2], [0], [0]>} : vector<4x8x8xf32>, vector<4x8x8xf32>, vector<4x8x8xf32> -> vector<4x8x8xf32>
    "tpu.trace_stop"() : () -> ()
    %323 = vector.extract_strided_slice %322 {offsets = [0, 0, 0], sizes = [1, 8, 8], strides = [1, 1, 1]} : vector<4x8x8xf32> to vector<1x8x8xf32>
    %324 = vector.shape_cast %323 : vector<1x8x8xf32> to vector<8x8xf32>
    %325 = vector.extract_strided_slice %322 {offsets = [1, 0, 0], sizes = [1, 8, 8], strides = [1, 1, 1]} : vector<4x8x8xf32> to vector<1x8x8xf32>
    %326 = vector.shape_cast %325 : vector<1x8x8xf32> to vector<8x8xf32>
    %327 = vector.extract_strided_slice %322 {offsets = [2, 0, 0], sizes = [1, 8, 8], strides = [1, 1, 1]} : vector<4x8x8xf32> to vector<1x8x8xf32>
    %328 = vector.shape_cast %327 : vector<1x8x8xf32> to vector<8x8xf32>
    %329 = vector.extract_strided_slice %322 {offsets = [3, 0, 0], sizes = [1, 8, 8], strides = [1, 1, 1]} : vector<4x8x8xf32> to vector<1x8x8xf32>
    %330 = vector.shape_cast %329 : vector<1x8x8xf32> to vector<8x8xf32>
    %331 = tpu.concatenate %324, %326, %328, %330 in 1 : vector<8x8xf32>, vector<8x8xf32>, vector<8x8xf32>, vector<8x8xf32> -> vector<8x32xf32>
    %332 = arith.truncf %331 : vector<8x32xf32> to vector<8x32xbf16>
    %c1_65 = arith.constant 1 : index
    %c0_66 = arith.constant 0 : index
    %c0_67 = arith.constant 0 : index
    %333 = vector.load %arg5[%c1_65, %c0_66, %c0_67] : memref<2x32x32xbf16, #tpu.memory_space<vmem>>, vector<1x32x32xbf16>
    %334 = vector.shape_cast %333 : vector<1x32x32xbf16> to vector<32x32xbf16>
    %cst_68 = arith.constant dense<0.000000e+00> : vector<8x32xf32>
    %335 = tpu.matmul %332, %334, %cst_68 {dimension_numbers = #tpu.dot_dimension_numbers<[1], [0], [0], [1], [0, 0, 1, 1], [], []>} : vector<8x32xbf16>, vector<32x32xbf16>, vector<8x32xf32> -> vector<8x32xf32>
    %336 = vector.extract_strided_slice %270 {offsets = [1, 0], sizes = [1, 32], strides = [1, 1]} : vector<8x128xf32> to vector<1x32xf32>
    %337 = vector.broadcast %336 : vector<1x32xf32> to vector<8x32xf32>
    %338 = arith.addf %335, %337 : vector<8x32xf32>
    %339 = arith.addf %268, %338 : vector<8x32xf32>
    %340 = vector.extract_strided_slice %270 {offsets = [4, 0], sizes = [1, 32], strides = [1, 1]} : vector<8x128xf32> to vector<1x32xf32>
    %341 = vector.extract_strided_slice %270 {offsets = [5, 0], sizes = [1, 32], strides = [1, 1]} : vector<8x128xf32> to vector<1x32xf32>
    %cst_69 = arith.constant dense<0.000000e+00> : vector<8xf32>
    %342 = vector.multi_reduction <add>, %339, %cst_69 [1] : vector<8x32xf32> to vector<8xf32>
    %343 = vector.shape_cast %342 : vector<8xf32> to vector<8x1xf32>
    %cst_70 = arith.constant 3.200000e+01 : f32
    %344 = vector.broadcast %cst_70 : f32 to vector<8x1xf32>
    %345 = arith.divf %343, %344 : vector<8x1xf32>
    %346 = arith.mulf %339, %339 : vector<8x32xf32>
    %cst_71 = arith.constant dense<0.000000e+00> : vector<8xf32>
    %347 = vector.multi_reduction <add>, %346, %cst_71 [1] : vector<8x32xf32> to vector<8xf32>
    %348 = vector.shape_cast %347 : vector<8xf32> to vector<8x1xf32>
    %cst_72 = arith.constant 3.200000e+01 : f32
    %349 = vector.broadcast %cst_72 : f32 to vector<8x1xf32>
    %350 = arith.divf %348, %349 : vector<8x1xf32>
    %351 = arith.mulf %345, %345 : vector<8x1xf32>
    %352 = arith.subf %350, %351 : vector<8x1xf32>
    %353 = vector.broadcast %345 : vector<8x1xf32> to vector<8x32xf32>
    %354 = arith.subf %339, %353 : vector<8x32xf32>
    %cst_73 = arith.constant 9.99999996E-13 : f32
    %355 = vector.broadcast %cst_73 : f32 to vector<8x1xf32>
    %356 = arith.addf %352, %355 : vector<8x1xf32>
    %357 = math.rsqrt %356 : vector<8x1xf32>
    %358 = vector.broadcast %357 : vector<8x1xf32> to vector<8x32xf32>
    %359 = arith.mulf %354, %358 : vector<8x32xf32>
    %360 = vector.broadcast %340 : vector<1x32xf32> to vector<8x32xf32>
    %361 = arith.mulf %359, %360 : vector<8x32xf32>
    %362 = vector.broadcast %341 : vector<1x32xf32> to vector<8x32xf32>
    %363 = arith.addf %361, %362 : vector<8x32xf32>
    %364 = arith.truncf %363 : vector<8x32xf32> to vector<8x32xbf16>
    %c1_74 = arith.constant 1 : index
    %c0_75 = arith.constant 0 : index
    %c0_76 = arith.constant 0 : index
    %365 = vector.load %arg6[%c1_74, %c0_75, %c0_76] : memref<2x32x64xbf16, #tpu.memory_space<vmem>>, vector<1x32x64xbf16>
    %366 = vector.shape_cast %365 : vector<1x32x64xbf16> to vector<32x64xbf16>
    %cst_77 = arith.constant dense<0.000000e+00> : vector<8x64xf32>
    %367 = tpu.matmul %364, %366, %cst_77 {dimension_numbers = #tpu.dot_dimension_numbers<[1], [0], [0], [1], [0, 0, 1, 1], [], []>} : vector<8x32xbf16>, vector<32x64xbf16>, vector<8x64xf32> -> vector<8x64xf32>
    %368 = vector.extract_strided_slice %270 {offsets = [2, 0], sizes = [1, 64], strides = [1, 1]} : vector<8x128xf32> to vector<1x64xf32>
    %369 = vector.broadcast %368 : vector<1x64xf32> to vector<8x64xf32>
    %370 = arith.addf %367, %369 : vector<8x64xf32>
    %cst_78 = arith.constant 5.000000e-01 : f32
    %371 = vector.broadcast %cst_78 : f32 to vector<8x64xf32>
    %372 = arith.mulf %371, %370 : vector<8x64xf32>
    %cst_79 = arith.constant 4.471500e-02 : f32
    %373 = vector.broadcast %cst_79 : f32 to vector<8x64xf32>
    %374 = arith.mulf %373, %370 : vector<8x64xf32>
    %375 = arith.mulf %374, %370 : vector<8x64xf32>
    %376 = arith.mulf %375, %370 : vector<8x64xf32>
    %377 = arith.addf %370, %376 : vector<8x64xf32>
    %cst_80 = arith.constant 0.797884583 : f32
    %378 = vector.broadcast %cst_80 : f32 to vector<8x64xf32>
    %379 = arith.mulf %378, %377 : vector<8x64xf32>
    %380 = math.tanh %379 : vector<8x64xf32>
    %cst_81 = arith.constant 1.000000e+00 : f32
    %381 = vector.broadcast %cst_81 : f32 to vector<8x64xf32>
    %382 = arith.addf %381, %380 : vector<8x64xf32>
    %383 = arith.mulf %372, %382 : vector<8x64xf32>
    %384 = arith.truncf %383 : vector<8x64xf32> to vector<8x64xbf16>
    %c1_82 = arith.constant 1 : index
    %c0_83 = arith.constant 0 : index
    %c0_84 = arith.constant 0 : index
    %385 = vector.load %arg7[%c1_82, %c0_83, %c0_84] : memref<2x64x32xbf16, #tpu.memory_space<vmem>>, vector<1x64x32xbf16>
    %386 = vector.shape_cast %385 : vector<1x64x32xbf16> to vector<64x32xbf16>
    %cst_85 = arith.constant dense<0.000000e+00> : vector<8x32xf32>
    %387 = tpu.matmul %384, %386, %cst_85 {dimension_numbers = #tpu.dot_dimension_numbers<[1], [0], [0], [1], [0, 0, 1, 1], [], []>} : vector<8x64xbf16>, vector<64x32xbf16>, vector<8x32xf32> -> vector<8x32xf32>
    %388 = vector.extract_strided_slice %270 {offsets = [3, 0], sizes = [1, 32], strides = [1, 1]} : vector<8x128xf32> to vector<1x32xf32>
    %389 = vector.broadcast %388 : vector<1x32xf32> to vector<8x32xf32>
    %390 = arith.addf %387, %389 : vector<8x32xf32>
    %391 = arith.addf %363, %390 : vector<8x32xf32>
    %392 = vector.extract_strided_slice %270 {offsets = [6, 0], sizes = [1, 32], strides = [1, 1]} : vector<8x128xf32> to vector<1x32xf32>
    %393 = vector.extract_strided_slice %270 {offsets = [7, 0], sizes = [1, 32], strides = [1, 1]} : vector<8x128xf32> to vector<1x32xf32>
    %cst_86 = arith.constant dense<0.000000e+00> : vector<8xf32>
    %394 = vector.multi_reduction <add>, %391, %cst_86 [1] : vector<8x32xf32> to vector<8xf32>
    %395 = vector.shape_cast %394 : vector<8xf32> to vector<8x1xf32>
    %cst_87 = arith.constant 3.200000e+01 : f32
    %396 = vector.broadcast %cst_87 : f32 to vector<8x1xf32>
    %397 = arith.divf %395, %396 : vector<8x1xf32>
    %398 = arith.mulf %391, %391 : vector<8x32xf32>
    %cst_88 = arith.constant dense<0.000000e+00> : vector<8xf32>
    %399 = vector.multi_reduction <add>, %398, %cst_88 [1] : vector<8x32xf32> to vector<8xf32>
    %400 = vector.shape_cast %399 : vector<8xf32> to vector<8x1xf32>
    %cst_89 = arith.constant 3.200000e+01 : f32
    %401 = vector.broadcast %cst_89 : f32 to vector<8x1xf32>
    %402 = arith.divf %400, %401 : vector<8x1xf32>
    %403 = arith.mulf %397, %397 : vector<8x1xf32>
    %404 = arith.subf %402, %403 : vector<8x1xf32>
    %405 = vector.broadcast %397 : vector<8x1xf32> to vector<8x32xf32>
    %406 = arith.subf %391, %405 : vector<8x32xf32>
    %cst_90 = arith.constant 9.99999996E-13 : f32
    %407 = vector.broadcast %cst_90 : f32 to vector<8x1xf32>
    %408 = arith.addf %404, %407 : vector<8x1xf32>
    %409 = math.rsqrt %408 : vector<8x1xf32>
    %410 = vector.broadcast %409 : vector<8x1xf32> to vector<8x32xf32>
    %411 = arith.mulf %406, %410 : vector<8x32xf32>
    %412 = vector.broadcast %392 : vector<1x32xf32> to vector<8x32xf32>
    %413 = arith.mulf %411, %412 : vector<8x32xf32>
    %414 = vector.broadcast %393 : vector<1x32xf32> to vector<8x32xf32>
    %415 = arith.addf %413, %414 : vector<8x32xf32>
    %416 = vector.extract_strided_slice %415 {offsets = [0, 0], sizes = [1, 32], strides = [1, 1]} : vector<8x32xf32> to vector<1x32xf32>
    %417 = arith.truncf %416 : vector<1x32xf32> to vector<1x32xbf16>
    %c0_91 = arith.constant 0 : index
    %c0_92 = arith.constant 0 : index
    %418 = vector.load %arg10[%c0_91, %c0_92] : memref<32x32xbf16, #tpu.memory_space<vmem>>, vector<32x32xbf16>
    %cst_93 = arith.constant dense<0.000000e+00> : vector<1x32xf32>
    %419 = tpu.matmul %417, %418, %cst_93 {dimension_numbers = #tpu.dot_dimension_numbers<[1], [0], [0], [1], [0, 0, 1, 1], [], []>} : vector<1x32xbf16>, vector<32x32xbf16>, vector<1x32xf32> -> vector<1x32xf32>
    %420 = arith.addf %419, %3 : vector<1x32xf32>
    %421 = math.tanh %420 : vector<1x32xf32>
    %422 = arith.truncf %421 : vector<1x32xf32> to vector<1x32xbf16>
    %c0_94 = arith.constant 0 : index
    %c0_95 = arith.constant 0 : index
    %423 = vector.load %arg11[%c0_94, %c0_95] : memref<32x128xbf16, #tpu.memory_space<vmem>>, vector<32x128xbf16>
    %cst_96 = arith.constant dense<0.000000e+00> : vector<1x128xf32>
    %424 = tpu.matmul %422, %423, %cst_96 {dimension_numbers = #tpu.dot_dimension_numbers<[1], [0], [0], [1], [0, 0, 1, 1], [], []>} : vector<1x32xbf16>, vector<32x128xbf16>, vector<1x128xf32> -> vector<1x128xf32>
    %425 = arith.addf %424, %4 : vector<1x128xf32>
    %c0_97 = arith.constant 0 : index
    %c0_98 = arith.constant 0 : index
    %c0_99 = arith.constant 0 : index
    %426 = vector.load %arg12[%c0_97, %c0_98, %c0_99] : memref<1x1x128xf32, #tpu.memory_space<vmem>>, vector<1x1x128xf32>
    %427 = vector.shape_cast %426 : vector<1x1x128xf32> to vector<1x128xf32>
    %428 = vector.shape_cast %425 : vector<1x128xf32> to vector<1x1x128xf32>
    tpu.vector_store %arg12[%c0_97, %c0_98, %c0_99], %428 {strides = array<i32>} : memref<1x1x128xf32, #tpu.memory_space<vmem>>, vector<1x1x128xf32>,
    return
  }
  func.func @transform_0(%arg0: i32, %arg1: memref<2x8xi32, #tpu.memory_space<smem>>) -> (i32, i32, i32) {
    %c0_i32 = arith.constant 0 : i32
    %c0_i32_0 = arith.constant 0 : i32
    %c0_i32_1 = arith.constant 0 : i32
    return %arg0, %c0_i32, %c0_i32_0 : i32, i32, i32
  }
  func.func @transform_1(%arg0: i32, %arg1: memref<2x8xi32, #tpu.memory_space<smem>>) -> (i32, i32) {
    %c0_i32 = arith.constant 0 : i32
    %c0_i32_0 = arith.constant 0 : i32
    %c0_i32_1 = arith.constant 0 : i32
    return %c0_i32, %c0_i32_0 : i32, i32
  }
  func.func @transform_2(%arg0: i32, %arg1: memref<2x8xi32, #tpu.memory_space<smem>>) -> (i32, i32, i32) {
    %c0_i32 = arith.constant 0 : i32
    %c0_i32_0 = arith.constant 0 : i32
    %c0_i32_1 = arith.constant 0 : i32
    %c0_i32_2 = arith.constant 0 : i32
    return %c0_i32, %c0_i32_0, %c0_i32_1 : i32, i32, i32
  }
  func.func @transform_3(%arg0: i32, %arg1: memref<2x8xi32, #tpu.memory_space<smem>>) -> (i32, i32, i32) {
    %c0_i32 = arith.constant 0 : i32
    %c0_i32_0 = arith.constant 0 : i32
    %c0_i32_1 = arith.constant 0 : i32
    %c0_i32_2 = arith.constant 0 : i32
    return %c0_i32, %c0_i32_0, %c0_i32_1 : i32, i32, i32
  }
  func.func @transform_4(%arg0: i32, %arg1: memref<2x8xi32, #tpu.memory_space<smem>>) -> (i32, i32, i32) {
    %c0_i32 = arith.constant 0 : i32
    %c0_i32_0 = arith.constant 0 : i32
    %c0_i32_1 = arith.constant 0 : i32
    %c0_i32_2 = arith.constant 0 : i32
    return %c0_i32, %c0_i32_0, %c0_i32_1 : i32, i32, i32
  }
  func.func @transform_5(%arg0: i32, %arg1: memref<2x8xi32, #tpu.memory_space<smem>>) -> (i32, i32, i32) {
    %c0_i32 = arith.constant 0 : i32
    %c0_i32_0 = arith.constant 0 : i32
    %c0_i32_1 = arith.constant 0 : i32
    %c0_i32_2 = arith.constant 0 : i32
    return %c0_i32, %c0_i32_0, %c0_i32_1 : i32, i32, i32
  }
  func.func @transform_6(%arg0: i32, %arg1: memref<2x8xi32, #tpu.memory_space<smem>>) -> (i32, i32, i32) {
    %c0_i32 = arith.constant 0 : i32
    %c0_i32_0 = arith.constant 0 : i32
    %c0_i32_1 = arith.constant 0 : i32
    %c0_i32_2 = arith.constant 0 : i32
    return %c0_i32, %c0_i32_0, %c0_i32_1 : i32, i32, i32
  }
  func.func @transform_7(%arg0: i32, %arg1: memref<2x8xi32, #tpu.memory_space<smem>>) -> (i32, i32) {
    %c0_i32 = arith.constant 0 : i32
    %c0_i32_0 = arith.constant 0 : i32
    %c0_i32_1 = arith.constant 0 : i32
    return %c0_i32, %c0_i32_0 : i32, i32
  }
  func.func @transform_8(%arg0: i32, %arg1: memref<2x8xi32, #tpu.memory_space<smem>>) -> (i32, i32) {
    %c0_i32 = arith.constant 0 : i32
    %c0_i32_0 = arith.constant 0 : i32
    %c0_i32_1 = arith.constant 0 : i32
    return %c0_i32, %c0_i32_0 : i32, i32
  }
  func.func @transform_9(%arg0: i32, %arg1: memref<2x8xi32, #tpu.memory_space<smem>>) -> (i32, i32) {
    %c0_i32 = arith.constant 0 : i32
    %c0_i32_0 = arith.constant 0 : i32
    %c0_i32_1 = arith.constant 0 : i32
    return %c0_i32, %c0_i32_0 : i32, i32
  }
  func.func @transform_10(%arg0: i32, %arg1: memref<2x8xi32, #tpu.memory_space<smem>>) -> (i32, i32, i32) {
    %c0_i32 = arith.constant 0 : i32
    %c0_i32_0 = arith.constant 0 : i32
    %c0_i32_1 = arith.constant 0 : i32
    return %arg0, %c0_i32, %c0_i32_0 : i32, i32, i32
  }
}

</mosaic_0001>

<llo_original>
// kernel: sentiment_classifier_forward.1
$region0: #{sentiment_classifier_forward.1}
  #allocation0 [shape = 'u32[]', space=smem, size = 0x4, offset = 0x4, fixed_abs, tag = 'smem constant byte address 0x4 - core index']
  #allocation1 [shape = 'u32[144,128]{1,0:T(1,128)}', space=vmem, size = 0x12000, scoped, tag = 'internal scratch']
  #allocation2 [shape = 's32[1]{0}', space=sflag, size = 0x4, scoped, tag = 'scoped memory for sentiment_classifier_forward.1']
  #allocation3 [shape = 'u8[1024]{0}', space=smem, size = 0x400, scoped, tag = 'prefetched SMEM operand 0']
  %s0 = inlined_call_operand.vmem [shape: s32[2,8], index: 0, kind: input, shape index: {}]
  %s1 = inlined_call_operand.vmem [shape: f32[2,1,8], index: 1, kind: input, shape index: {}]
  %s2 = inlined_call_operand.vmem [shape: f32[80,32], index: 2, kind: input, shape index: {}]
  %s3 = inlined_call_operand.vmem [shape: bf16[2,32,96], index: 3, kind: input, shape index: {}]
  %s4 = inlined_call_operand.vmem [shape: bf16[2,32,32], index: 4, kind: input, shape index: {}]
  %s5 = inlined_call_operand.vmem [shape: bf16[2,32,64], index: 5, kind: input, shape index: {}]
  %s6 = inlined_call_operand.vmem [shape: bf16[2,64,32], index: 6, kind: input, shape index: {}]
  %s7 = inlined_call_operand.vmem [shape: f32[2,8,128], index: 7, kind: input, shape index: {}]
  %s8 = inlined_call_operand.vmem [shape: f32[8,128], index: 8, kind: input, shape index: {}]
  %s9 = inlined_call_operand.vmem [shape: bf16[32,32], index: 9, kind: input, shape index: {}]
  %s10 = inlined_call_operand.vmem [shape: bf16[32,128], index: 10, kind: input, shape index: {}]
  %s11 = inlined_call_operand.hbm [shape: f32[2,1,128], index: 11, kind: output, shape index: {}]
  %s12 = sld [smem:[#allocation0]]
  $region73: #{sentiment_classifier_forward.1} parent=0
    _
  %s14 = ssub.s32 1, %s12
  %s15 = scalar_select 0, %s14, %s12
  %s16 = sshll.u32 %s0, 4
  %s17 = int_to_ptr.vmem [resolvable:$true] %s16
  %19 = dma.vmem_to_smem %s17, 32, [#allocation3], [#allocation2]
  %20 = dma.done [#allocation2], 32
  %21 = sfence
  $region1: #{sentiment_classifier_forward.1} parent=0
    #allocation4 [shape = 'u8[1024]{0}', space=vmem, size = 0x400, scoped, tag = 'output window, operand 0']
    #allocation5 [shape = 's32[2]{0}', space=sflag, size = 0x8, scoped, tag = 'scoped memory for sentiment_classifier_forward.1']
    %22 = vsyncpa [#allocation5], 0
    %s23 = scalar_lea.sflag [#allocation5], 1
    %24 = vsyncpa %s23, 0
    loop: start=0, step=1, limit=4
    $region2: #{sentiment_classifier_forward.1} parent=1 // loop_pre_header
      _
    $region3: #{sentiment_classifier_forward.1} parent=1 // loop_header
      %s26 = sphi 0, %s30
      %p27 = scmp.ge.s32.totalorder %s26, 4
      %s36 = sphi 0, %s38
      %s39 = sphi 0, %s36
      %s40 = sphi 0, %s39
      %s56 = sphi 0, %s40
      %s60 = sphi 0, %s60
      %s62 = sphi 0, %s60
      %s63 = sphi 0, %s62
      %s77 = sphi 0, %s63
      %s81 = sphi 0, %s81
      %s83 = sphi 0, %s81
      %s84 = sphi 0, %s83
      %s98 = sphi 0, %s84
      %s102 = sphi 0, %s102
      %s104 = sphi 0, %s102
      %s105 = sphi 0, %s104
      %s119 = sphi 0, %s105
      %s123 = sphi 0, %s123
      %s125 = sphi 0, %s123
      %s126 = sphi 0, %s125
      %s140 = sphi 0, %s126
      %s144 = sphi 0, %s144
      %s146 = sphi 0, %s144
      %s147 = sphi 0, %s146
      %s161 = sphi 0, %s147
      %s165 = sphi 0, %s165
      %s167 = sphi 0, %s165
      %s168 = sphi 0, %s167
      %s182 = sphi 0, %s168
      %s186 = sphi 0, %s186
      %s188 = sphi 0, %s186
      %s189 = sphi 0, %s188
      %s203 = sphi 0, %s189
      %s207 = sphi 0, %s207
      %s209 = sphi 0, %s207
      %s210 = sphi 0, %s209
      %s224 = sphi 0, %s210
      %s228 = sphi 0, %s228
      %s230 = sphi 0, %s228
      %s231 = sphi 0, %s230
      %s245 = sphi 0, %s231
      %s251 = sphi 0, %s253
      %s254 = sphi 0, %s251
      %s255 = sphi 0, %s254
      %s271 = sphi 0, %s255
    $region4: #{sentiment_classifier_forward.1} parent=1 // loop_header_branch
      %29 = sbr.rel (%p27) target = $region8
    $region5: #{sentiment_classifier_forward.1} parent=1 // loop_body
      %s31 = ssub.s32 %s26, 1
      %s32 = ssub.s32 %s26, 2
      %s33 = sadd.s32 %s26, 1
      %s34 = ssub.s32 %s26, %s33
      %p35 = scmp.eq.s32.totalorder %s34, 0
      %s37 = sadd.s32 %s36, 1
      %s38 = scalar_select %p35, %s36, %s37
      %p41 = pneg %p35
      %p42 = scmp.eq.s32.totalorder %s26, 1
      %p43 = por %p41, %p42
      %p44 = scmp.ne.s32.totalorder %s36, %s39
      %p45 = scmp.eq.s32.totalorder %s26, 0
      %p46 = por %p44, %p45
      %p47 = scmp.ne.s32.totalorder %s36, %s39
      %p48 = scmp.eq.s32.totalorder %s31, 1
      %p49 = por %p47, %p48
      %p50 = scmp.ne.s32.totalorder %s39, %s40
      %p51 = scmp.eq.s32.totalorder %s31, 0
      %p52 = por %p50, %p51
      %p53 = scmp.ne.s32.totalorder %s39, %s40
      %p54 = scmp.eq.s32.totalorder %s32, 1
      %p55 = por %p53, %p54
      %p57 = scmp.ne.s32.totalorder %s40, %s56
      %p58 = scmp.eq.s32.totalorder %s32, 0
      %p59 = por %p57, %p58
      %s61 = sadd.s32 %s60, 1
      %p64 = scmp.eq.s32.totalorder %s26, 1
      %p65 = scmp.ne.s32.totalorder %s60, %s62
      %p66 = scmp.eq.s32.totalorder %s26, 0
      %p67 = por %p65, %p66
      %p68 = scmp.ne.s32.totalorder %s60, %s62
      %p69 = scmp.eq.s32.totalorder %s31, 1
      %p70 = por %p68, %p69
      %p71 = scmp.ne.s32.totalorder %s62, %s63
      %p72 = scmp.eq.s32.totalorder %s31, 0
      %p73 = por %p71, %p72
      %p74 = scmp.ne.s32.totalorder %s62, %s63
      %p75 = scmp.eq.s32.totalorder %s32, 1
      %p76 = por %p74, %p75
      %p78 = scmp.ne.s32.totalorder %s63, %s77
      %p79 = scmp.eq.s32.totalorder %s32, 0
      %p80 = por %p78, %p79
      %s82 = sadd.s32 %s81, 1
      %p85 = scmp.eq.s32.totalorder %s26, 1
      %p86 = scmp.ne.s32.totalorder %s81, %s83
      %p87 = scmp.eq.s32.totalorder %s26, 0
      %p88 = por %p86, %p87
      %p89 = scmp.ne.s32.totalorder %s81, %s83
      %p90 = scmp.eq.s32.totalorder %s31, 1
      %p91 = por %p89, %p90
      %p92 = scmp.ne.s32.totalorder %s83, %s84
      %p93 = scmp.eq.s32.totalorder %s31, 0
      %p94 = por %p92, %p93
      %p95 = scmp.ne.s32.totalorder %s83, %s84
      %p96 = scmp.eq.s32.totalorder %s32, 1
      %p97 = por %p95, %p96
      %p99 = scmp.ne.s32.totalorder %s84, %s98
      %p100 = scmp.eq.s32.totalorder %s32, 0
      %p101 = por %p99, %p100
      %s103 = sadd.s32 %s102, 1
      %p106 = scmp.eq.s32.totalorder %s26, 1
      %p107 = scmp.ne.s32.totalorder %s102, %s104
      %p108 = scmp.eq.s32.totalorder %s26, 0
      %p109 = por %p107, %p108
      %p110 = scmp.ne.s32.totalorder %s102, %s104
      %p111 = scmp.eq.s32.totalorder %s31, 1
      %p112 = por %p110, %p111
      %p113 = scmp.ne.s32.totalorder %s104, %s105
      %p114 = scmp.eq.s32.totalorder %s31, 0
      %p115 = por %p113, %p114
      %p116 = scmp.ne.s32.totalorder %s104, %s105
      %p117 = scmp.eq.s32.totalorder %s32, 1
      %p118 = por %p116, %p117
      %p120 = scmp.ne.s32.totalorder %s105, %s119
      %p121 = scmp.eq.s32.totalorder %s32, 0
      %p122 = por %p120, %p121
      %s124 = sadd.s32 %s123, 1
      %p127 = scmp.eq.s32.totalorder %s26, 1
      %p128 = scmp.ne.s32.totalorder %s123, %s125
      %p129 = scmp.eq.s32.totalorder %s26, 0
      %p130 = por %p128, %p129
      %p131 = scmp.ne.s32.totalorder %s123, %s125
      %p132 = scmp.eq.s32.totalorder %s31, 1
      %p133 = por %p131, %p132
      %p134 = scmp.ne.s32.totalorder %s125, %s126
      %p135 = scmp.eq.s32.totalorder %s31, 0
      %p136 = por %p134, %p135
      %p137 = scmp.ne.s32.totalorder %s125, %s126
      %p138 = scmp.eq.s32.totalorder %s32, 1
      %p139 = por %p137, %p138
      %p141 = scmp.ne.s32.totalorder %s126, %s140
      %p142 = scmp.eq.s32.totalorder %s32, 0
      %p143 = por %p141, %p142
      %s145 = sadd.s32 %s144, 1
      %p148 = scmp.eq.s32.totalorder %s26, 1
      %p149 = scmp.ne.s32.totalorder %s144, %s146
      %p150 = scmp.eq.s32.totalorder %s26, 0
      %p151 = por %p149, %p150
      %p152 = scmp.ne.s32.totalorder %s144, %s146
      %p153 = scmp.eq.s32.totalorder %s31, 1
      %p154 = por %p152, %p153
      %p155 = scmp.ne.s32.totalorder %s146, %s147
      %p156 = scmp.eq.s32.totalorder %s31, 0
      %p157 = por %p155, %p156
      %p158 = scmp.ne.s32.totalorder %s146, %s147
      %p159 = scmp.eq.s32.totalorder %s32, 1
      %p160 = por %p158, %p159
      %p162 = scmp.ne.s32.totalorder %s147, %s161
      %p163 = scmp.eq.s32.totalorder %s32, 0
      %p164 = por %p162, %p163
      %s166 = sadd.s32 %s165, 1
      %p169 = scmp.eq.s32.totalorder %s26, 1
      %p170 = scmp.ne.s32.totalorder %s165, %s167
      %p171 = scmp.eq.s32.totalorder %s26, 0
      %p172 = por %p170, %p171
      %p173 = scmp.ne.s32.totalorder %s165, %s167
      %p174 = scmp.eq.s32.totalorder %s31, 1
      %p175 = por %p173, %p174
      %p176 = scmp.ne.s32.totalorder %s167, %s168
      %p177 = scmp.eq.s32.totalorder %s31, 0
      %p178 = por %p176, %p177
      %p179 = scmp.ne.s32.totalorder %s167, %s168
      %p180 = scmp.eq.s32.totalorder %s32, 1
      %p181 = por %p179, %p180
      %p183 = scmp.ne.s32.totalorder %s168, %s182
      %p184 = scmp.eq.s32.totalorder %s32, 0
      %p185 = por %p183, %p184
      %s187 = sadd.s32 %s186, 1
      %p190 = scmp.eq.s32.totalorder %s26, 1
      %p191 = scmp.ne.s32.totalorder %s186, %s188
      %p192 = scmp.eq.s32.totalorder %s26, 0
      %p193 = por %p191, %p192
      %p194 = scmp.ne.s32.totalorder %s186, %s188
      %p195 = scmp.eq.s32.totalorder %s31, 1
      %p196 = por %p194, %p195
      %p197 = scmp.ne.s32.totalorder %s188, %s189
      %p198 = scmp.eq.s32.totalorder %s31, 0
      %p199 = por %p197, %p198
      %p200 = scmp.ne.s32.totalorder %s188, %s189
      %p201 = scmp.eq.s32.totalorder %s32, 1
      %p202 = por %p200, %p201
      %p204 = scmp.ne.s32.totalorder %s189, %s203
      %p205 = scmp.eq.s32.totalorder %s32, 0
      %p206 = por %p204, %p205
      %s208 = sadd.s32 %s207, 1
      %p211 = scmp.eq.s32.totalorder %s26, 1
      %p212 = scmp.ne.s32.totalorder %s207, %s209
      %p213 = scmp.eq.s32.totalorder %s26, 0
      %p214 = por %p212, %p213
      %p215 = scmp.ne.s32.totalorder %s207, %s209
      %p216 = scmp.eq.s32.totalorder %s31, 1
      %p217 = por %p215, %p216
      %p218 = scmp.ne.s32.totalorder %s209, %s210
      %p219 = scmp.eq.s32.totalorder %s31, 0
      %p220 = por %p218, %p219
      %p221 = scmp.ne.s32.totalorder %s209, %s210
      %p222 = scmp.eq.s32.totalorder %s32, 1
      %p223 = por %p221, %p222
      %p225 = scmp.ne.s32.totalorder %s210, %s224
      %p226 = scmp.eq.s32.totalorder %s32, 0
      %p227 = por %p225, %p226
      %s229 = sadd.s32 %s228, 1
      %p232 = scmp.eq.s32.totalorder %s26, 1
      %p233 = scmp.ne.s32.totalorder %s228, %s230
      %p234 = scmp.eq.s32.totalorder %s26, 0
      %p235 = por %p233, %p234
      %p236 = scmp.ne.s32.totalorder %s228, %s230
      %p237 = scmp.eq.s32.totalorder %s31, 1
      %p238 = por %p236, %p237
      %p239 = scmp.ne.s32.totalorder %s230, %s231
      %p240 = scmp.eq.s32.totalorder %s31, 0
      %p241 = por %p239, %p240
      %p242 = scmp.ne.s32.totalorder %s230, %s231
      %p243 = scmp.eq.s32.totalorder %s32, 1
      %p244 = por %p242, %p243
      %p246 = scmp.ne.s32.totalorder %s231, %s245
      %p247 = scmp.eq.s32.totalorder %s32, 0
      %p248 = por %p246, %p247
      %s249 = ssub.s32 %s26, %s33
      %p250 = scmp.eq.s32.totalorder %s249, 0
      %s252 = sadd.s32 %s251, 1
      %s253 = scalar_select %p250, %s251, %s252
      %p256 = pneg %p250
      %p257 = scmp.eq.s32.totalorder %s26, 1
      %p258 = por %p256, %p257
      %p259 = scmp.ne.s32.totalorder %s251, %s254
      %p260 = scmp.eq.s32.totalorder %s26, 0
      %p261 = por %p259, %p260
      %p262 = scmp.ne.s32.totalorder %s251, %s254
      %p263 = scmp.eq.s32.totalorder %s31, 1
      %p264 = por %p262, %p263
      %p265 = scmp.ne.s32.totalorder %s254, %s255
      %p266 = scmp.eq.s32.totalorder %s31, 0
      %p267 = por %p265, %p266
      %p268 = scmp.ne.s32.totalorder %s254, %s255
      %p269 = scmp.eq.s32.totalorder %s32, 1
      %p270 = por %p268, %p269
      %p272 = scmp.ne.s32.totalorder %s255, %s271
      %p273 = scmp.eq.s32.totalorder %s32, 0
      %p274 = por %p272, %p273
      %p275 = scmp.le.s32.totalorder 1, %s26
      %p276 = scmp.lt.s32.totalorder %s26, 3
      %p277 = pnand %p275, %p276
      %p278 = pneg %p277
      // Predicated region
      $region9: #{sentiment_classifier_forward.1} parent=5 // pred_check
        _
      $region10: #{sentiment_classifier_forward.1} parent=5 // pred_check_branch
        %280 = sbr.rel (%p277) target = $region12
      $region11: #{sentiment_classifier_forward.1} parent=5 // pred_region
        %s281 = ssub.s32 %s26, 1
        // Predicated region
        $region13: #{sentiment_classifier_forward.1} parent=11 // pred_check
          %p282 = pneg %p73
        $region14: #{sentiment_classifier_forward.1} parent=11 // pred_check_branch
          %284 = sbr.rel (%p282) target = $region16
        $region15: #{sentiment_classifier_forward.1} parent=11 // pred_region
          _
        $region16: #{sentiment_classifier_forward.1} parent=11 // pred_fallthru
          _
        // Predicated region
        $region17: #{sentiment_classifier_forward.1} parent=11 // pred_check
          %p285 = pneg %p94
        $region18: #{sentiment_classifier_forward.1} parent=11 // pred_check_branch
          %287 = sbr.rel (%p285) target = $region20
        $region19: #{sentiment_classifier_forward.1} parent=11 // pred_region
          _
        $region20: #{sentiment_classifier_forward.1} parent=11 // pred_fallthru
          _
        // Predicated region
        $region21: #{sentiment_classifier_forward.1} parent=11 // pred_check
          %p288 = pneg %p115
        $region22: #{sentiment_classifier_forward.1} parent=11 // pred_check_branch
          %290 = sbr.rel (%p288) target = $region24
        $region23: #{sentiment_classifier_forward.1} parent=11 // pred_region
          _
        $region24: #{sentiment_classifier_forward.1} parent=11 // pred_fallthru
          _
        // Predicated region
        $region25: #{sentiment_classifier_forward.1} parent=11 // pred_check
          %p291 = pneg %p136
        $region26: #{sentiment_classifier_forward.1} parent=11 // pred_check_branch
          %293 = sbr.rel (%p291) target = $region28
        $region27: #{sentiment_classifier_forward.1} parent=11 // pred_region
          _
        $region28: #{sentiment_classifier_forward.1} parent=11 // pred_fallthru
          _
        // Predicated region
        $region29: #{sentiment_classifier_forward.1} parent=11 // pred_check
          %p294 = pneg %p157
        $region30: #{sentiment_classifier_forward.1} parent=11 // pred_check_branch
          %296 = sbr.rel (%p294) target = $region32
        $region31: #{sentiment_classifier_forward.1} parent=11 // pred_region
          _
        $region32: #{sentiment_classifier_forward.1} parent=11 // pred_fallthru
          _
        // Predicated region
        $region33: #{sentiment_classifier_forward.1} parent=11 // pred_check
          %p297 = pneg %p178
        $region34: #{sentiment_classifier_forward.1} parent=11 // pred_check_branch
          %299 = sbr.rel (%p297) target = $region36
        $region35: #{sentiment_classifier_forward.1} parent=11 // pred_region
          _
        $region36: #{sentiment_classifier_forward.1} parent=11 // pred_fallthru
          _
        // Predicated region
        $region37: #{sentiment_classifier_forward.1} parent=11 // pred_check
          %p300 = pneg %p199
        $region38: #{sentiment_classifier_forward.1} parent=11 // pred_check_branch
          %302 = sbr.rel (%p300) target = $region40
        $region39: #{sentiment_classifier_forward.1} parent=11 // pred_region
          _
        $region40: #{sentiment_classifier_forward.1} parent=11 // pred_fallthru
          _
        // Predicated region
        $region41: #{sentiment_classifier_forward.1} parent=11 // pred_check
          %p303 = pneg %p220
        $region42: #{sentiment_classifier_forward.1} parent=11 // pred_check_branch
          %305 = sbr.rel (%p303) target = $region44
        $region43: #{sentiment_classifier_forward.1} parent=11 // pred_region
          _
        $region44: #{sentiment_classifier_forward.1} parent=11 // pred_fallthru
          _
        // Predicated region
        $region45: #{sentiment_classifier_forward.1} parent=11 // pred_check
          %p306 = pneg %p241
        $region46: #{sentiment_classifier_forward.1} parent=11 // pred_check_branch
          %308 = sbr.rel (%p306) target = $region48
        $region47: #{sentiment_classifier_forward.1} parent=11 // pred_region
          _
        $region48: #{sentiment_classifier_forward.1} parent=11 // pred_fallthru
          _
      $region12: #{sentiment_classifier_forward.1} parent=5 // pred_fallthru
        _
      %p309 = scmp.lt.s32.totalorder %s26, 2
      // Predicated region
      $region49: #{sentiment_classifier_forward.1} parent=5 // pred_check
        %p310 = pneg %p309
      $region50: #{sentiment_classifier_forward.1} parent=5 // pred_check_branch
        %312 = sbr.rel (%p310) target = $region52
      $region51: #{sentiment_classifier_forward.1} parent=5 // pred_region
        // Predicated region
        $region53: #{sentiment_classifier_forward.1} parent=51 // pred_check
          %p313 = pneg %p46
        $region54: #{sentiment_classifier_forward.1} parent=51 // pred_check_branch
          %315 = sbr.rel (%p313) target = $region56
        $region55: #{sentiment_classifier_forward.1} parent=51 // pred_region
          %p316 = scmp.lt.s32.totalorder %s26, 1
          %s317 = scalar_select %p316, %s26, 1
          %s318 = scalar_lea.vmem %s1, %s317
        $region56: #{sentiment_classifier_forward.1} parent=51 // pred_fallthru
          _
      $region52: #{sentiment_classifier_forward.1} parent=5 // pred_fallthru
        _
      %p319 = scmp.le.s32.totalorder 1, %s26
      %p320 = scmp.lt.s32.totalorder %s26, 3
      %p321 = pnand %p319, %p320
      %p322 = pneg %p321
      // Predicated region
      $region57: #{sentiment_classifier_forward.1} parent=5 // pred_check
        _
      $region58: #{sentiment_classifier_forward.1} parent=5 // pred_check_branch
        %324 = sbr.rel (%p321) target = $region60
      $region59: #{sentiment_classifier_forward.1} parent=5 // pred_region
        %s325 = ssub.s32 %s26, 1
        %p326 = scmp.lt.s32.totalorder %s31, 1
        %s327 = scalar_select %p326, %s31, 1
        %s328 = scalar_lea.vmem %s1, %s327
        %p329 = pneg %p52
        %p330 = pneg %p49
        %p331 = pneg %p73
        %p332 = pneg %p70
        %p333 = pneg %p94
        %p334 = pneg %p91
        %p335 = pneg %p115
        %p336 = pneg %p112
        %p337 = pneg %p136
        %p338 = pneg %p133
        %p339 = pneg %p157
        %p340 = pneg %p154
        %p341 = pneg %p178
        %p342 = pneg %p175
        %p343 = pneg %p199
        %p344 = pneg %p196
        %p345 = pneg %p220
        %p346 = pneg %p217
        %p347 = pneg %p241
        %p348 = pneg %p238
        %p349 = pneg %p267
        %p350 = pneg %p264
        %s351 = sand.u32 %s254, 1
        %s352 = scalar_lea.sflag [#allocation5], %s351
        %s353 = sand.u32 %s254, 1
        %s354 = scalar_lea.vmem [#allocation4], %s353
        %p355 = scmp.lt.s32.totalorder %s31, 1
        %s356 = scalar_select %p355, %s31, 1
        %s357 = scalar_lea.vmem %s1, %s356
        %v359 = vld [vmem:[%s8] sm:$0xff]
        %v360 = vld [vmem:[%s2] sm:$0xff]
        %v361 = vld [vmem:[%s2 + $0x8] sm:$0xff]
        %v362 = vld [vmem:[%s2 + $0x10] sm:$0xff]
        %v363 = vld [vmem:[%s2 + $0x18] sm:$0xff]
        %v364 = vld [vmem:[%s2 + $0x20] sm:$0xff]
        %v365 = vld [vmem:[%s2 + $0x28] sm:$0xff]
        %v366 = vld [vmem:[%s2 + $0x30] sm:$0xff]
        %v367 = vld [vmem:[%s2 + $0x38] sm:$0xff]
        %v368 = vld [vmem:[%s2 + $0x40] sm:$0xff]
        %v369 = vlaneseq
        %v370 = vand.u32 %v369, 127
        %v371 = vlaneseq
        %v372 = vshrl.u32 %v371, 7
        %s373 = smul.u32 %s31, 128
        %s374 = sld [smem:[#allocation3 + %s373]]
        %vm375 = vcmp.eq.s32.totalorder %v372, 0
        %v376 = vstv %s374
        %vm377 = vcmp.eq.s32.totalorder %v370, %v376
        %vm378 = vmand %vm375, %vm377
        %v379 = vsel %vm378, 1, 0
        %v380 = vcvt.s32.f32 %v379
        %v381 = vadd.f32 %v380, 0.0
        %s382 = sadd.s32 %s373, 1
        %s383 = sld [smem:[#allocation3 + %s382]]
        %vm384 = vcmp.eq.s32.totalorder %v372, 1
        %v385 = vstv %s383
        %vm386 = vcmp.eq.s32.totalorder %v370, %v385
        %vm387 = vmand %vm384, %vm386
        %v388 = vsel %vm387, 1, 0
        %v389 = vcvt.s32.f32 %v388
        %v390 = vadd.f32 %v381, %v389
        %s391 = sadd.s32 %s373, 2
        %s392 = sld [smem:[#allocation3 + %s391]]
        %vm393 = vcmp.eq.s32.totalorder %v372, 2
        %v394 = vstv %s392
        %vm395 = vcmp.eq.s32.totalorder %v370, %v394
        %vm396 = vmand %vm393, %vm395
        %v397 = vsel %vm396, 1, 0
        %v398 = vcvt.s32.f32 %v397
        %v399 = vadd.f32 %v390, %v398
        %s400 = sadd.s32 %s373, 3
        %s401 = sld [smem:[#allocation3 + %s400]]
        %vm402 = vcmp.eq.s32.totalorder %v372, 3
        %v403 = vstv %s401
        %vm404 = vcmp.eq.s32.totalorder %v370, %v403
        %vm405 = vmand %vm402, %vm404
        %v406 = vsel %vm405, 1, 0
        %v407 = vcvt.s32.f32 %v406
        %v408 = vadd.f32 %v399, %v407
        %s409 = sadd.s32 %s373, 4
        %s410 = sld [smem:[#allocation3 + %s409]]
        %vm411 = vcmp.eq.s32.totalorder %v372, 4
        %v412 = vstv %s410
        %vm413 = vcmp.eq.s32.totalorder %v370, %v412
        %vm414 = vmand %vm411, %vm413
        %v415 = vsel %vm414, 1, 0
        %v416 = vcvt.s32.f32 %v415
        %v417 = vadd.f32 %v408, %v416
        %s418 = sadd.s32 %s373, 5
        %s419 = sld [smem:[#allocation3 + %s418]]
        %vm420 = vcmp.eq.s32.totalorder %v372, 5
        %v421 = vstv %s419
        %vm422 = vcmp.eq.s32.totalorder %v370, %v421
        %vm423 = vmand %vm420, %vm422
        %v424 = vsel %vm423, 1, 0
        %v425 = vcvt.s32.f32 %v424
        %v426 = vadd.f32 %v417, %v425
        %s427 = sadd.s32 %s373, 6
        %s428 = sld [smem:[#allocation3 + %s427]]
        %vm429 = vcmp.eq.s32.totalorder %v372, 6
        %v430 = vstv %s428
        %vm431 = vcmp.eq.s32.totalorder %v370, %v430
        %vm432 = vmand %vm429, %vm431
        %v433 = vsel %vm432, 1, 0
        %v434 = vcvt.s32.f32 %v433
        %v435 = vadd.f32 %v426, %v434
        %s436 = sadd.s32 %s373, 7
        %s437 = sld [smem:[#allocation3 + %s436]]
        %vm438 = vcmp.eq.s32.totalorder %v372, 7
        %v439 = vstv %s437
        %vm440 = vcmp.eq.s32.totalorder %v370, %v439
        %vm441 = vmand %vm438, %vm440
        %v442 = vsel %vm441, 1, 0
        %v443 = vcvt.s32.f32 %v442
        %v444 = vadd.f32 %v435, %v443
        %vm445 = vcmask 523264
        %v447 = vsel %vm445, %v444, 0
        %449 = vmatprep.subr.mxu0 0.0
        %450 = vmatpush1.msra.mxu0 0.0
        %451 = vmatprep.subr.mxu0 0.0
        %452 = vmatpush1.msra.mxu0 0.0
        %453 = vmatprep.subr.mxu0 0.0
        %454 = vmatpush1.msra.mxu0 0.0
        %455 = vmatprep.subr.mxu0 0.0
        %456 = vmatpush1.msra.mxu0 0.0
        %457 = vmatprep.subr.mxu0 0.0
        %458 = vmatpush1.msra.mxu0 0.0
        %459 = vmatprep.subr.mxu0 0.0
        %460 = vmatpush1.msra.mxu0 0.0
        %461 = vmatprep.subr.mxu0 0.0
        %462 = vmatpush1.msra.mxu0 0.0
        %463 = vmatprep.subr.mxu0 0.0
        %464 = vmatpush1.msra.mxu0 0.0
        %465 = vmatprep.subr.mxu0 0.0
        %466 = vmatpush1.msra.mxu0 %v367
        %467 = vmatprep.subr.mxu0 0.0
        %468 = vmatpush1.msra.mxu0 %v366
        %469 = vmatprep.subr.mxu0 0.0
        %470 = vmatpush1.msra.mxu0 %v365
        %471 = vmatprep.subr.mxu0 0.0
        %472 = vmatpush1.msra.mxu0 %v364
        %473 = vmatprep.subr.mxu0 0.0
        %474 = vmatpush1.msra.mxu0 %v363
        %475 = vmatprep.subr.mxu0 0.0
        %476 = vmatpush1.msra.mxu0 %v362
        %477 = vmatprep.subr.mxu0 0.0
        %478 = vmatpush1.msra.mxu0 %v361
        %479 = vmatprep.subr.mxu0 0.0
        %480 = vmatpush1.msra.mxu0 %v360
        %481 = vmatprep.subr.mxu0 0.0
        %482 = vmatpush2.msra.mxu0 0.0
        %483 = vmatprep.subr.mxu0 0.0
        %484 = vmatpush2.msra.mxu0 0.0
        %485 = vmatprep.subr.mxu0 0.0
        %486 = vmatpush2.msra.mxu0 0.0
        %487 = vmatprep.subr.mxu0 0.0
        %488 = vmatpush2.msra.mxu0 0.0
        %489 = vmatprep.subr.mxu0 0.0
        %490 = vmatpush2.msra.mxu0 0.0
        %491 = vmatprep.subr.mxu0 0.0
        %492 = vmatpush2.msra.mxu0 0.0
        %493 = vmatprep.subr.mxu0 0.0
        %494 = vmatpush2.msra.mxu0 0.0
        %495 = vmatprep.subr.mxu0 0.0
        %496 = vmatpush2.msra.mxu0 0.0
        %497 = vmatprep.subr.mxu0 0.0
        %498 = vmatpush2.msra.mxu0 0.0
        %499 = vmatprep.subr.mxu0 0.0
        %500 = vmatpush2.msra.mxu0 0.0
        %501 = vmatprep.subr.mxu0 0.0
        %502 = vmatpush2.msra.mxu0 0.0
        %503 = vmatprep.subr.mxu0 0.0
        %504 = vmatpush2.msra.mxu0 0.0
        %505 = vmatprep.subr.mxu0 0.0
        %506 = vmatpush2.msra.mxu0 0.0
        %507 = vmatprep.subr.mxu0 0.0
        %508 = vmatpush2.msra.mxu0 0.0
        %509 = vmatprep.subr.mxu0 0.0
        %510 = vmatpush2.msra.mxu0 0.0
        %511 = vmatprep.subr.mxu0 0.0
        %512 = vmatpush2.msra.mxu0 0.0
        %513 = vmatprep.mubr.f32.mxu0 0.0
        %514 = vmatmul.mubr.f32.gmra.mxu0 %v447
        %v515 = vpop.f32.mrf.mxu0
        %v516 = vadd.f32 %v368, %v515
        %v517 = vpop.f32.mrf.mxu0
        %518 = vdwg.mxu0
        %vm519 = vcmask 261120
        %v520 = vsel %vm519, %v516, 0.0
        %521 = vadd.xlane.f32.xlu0 %v520
        %v522 = vpop.xlane.xlu0 %521
        %v523 = vrcp.pop 32.0
        %v524 = vmul.f32 %v522, %v523
        %v525 = vmul.f32 %v516, %v516
        %v526 = vsel %vm519, %v525, 0.0
        %527 = vadd.xlane.f32.xlu0 %v526
        %v528 = vpop.xlane.xlu0 %527
        %v529 = vmul.f32 %v528, %v523
        %v530 = vmul.f32 %v524, %v524
        %v531 = vsub.f32 %v529, %v530
        %v532 = vsub.f32 %v516, %v524
        %v533 = vadd.f32 %v531, 1e-12
        %v534 = vrsqrt.pop %v533
        %v535 = vmul.f32 %v532, %v534
        %v536 = vlaneseq
        %v537 = vshrl.u32 %v536, 7
        %v538 = vsub.s32 0, %v537
        %v539 = vrot.slane %v359, %v538
        %v540 = vmul.f32 %v535, %v539
        %v541 = vlaneseq
        %v542 = vshrl.u32 %v541, 7
        %v543 = vsub.s32 1, %v542
        %v544 = vrot.slane %v359, %v543
        %v545 = vadd.f32 %v540, %v544
        %v546 = vld [vmem:[%s357] sm:$0x1]
        %v547 = vsub.f32 1.0, %v546
        %v548 = vmul.f32 %v547, -10000.0
        %v550 = vlaneseq
        %v551 = vshrl.u32 %v550, 7
        %v552 = vsub.s32 0, %v551
        %v553 = vrot.slane %v548, %v552
        %v555 = vld [vmem:[%s7] sm:$0xff]
        %v556 = vpack.c.bf16 %v545, %v545
        %v557 = vld [vmem:[%s3] sm:$0xf]
        %v558 = vld [vmem:[%s3 + $0x4] sm:$0xf]
        %v559 = vld [vmem:[%s3 + $0x8] sm:$0xf]
        %v560 = vld [vmem:[%s3 + $0xc] sm:$0xf]
        %v561 = vlaneseq
        %v562 = vshrl.u32 %v561, 7
        %v563 = vsub.s32 0, %v562
        %v564 = vrot.slane %v555, %v563
        %v569 = vunpack.c.l.b16 %v557
        %v570 = vunpack.c.l.b16 %v558
        %v571 = vunpack.c.l.b16 %v559
        %v572 = vunpack.c.l.b16 %v560
        %v573 = vpack.c.b16 %v570, %v569
        %v574 = vpack.c.b16 %v572, %v571
        %v578 = vsel %vm519, %v556, 0
        %580 = vmatprep.subr.bf16.mxu0 0
        %581 = vmatpush1.bf16.msra.mxu0 0
        %582 = vmatprep.subr.bf16.mxu0 0
        %583 = vmatpush1.bf16.msra.mxu0 0
        %584 = vmatprep.subr.bf16.mxu0 0
        %585 = vmatpush1.bf16.msra.mxu0 0
        %586 = vmatprep.subr.bf16.mxu0 0
        %587 = vmatpush1.bf16.msra.mxu0 0
        %588 = vmatprep.subr.bf16.mxu0 0
        %589 = vmatpush1.bf16.msra.mxu0 0
        %590 = vmatprep.subr.bf16.mxu0 0
        %591 = vmatpush1.bf16.msra.mxu0 0
        %592 = vmatprep.subr.bf16.mxu0 0
        %593 = vmatpush1.bf16.msra.mxu0 %v574
        %594 = vmatprep.subr.bf16.mxu0 0
        %595 = vmatpush1.bf16.msra.mxu0 %v573
        %596 = vmatprep.subr.bf16.mxu0 0
        %597 = vmatpush2.bf16.msra.mxu0 0
        %598 = vmatprep.subr.bf16.mxu0 0
        %599 = vmatpush2.bf16.msra.mxu0 0
        %600 = vmatprep.subr.bf16.mxu0 0
        %601 = vmatpush2.bf16.msra.mxu0 0
        %602 = vmatprep.subr.bf16.mxu0 0
        %603 = vmatpush2.bf16.msra.mxu0 0
        %604 = vmatprep.subr.bf16.mxu0 0
        %605 = vmatpush2.bf16.msra.mxu0 0
        %606 = vmatprep.subr.bf16.mxu0 0
        %607 = vmatpush2.bf16.msra.mxu0 0
        %608 = vmatprep.subr.bf16.mxu0 0
        %609 = vmatpush2.bf16.msra.mxu0 0
        %610 = vmatprep.subr.bf16.mxu0 0
        %611 = vmatpush2.bf16.msra.mxu0 0
        %612 = vmatprep.mubr.bf16.mxu0 0
        %613 = vmatmul.mubr.bf16.gmra.mxu0 %v578
        %v614 = vpop.f32.mrf.mxu0
        %v615 = vadd.f32 %v564, %v614
        %v616 = vpop.f32.mrf.mxu0
        %v617 = vpop.f32.mrf.mxu0
        %v618 = vpop.f32.mrf.mxu0
        %619 = vdwg.mxu0
        %621 = vrot.lane.b32.xlu0 %v615, 120
        %v622 = vpop.permute.xlu0 %621
        %623 = vrot.lane.b32.xlu0 %v615, 112
        %v624 = vpop.permute.xlu0 %623
        %625 = vrot.lane.b32.xlu0 %v615, 104
        %v626 = vpop.permute.xlu0 %625
        %627 = vrot.lane.b32.xlu0 %v615, 96
        %v628 = vpop.permute.xlu0 %627
        %vm629 = vcmask 64512
        %v630 = vsel %vm629, %v615, 0
        %v632 = vsel %vm629, %v628, 0
        %634 = vmatprep.subr.mxu0 0.0
        %635 = vmatpush1.xpose.msra.mxu0 0.0
        %636 = vmatprep.subr.mxu0 0.0
        %637 = vmatpush1.xpose.msra.mxu0 0.0
        %638 = vmatprep.subr.mxu0 0.0
        %639 = vmatpush1.xpose.msra.mxu0 0.0
        %640 = vmatprep.subr.mxu0 0.0
        %641 = vmatpush1.xpose.msra.mxu0 0.0
        %642 = vmatprep.subr.mxu0 0.0
        %643 = vmatpush1.xpose.msra.mxu0 0.0
        %644 = vmatprep.subr.mxu0 0.0
        %645 = vmatpush1.xpose.msra.mxu0 0.0
        %646 = vmatprep.subr.mxu0 0.0
        %647 = vmatpush1.xpose.msra.mxu0 0.0
        %648 = vmatprep.subr.mxu0 0.0
        %649 = vmatpush1.xpose.msra.mxu0 0.0
        %650 = vmatprep.subr.mxu0 0.0
        %651 = vmatpush1.xpose.msra.mxu0 0.0
        %652 = vmatprep.subr.mxu0 0.0
        %653 = vmatpush1.xpose.msra.mxu0 0.0
        %654 = vmatprep.subr.mxu0 0.0
        %655 = vmatpush1.xpose.msra.mxu0 0.0
        %656 = vmatprep.subr.mxu0 0.0
        %657 = vmatpush1.xpose.msra.mxu0 0.0
        %658 = vmatprep.subr.mxu0 0.0
        %659 = vmatpush1.xpose.msra.mxu0 0.0
        %660 = vmatprep.subr.mxu0 0.0
        %661 = vmatpush1.xpose.msra.mxu0 0.0
        %662 = vmatprep.subr.mxu0 0.0
        %663 = vmatpush1.xpose.msra.mxu0 0.0
        %664 = vmatprep.subr.mxu0 0.0
        %665 = vmatpush1.xpose.msra.mxu0 %v632
        %666 = vmatprep.subr.mxu0 0.0
        %667 = vmatpush2.xpose.msra.mxu0 0.0
        %668 = vmatprep.subr.mxu0 0.0
        %669 = vmatpush2.xpose.msra.mxu0 0.0
        %670 = vmatprep.subr.mxu0 0.0
        %671 = vmatpush2.xpose.msra.mxu0 0.0
        %672 = vmatprep.subr.mxu0 0.0
        %673 = vmatpush2.xpose.msra.mxu0 0.0
        %674 = vmatprep.subr.mxu0 0.0
        %675 = vmatpush2.xpose.msra.mxu0 0.0
        %676 = vmatprep.subr.mxu0 0.0
        %677 = vmatpush2.xpose.msra.mxu0 0.0
        %678 = vmatprep.subr.mxu0 0.0
        %679 = vmatpush2.xpose.msra.mxu0 0.0
        %680 = vmatprep.subr.mxu0 0.0
        %681 = vmatpush2.xpose.msra.mxu0 0.0
        %682 = vmatprep.subr.mxu0 0.0
        %683 = vmatpush2.xpose.msra.mxu0 0.0
        %684 = vmatprep.subr.mxu0 0.0
        %685 = vmatpush2.xpose.msra.mxu0 0.0
        %686 = vmatprep.subr.mxu0 0.0
        %687 = vmatpush2.xpose.msra.mxu0 0.0
        %688 = vmatprep.subr.mxu0 0.0
        %689 = vmatpush2.xpose.msra.mxu0 0.0
        %690 = vmatprep.subr.mxu0 0.0
        %691 = vmatpush2.xpose.msra.mxu0 0.0
        %692 = vmatprep.subr.mxu0 0.0
        %693 = vmatpush2.xpose.msra.mxu0 0.0
        %694 = vmatprep.subr.mxu0 0.0
        %695 = vmatpush2.xpose.msra.mxu0 0.0
        %696 = vmatprep.subr.mxu0 0.0
        %697 = vmatpush2.xpose.msra.mxu0 0.0
        %698 = vmatprep.mubr.f32.mxu0 0.0
        %699 = vmatmul.mubr.f32.gmra.mxu0 %v630
        %v700 = vpop.f32.mrf.mxu0
        %v701 = vadd.f32 0.0, %v700
        %v702 = vpop.f32.mrf.mxu0
        %703 = vdwg.mxu0
        %704 = vrot.lane.b32.xlu0 %v622, 96
        %v705 = vpop.permute.xlu0 %704
        %v706 = vsel %vm629, %v622, 0
        %v708 = vsel %vm629, %v705, 0
        %710 = vmatprep.subr.mxu0 0.0
        %711 = vmatpush1.xpose.msra.mxu0 0.0
        %712 = vmatprep.subr.mxu0 0.0
        %713 = vmatpush1.xpose.msra.mxu0 0.0
        %714 = vmatprep.subr.mxu0 0.0
        %715 = vmatpush1.xpose.msra.mxu0 0.0
        %716 = vmatprep.subr.mxu0 0.0
        %717 = vmatpush1.xpose.msra.mxu0 0.0
        %718 = vmatprep.subr.mxu0 0.0
        %719 = vmatpush1.xpose.msra.mxu0 0.0
        %720 = vmatprep.subr.mxu0 0.0
        %721 = vmatpush1.xpose.msra.mxu0 0.0
        %722 = vmatprep.subr.mxu0 0.0
        %723 = vmatpush1.xpose.msra.mxu0 0.0
        %724 = vmatprep.subr.mxu0 0.0
        %725 = vmatpush1.xpose.msra.mxu0 0.0
        %726 = vmatprep.subr.mxu0 0.0
        %727 = vmatpush1.xpose.msra.mxu0 0.0
        %728 = vmatprep.subr.mxu0 0.0
        %729 = vmatpush1.xpose.msra.mxu0 0.0
        %730 = vmatprep.subr.mxu0 0.0
        %731 = vmatpush1.xpose.msra.mxu0 0.0
        %732 = vmatprep.subr.mxu0 0.0
        %733 = vmatpush1.xpose.msra.mxu0 0.0
        %734 = vmatprep.subr.mxu0 0.0
        %735 = vmatpush1.xpose.msra.mxu0 0.0
        %736 = vmatprep.subr.mxu0 0.0
        %737 = vmatpush1.xpose.msra.mxu0 0.0
        %738 = vmatprep.subr.mxu0 0.0
        %739 = vmatpush1.xpose.msra.mxu0 0.0
        %740 = vmatprep.subr.mxu0 0.0
        %741 = vmatpush1.xpose.msra.mxu0 %v708
        %742 = vmatprep.subr.mxu0 0.0
        %743 = vmatpush2.xpose.msra.mxu0 0.0
        %744 = vmatprep.subr.mxu0 0.0
        %745 = vmatpush2.xpose.msra.mxu0 0.0
        %746 = vmatprep.subr.mxu0 0.0
        %747 = vmatpush2.xpose.msra.mxu0 0.0
        %748 = vmatprep.subr.mxu0 0.0
        %749 = vmatpush2.xpose.msra.mxu0 0.0
        %750 = vmatprep.subr.mxu0 0.0
        %751 = vmatpush2.xpose.msra.mxu0 0.0
        %752 = vmatprep.subr.mxu0 0.0
        %753 = vmatpush2.xpose.msra.mxu0 0.0
        %754 = vmatprep.subr.mxu0 0.0
        %755 = vmatpush2.xpose.msra.mxu0 0.0
        %756 = vmatprep.subr.mxu0 0.0
        %757 = vmatpush2.xpose.msra.mxu0 0.0
        %758 = vmatprep.subr.mxu0 0.0
        %759 = vmatpush2.xpose.msra.mxu0 0.0
        %760 = vmatprep.subr.mxu0 0.0
        %761 = vmatpush2.xpose.msra.mxu0 0.0
        %762 = vmatprep.subr.mxu0 0.0
        %763 = vmatpush2.xpose.msra.mxu0 0.0
        %764 = vmatprep.subr.mxu0 0.0
        %765 = vmatpush2.xpose.msra.mxu0 0.0
        %766 = vmatprep.subr.mxu0 0.0
        %767 = vmatpush2.xpose.msra.mxu0 0.0
        %768 = vmatprep.subr.mxu0 0.0
        %769 = vmatpush2.xpose.msra.mxu0 0.0
        %770 = vmatprep.subr.mxu0 0.0
        %771 = vmatpush2.xpose.msra.mxu0 0.0
        %772 = vmatprep.subr.mxu0 0.0
        %773 = vmatpush2.xpose.msra.mxu0 0.0
        %774 = vmatprep.mubr.f32.mxu0 0.0
        %775 = vmatmul.mubr.f32.gmra.mxu0 %v706
        %v776 = vpop.f32.mrf.mxu0
        %v777 = vadd.f32 0.0, %v776
        %v778 = vpop.f32.mrf.mxu0
        %779 = vdwg.mxu0
        %780 = vrot.lane.b32.xlu0 %v624, 96
        %v781 = vpop.permute.xlu0 %780
        %v782 = vsel %vm629, %v624, 0
        %v784 = vsel %vm629, %v781, 0
        %786 = vmatprep.subr.mxu0 0.0
        %787 = vmatpush1.xpose.msra.mxu0 0.0
        %788 = vmatprep.subr.mxu0 0.0
        %789 = vmatpush1.xpose.msra.mxu0 0.0
        %790 = vmatprep.subr.mxu0 0.0
        %791 = vmatpush1.xpose.msra.mxu0 0.0
        %792 = vmatprep.subr.mxu0 0.0
        %793 = vmatpush1.xpose.msra.mxu0 0.0
        %794 = vmatprep.subr.mxu0 0.0
        %795 = vmatpush1.xpose.msra.mxu0 0.0
        %796 = vmatprep.subr.mxu0 0.0
        %797 = vmatpush1.xpose.msra.mxu0 0.0
        %798 = vmatprep.subr.mxu0 0.0
        %799 = vmatpush1.xpose.msra.mxu0 0.0
        %800 = vmatprep.subr.mxu0 0.0
        %801 = vmatpush1.xpose.msra.mxu0 0.0
        %802 = vmatprep.subr.mxu0 0.0
        %803 = vmatpush1.xpose.msra.mxu0 0.0
        %804 = vmatprep.subr.mxu0 0.0
        %805 = vmatpush1.xpose.msra.mxu0 0.0
        %806 = vmatprep.subr.mxu0 0.0
        %807 = vmatpush1.xpose.msra.mxu0 0.0
        %808 = vmatprep.subr.mxu0 0.0
        %809 = vmatpush1.xpose.msra.mxu0 0.0
        %810 = vmatprep.subr.mxu0 0.0
        %811 = vmatpush1.xpose.msra.mxu0 0.0
        %812 = vmatprep.subr.mxu0 0.0
        %813 = vmatpush1.xpose.msra.mxu0 0.0
        %814 = vmatprep.subr.mxu0 0.0
        %815 = vmatpush1.xpose.msra.mxu0 0.0
        %816 = vmatprep.subr.mxu0 0.0
        %817 = vmatpush1.xpose.msra.mxu0 %v784
        %818 = vmatprep.subr.mxu0 0.0
        %819 = vmatpush2.xpose.msra.mxu0 0.0
        %820 = vmatprep.subr.mxu0 0.0
        %821 = vmatpush2.xpose.msra.mxu0 0.0
        %822 = vmatprep.subr.mxu0 0.0
        %823 = vmatpush2.xpose.msra.mxu0 0.0
        %824 = vmatprep.subr.mxu0 0.0
        %825 = vmatpush2.xpose.msra.mxu0 0.0
        %826 = vmatprep.subr.mxu0 0.0
        %827 = vmatpush2.xpose.msra.mxu0 0.0
        %828 = vmatprep.subr.mxu0 0.0
        %829 = vmatpush2.xpose.msra.mxu0 0.0
        %830 = vmatprep.subr.mxu0 0.0
        %831 = vmatpush2.xpose.msra.mxu0 0.0
        %832 = vmatprep.subr.mxu0 0.0
        %833 = vmatpush2.xpose.msra.mxu0 0.0
        %834 = vmatprep.subr.mxu0 0.0
        %835 = vmatpush2.xpose.msra.mxu0 0.0
        %836 = vmatprep.subr.mxu0 0.0
        %837 = vmatpush2.xpose.msra.mxu0 0.0
        %838 = vmatprep.subr.mxu0 0.0
        %839 = vmatpush2.xpose.msra.mxu0 0.0
        %840 = vmatprep.subr.mxu0 0.0
        %841 = vmatpush2.xpose.msra.mxu0 0.0
        %842 = vmatprep.subr.mxu0 0.0
        %843 = vmatpush2.xpose.msra.mxu0 0.0
        %844 = vmatprep.subr.mxu0 0.0
        %845 = vmatpush2.xpose.msra.mxu0 0.0
        %846 = vmatprep.subr.mxu0 0.0
        %847 = vmatpush2.xpose.msra.mxu0 0.0
        %848 = vmatprep.subr.mxu0 0.0
        %849 = vmatpush2.xpose.msra.mxu0 0.0
        %850 = vmatprep.mubr.f32.mxu0 0.0
        %851 = vmatmul.mubr.f32.gmra.mxu0 %v782
        %v852 = vpop.f32.mrf.mxu0
        %v853 = vadd.f32 0.0, %v852
        %v854 = vpop.f32.mrf.mxu0
        %855 = vdwg.mxu0
        %856 = vrot.lane.b32.xlu0 %v626, 96
        %v857 = vpop.permute.xlu0 %856
        %v858 = vsel %vm629, %v626, 0
        %v860 = vsel %vm629, %v857, 0
        %862 = vmatprep.subr.mxu0 0.0
        %863 = vmatpush1.xpose.msra.mxu0 0.0
        %864 = vmatprep.subr.mxu0 0.0
        %865 = vmatpush1.xpose.msra.mxu0 0.0
        %866 = vmatprep.subr.mxu0 0.0
        %867 = vmatpush1.xpose.msra.mxu0 0.0
        %868 = vmatprep.subr.mxu0 0.0
        %869 = vmatpush1.xpose.msra.mxu0 0.0
        %870 = vmatprep.subr.mxu0 0.0
        %871 = vmatpush1.xpose.msra.mxu0 0.0
        %872 = vmatprep.subr.mxu0 0.0
        %873 = vmatpush1.xpose.msra.mxu0 0.0
        %874 = vmatprep.subr.mxu0 0.0
        %875 = vmatpush1.xpose.msra.mxu0 0.0
        %876 = vmatprep.subr.mxu0 0.0
        %877 = vmatpush1.xpose.msra.mxu0 0.0
        %878 = vmatprep.subr.mxu0 0.0
        %879 = vmatpush1.xpose.msra.mxu0 0.0
        %880 = vmatprep.subr.mxu0 0.0
        %881 = vmatpush1.xpose.msra.mxu0 0.0
        %882 = vmatprep.subr.mxu0 0.0
        %883 = vmatpush1.xpose.msra.mxu0 0.0
        %884 = vmatprep.subr.mxu0 0.0
        %885 = vmatpush1.xpose.msra.mxu0 0.0
        %886 = vmatprep.subr.mxu0 0.0
        %887 = vmatpush1.xpose.msra.mxu0 0.0
        %888 = vmatprep.subr.mxu0 0.0
        %889 = vmatpush1.xpose.msra.mxu0 0.0
        %890 = vmatprep.subr.mxu0 0.0
        %891 = vmatpush1.xpose.msra.mxu0 0.0
        %892 = vmatprep.subr.mxu0 0.0
        %893 = vmatpush1.xpose.msra.mxu0 %v860
        %894 = vmatprep.subr.mxu0 0.0
        %895 = vmatpush2.xpose.msra.mxu0 0.0
        %896 = vmatprep.subr.mxu0 0.0
        %897 = vmatpush2.xpose.msra.mxu0 0.0
        %898 = vmatprep.subr.mxu0 0.0
        %899 = vmatpush2.xpose.msra.mxu0 0.0
        %900 = vmatprep.subr.mxu0 0.0
        %901 = vmatpush2.xpose.msra.mxu0 0.0
        %902 = vmatprep.subr.mxu0 0.0
        %903 = vmatpush2.xpose.msra.mxu0 0.0
        %904 = vmatprep.subr.mxu0 0.0
        %905 = vmatpush2.xpose.msra.mxu0 0.0
        %906 = vmatprep.subr.mxu0 0.0
        %907 = vmatpush2.xpose.msra.mxu0 0.0
        %908 = vmatprep.subr.mxu0 0.0
        %909 = vmatpush2.xpose.msra.mxu0 0.0
        %910 = vmatprep.subr.mxu0 0.0
        %911 = vmatpush2.xpose.msra.mxu0 0.0
        %912 = vmatprep.subr.mxu0 0.0
        %913 = vmatpush2.xpose.msra.mxu0 0.0
        %914 = vmatprep.subr.mxu0 0.0
        %915 = vmatpush2.xpose.msra.mxu0 0.0
        %916 = vmatprep.subr.mxu0 0.0
        %917 = vmatpush2.xpose.msra.mxu0 0.0
        %918 = vmatprep.subr.mxu0 0.0
        %919 = vmatpush2.xpose.msra.mxu0 0.0
        %920 = vmatprep.subr.mxu0 0.0
        %921 = vmatpush2.xpose.msra.mxu0 0.0
        %922 = vmatprep.subr.mxu0 0.0
        %923 = vmatpush2.xpose.msra.mxu0 0.0
        %924 = vmatprep.subr.mxu0 0.0
        %925 = vmatpush2.xpose.msra.mxu0 0.0
        %926 = vmatprep.mubr.f32.mxu0 0.0
        %927 = vmatmul.mubr.f32.gmra.mxu0 %v858
        %v928 = vpop.f32.mrf.mxu0
        %v929 = vadd.f32 0.0, %v928
        %v930 = vpop.f32.mrf.mxu0
        %931 = vdwg.mxu0
        %v932 = vmul.f32 %v701, 0.35355338
        %v933 = vmul.f32 %v777, 0.35355338
        %v934 = vmul.f32 %v853, 0.35355338
        %v935 = vmul.f32 %v929, 0.35355338
        %v936 = vadd.f32 %v932, %v553
        %v937 = vadd.f32 %v933, %v553
        %v938 = vadd.f32 %v934, %v553
        %v939 = vadd.f32 %v935, %v553
        %v940 = vsel %vm629, %v936, -inf
        %941 = vmax.xlane.f32.xlu0 %v940
        %v942 = vpop.xlane.xlu0 %941
        %v943 = vsel %vm629, %v937, -inf
        %944 = vmax.xlane.f32.xlu0 %v943
        %v945 = vpop.xlane.xlu0 %944
        %v946 = vsel %vm629, %v938, -inf
        %947 = vmax.xlane.f32.xlu0 %v946
        %v948 = vpop.xlane.xlu0 %947
        %v949 = vsel %vm629, %v939, -inf
        %950 = vmax.xlane.f32.xlu0 %v949
        %v951 = vpop.xlane.xlu0 %950
        %v952 = vsub.f32 %v936, %v942
        %v953 = vsub.f32 %v937, %v945
        %v954 = vsub.f32 %v938, %v948
        %v955 = vsub.f32 %v939, %v951
        %v956 = vmul.f32 %v952, 1.442695
        %v957 = vpow.pop %v956
        %v958 = vmul.f32 %v953, 1.442695
        %v959 = vpow.pop %v958
        %v960 = vmul.f32 %v954, 1.442695
        %v961 = vpow.pop %v960
        %v962 = vmul.f32 %v955, 1.442695
        %v963 = vpow.pop %v962
        %v964 = vsel %vm629, %v957, 0.0
        %965 = vadd.xlane.f32.xlu0 %v964
        %v966 = vpop.xlane.xlu0 %965
        %v967 = vsel %vm629, %v959, 0.0
        %968 = vadd.xlane.f32.xlu0 %v967
        %v969 = vpop.xlane.xlu0 %968
        %v970 = vsel %vm629, %v961, 0.0
        %971 = vadd.xlane.f32.xlu0 %v970
        %v972 = vpop.xlane.xlu0 %971
        %v973 = vsel %vm629, %v963, 0.0
        %974 = vadd.xlane.f32.xlu0 %v973
        %v975 = vpop.xlane.xlu0 %974
        %v976 = vrcp.pop %v966
        %v977 = vrcp.pop %v969
        %v978 = vrcp.pop %v972
        %v979 = vrcp.pop %v975
        %v980 = vmul.f32 %v957, %v976
        %v981 = vmul.f32 %v959, %v977
        %v982 = vmul.f32 %v961, %v978
        %v983 = vmul.f32 %v963, %v979
        %984 = vrot.lane.b32.xlu0 %v615, 64
        %v985 = vpop.permute.xlu0 %984
        %v988 = vsel %vm629, %v980, 0
        %990 = vmatprep.subr.mxu0 0.0
        %991 = vmatpush1.msra.mxu0 0.0
        %992 = vmatprep.subr.mxu0 0.0
        %993 = vmatpush1.msra.mxu0 0.0
        %994 = vmatprep.subr.mxu0 0.0
        %995 = vmatpush1.msra.mxu0 0.0
        %996 = vmatprep.subr.mxu0 0.0
        %997 = vmatpush1.msra.mxu0 0.0
        %998 = vmatprep.subr.mxu0 0.0
        %999 = vmatpush1.msra.mxu0 0.0
        %1000 = vmatprep.subr.mxu0 0.0
        %1001 = vmatpush1.msra.mxu0 0.0
        %1002 = vmatprep.subr.mxu0 0.0
        %1003 = vmatpush1.msra.mxu0 0.0
        %1004 = vmatprep.subr.mxu0 0.0
        %1005 = vmatpush1.msra.mxu0 0.0
        %1006 = vmatprep.subr.mxu0 0.0
        %1007 = vmatpush1.msra.mxu0 0.0
        %1008 = vmatprep.subr.mxu0 0.0
        %1009 = vmatpush1.msra.mxu0 0.0
        %1010 = vmatprep.subr.mxu0 0.0
        %1011 = vmatpush1.msra.mxu0 0.0
        %1012 = vmatprep.subr.mxu0 0.0
        %1013 = vmatpush1.msra.mxu0 0.0
        %1014 = vmatprep.subr.mxu0 0.0
        %1015 = vmatpush1.msra.mxu0 0.0
        %1016 = vmatprep.subr.mxu0 0.0
        %1017 = vmatpush1.msra.mxu0 0.0
        %1018 = vmatprep.subr.mxu0 0.0
        %1019 = vmatpush1.msra.mxu0 0.0
        %1020 = vmatprep.subr.mxu0 0.0
        %1021 = vmatpush1.msra.mxu0 %v985
        %1022 = vmatprep.subr.mxu0 0.0
        %1023 = vmatpush2.msra.mxu0 0.0
        %1024 = vmatprep.subr.mxu0 0.0
        %1025 = vmatpush2.msra.mxu0 0.0
        %1026 = vmatprep.subr.mxu0 0.0
        %1027 = vmatpush2.msra.mxu0 0.0
        %1028 = vmatprep.subr.mxu0 0.0
        %1029 = vmatpush2.msra.mxu0 0.0
        %1030 = vmatprep.subr.mxu0 0.0
        %1031 = vmatpush2.msra.mxu0 0.0
        %1032 = vmatprep.subr.mxu0 0.0
        %1033 = vmatpush2.msra.mxu0 0.0
        %1034 = vmatprep.subr.mxu0 0.0
        %1035 = vmatpush2.msra.mxu0 0.0
        %1036 = vmatprep.subr.mxu0 0.0
        %1037 = vmatpush2.msra.mxu0 0.0
        %1038 = vmatprep.subr.mxu0 0.0
        %1039 = vmatpush2.msra.mxu0 0.0
        %1040 = vmatprep.subr.mxu0 0.0
        %1041 = vmatpush2.msra.mxu0 0.0
        %1042 = vmatprep.subr.mxu0 0.0
        %1043 = vmatpush2.msra.mxu0 0.0
        %1044 = vmatprep.subr.mxu0 0.0
        %1045 = vmatpush2.msra.mxu0 0.0
        %1046 = vmatprep.subr.mxu0 0.0
        %1047 = vmatpush2.msra.mxu0 0.0
        %1048 = vmatprep.subr.mxu0 0.0
        %1049 = vmatpush2.msra.mxu0 0.0
        %1050 = vmatprep.subr.mxu0 0.0
        %1051 = vmatpush2.msra.mxu0 0.0
        %1052 = vmatprep.subr.mxu0 0.0
        %1053 = vmatpush2.msra.mxu0 0.0
        %1054 = vmatprep.mubr.f32.mxu0 0.0
        %1055 = vmatmul.mubr.f32.gmra.mxu0 %v988
        %v1056 = vpop.f32.mrf.mxu0
        %v1057 = vadd.f32 0.0, %v1056
        %v1058 = vpop.f32.mrf.mxu0
        %1059 = vdwg.mxu0
        %1060 = vrot.lane.b32.xlu0 %v622, 64
        %v1061 = vpop.permute.xlu0 %1060
        %v1064 = vsel %vm629, %v981, 0
        %1066 = vmatprep.subr.mxu0 0.0
        %1067 = vmatpush1.msra.mxu0 0.0
        %1068 = vmatprep.subr.mxu0 0.0
        %1069 = vmatpush1.msra.mxu0 0.0
        %1070 = vmatprep.subr.mxu0 0.0
        %1071 = vmatpush1.msra.mxu0 0.0
        %1072 = vmatprep.subr.mxu0 0.0
        %1073 = vmatpush1.msra.mxu0 0.0
        %1074 = vmatprep.subr.mxu0 0.0
        %1075 = vmatpush1.msra.mxu0 0.0
        %1076 = vmatprep.subr.mxu0 0.0
        %1077 = vmatpush1.msra.mxu0 0.0
        %1078 = vmatprep.subr.mxu0 0.0
        %1079 = vmatpush1.msra.mxu0 0.0
        %1080 = vmatprep.subr.mxu0 0.0
        %1081 = vmatpush1.msra.mxu0 0.0
        %1082 = vmatprep.subr.mxu0 0.0
        %1083 = vmatpush1.msra.mxu0 0.0
        %1084 = vmatprep.subr.mxu0 0.0
        %1085 = vmatpush1.msra.mxu0 0.0
        %1086 = vmatprep.subr.mxu0 0.0
        %1087 = vmatpush1.msra.mxu0 0.0
        %1088 = vmatprep.subr.mxu0 0.0
        %1089 = vmatpush1.msra.mxu0 0.0
        %1090 = vmatprep.subr.mxu0 0.0
        %1091 = vmatpush1.msra.mxu0 0.0
        %1092 = vmatprep.subr.mxu0 0.0
        %1093 = vmatpush1.msra.mxu0 0.0
        %1094 = vmatprep.subr.mxu0 0.0
        %1095 = vmatpush1.msra.mxu0 0.0
        %1096 = vmatprep.subr.mxu0 0.0
        %1097 = vmatpush1.msra.mxu0 %v1061
        %1098 = vmatprep.subr.mxu0 0.0
        %1099 = vmatpush2.msra.mxu0 0.0
        %1100 = vmatprep.subr.mxu0 0.0
        %1101 = vmatpush2.msra.mxu0 0.0
        %1102 = vmatprep.subr.mxu0 0.0
        %1103 = vmatpush2.msra.mxu0 0.0
        %1104 = vmatprep.subr.mxu0 0.0
        %1105 = vmatpush2.msra.mxu0 0.0
        %1106 = vmatprep.subr.mxu0 0.0
        %1107 = vmatpush2.msra.mxu0 0.0
        %1108 = vmatprep.subr.mxu0 0.0
        %1109 = vmatpush2.msra.mxu0 0.0
        %1110 = vmatprep.subr.mxu0 0.0
        %1111 = vmatpush2.msra.mxu0 0.0
        %1112 = vmatprep.subr.mxu0 0.0
        %1113 = vmatpush2.msra.mxu0 0.0
        %1114 = vmatprep.subr.mxu0 0.0
        %1115 = vmatpush2.msra.mxu0 0.0
        %1116 = vmatprep.subr.mxu0 0.0
        %1117 = vmatpush2.msra.mxu0 0.0
        %1118 = vmatprep.subr.mxu0 0.0
        %1119 = vmatpush2.msra.mxu0 0.0
        %1120 = vmatprep.subr.mxu0 0.0
        %1121 = vmatpush2.msra.mxu0 0.0
        %1122 = vmatprep.subr.mxu0 0.0
        %1123 = vmatpush2.msra.mxu0 0.0
        %1124 = vmatprep.subr.mxu0 0.0
        %1125 = vmatpush2.msra.mxu0 0.0
        %1126 = vmatprep.subr.mxu0 0.0
        %1127 = vmatpush2.msra.mxu0 0.0
        %1128 = vmatprep.subr.mxu0 0.0
        %1129 = vmatpush2.msra.mxu0 0.0
        %1130 = vmatprep.mubr.f32.mxu0 0.0
        %1131 = vmatmul.mubr.f32.gmra.mxu0 %v1064
        %v1132 = vpop.f32.mrf.mxu0
        %v1133 = vadd.f32 0.0, %v1132
        %v1134 = vpop.f32.mrf.mxu0
        %1135 = vdwg.mxu0
        %1136 = vrot.lane.b32.xlu0 %v624, 64
        %v1137 = vpop.permute.xlu0 %1136
        %v1140 = vsel %vm629, %v982, 0
        %1142 = vmatprep.subr.mxu0 0.0
        %1143 = vmatpush1.msra.mxu0 0.0
        %1144 = vmatprep.subr.mxu0 0.0
        %1145 = vmatpush1.msra.mxu0 0.0
        %1146 = vmatprep.subr.mxu0 0.0
        %1147 = vmatpush1.msra.mxu0 0.0
        %1148 = vmatprep.subr.mxu0 0.0
        %1149 = vmatpush1.msra.mxu0 0.0
        %1150 = vmatprep.subr.mxu0 0.0
        %1151 = vmatpush1.msra.mxu0 0.0
        %1152 = vmatprep.subr.mxu0 0.0
        %1153 = vmatpush1.msra.mxu0 0.0
        %1154 = vmatprep.subr.mxu0 0.0
        %1155 = vmatpush1.msra.mxu0 0.0
        %1156 = vmatprep.subr.mxu0 0.0
        %1157 = vmatpush1.msra.mxu0 0.0
        %1158 = vmatprep.subr.mxu0 0.0
        %1159 = vmatpush1.msra.mxu0 0.0
        %1160 = vmatprep.subr.mxu0 0.0
        %1161 = vmatpush1.msra.mxu0 0.0
        %1162 = vmatprep.subr.mxu0 0.0
        %1163 = vmatpush1.msra.mxu0 0.0
        %1164 = vmatprep.subr.mxu0 0.0
        %1165 = vmatpush1.msra.mxu0 0.0
        %1166 = vmatprep.subr.mxu0 0.0
        %1167 = vmatpush1.msra.mxu0 0.0
        %1168 = vmatprep.subr.mxu0 0.0
        %1169 = vmatpush1.msra.mxu0 0.0
        %1170 = vmatprep.subr.mxu0 0.0
        %1171 = vmatpush1.msra.mxu0 0.0
        %1172 = vmatprep.subr.mxu0 0.0
        %1173 = vmatpush1.msra.mxu0 %v1137
        %1174 = vmatprep.subr.mxu0 0.0
        %1175 = vmatpush2.msra.mxu0 0.0
        %1176 = vmatprep.subr.mxu0 0.0
        %1177 = vmatpush2.msra.mxu0 0.0
        %1178 = vmatprep.subr.mxu0 0.0
        %1179 = vmatpush2.msra.mxu0 0.0
        %1180 = vmatprep.subr.mxu0 0.0
        %1181 = vmatpush2.msra.mxu0 0.0
        %1182 = vmatprep.subr.mxu0 0.0
        %1183 = vmatpush2.msra.mxu0 0.0
        %1184 = vmatprep.subr.mxu0 0.0
        %1185 = vmatpush2.msra.mxu0 0.0
        %1186 = vmatprep.subr.mxu0 0.0
        %1187 = vmatpush2.msra.mxu0 0.0
        %1188 = vmatprep.subr.mxu0 0.0
        %1189 = vmatpush2.msra.mxu0 0.0
        %1190 = vmatprep.subr.mxu0 0.0
        %1191 = vmatpush2.msra.mxu0 0.0
        %1192 = vmatprep.subr.mxu0 0.0
        %1193 = vmatpush2.msra.mxu0 0.0
        %1194 = vmatprep.subr.mxu0 0.0
        %1195 = vmatpush2.msra.mxu0 0.0
        %1196 = vmatprep.subr.mxu0 0.0
        %1197 = vmatpush2.msra.mxu0 0.0
        %1198 = vmatprep.subr.mxu0 0.0
        %1199 = vmatpush2.msra.mxu0 0.0
        %1200 = vmatprep.subr.mxu0 0.0
        %1201 = vmatpush2.msra.mxu0 0.0
        %1202 = vmatprep.subr.mxu0 0.0
        %1203 = vmatpush2.msra.mxu0 0.0
        %1204 = vmatprep.subr.mxu0 0.0
        %1205 = vmatpush2.msra.mxu0 0.0
        %1206 = vmatprep.mubr.f32.mxu0 0.0
        %1207 = vmatmul.mubr.f32.gmra.mxu0 %v1140
        %v1208 = vpop.f32.mrf.mxu0
        %v1209 = vadd.f32 0.0, %v1208
        %v1210 = vpop.f32.mrf.mxu0
        %1211 = vdwg.mxu0
        %1212 = vrot.lane.b32.xlu0 %v626, 64
        %v1213 = vpop.permute.xlu0 %1212
        %v1216 = vsel %vm629, %v983, 0
        %1218 = vmatprep.subr.mxu0 0.0
        %1219 = vmatpush1.msra.mxu0 0.0
        %1220 = vmatprep.subr.mxu0 0.0
        %1221 = vmatpush1.msra.mxu0 0.0
        %1222 = vmatprep.subr.mxu0 0.0
        %1223 = vmatpush1.msra.mxu0 0.0
        %1224 = vmatprep.subr.mxu0 0.0
        %1225 = vmatpush1.msra.mxu0 0.0
        %1226 = vmatprep.subr.mxu0 0.0
        %1227 = vmatpush1.msra.mxu0 0.0
        %1228 = vmatprep.subr.mxu0 0.0
        %1229 = vmatpush1.msra.mxu0 0.0
        %1230 = vmatprep.subr.mxu0 0.0
        %1231 = vmatpush1.msra.mxu0 0.0
        %1232 = vmatprep.subr.mxu0 0.0
        %1233 = vmatpush1.msra.mxu0 0.0
        %1234 = vmatprep.subr.mxu0 0.0
        %1235 = vmatpush1.msra.mxu0 0.0
        %1236 = vmatprep.subr.mxu0 0.0
        %1237 = vmatpush1.msra.mxu0 0.0
        %1238 = vmatprep.subr.mxu0 0.0
        %1239 = vmatpush1.msra.mxu0 0.0
        %1240 = vmatprep.subr.mxu0 0.0
        %1241 = vmatpush1.msra.mxu0 0.0
        %1242 = vmatprep.subr.mxu0 0.0
        %1243 = vmatpush1.msra.mxu0 0.0
        %1244 = vmatprep.subr.mxu0 0.0
        %1245 = vmatpush1.msra.mxu0 0.0
        %1246 = vmatprep.subr.mxu0 0.0
        %1247 = vmatpush1.msra.mxu0 0.0
        %1248 = vmatprep.subr.mxu0 0.0
        %1249 = vmatpush1.msra.mxu0 %v1213
        %1250 = vmatprep.subr.mxu0 0.0
        %1251 = vmatpush2.msra.mxu0 0.0
        %1252 = vmatprep.subr.mxu0 0.0
        %1253 = vmatpush2.msra.mxu0 0.0
        %1254 = vmatprep.subr.mxu0 0.0
        %1255 = vmatpush2.msra.mxu0 0.0
        %1256 = vmatprep.subr.mxu0 0.0
        %1257 = vmatpush2.msra.mxu0 0.0
        %1258 = vmatprep.subr.mxu0 0.0
        %1259 = vmatpush2.msra.mxu0 0.0
        %1260 = vmatprep.subr.mxu0 0.0
        %1261 = vmatpush2.msra.mxu0 0.0
        %1262 = vmatprep.subr.mxu0 0.0
        %1263 = vmatpush2.msra.mxu0 0.0
        %1264 = vmatprep.subr.mxu0 0.0
        %1265 = vmatpush2.msra.mxu0 0.0
        %1266 = vmatprep.subr.mxu0 0.0
        %1267 = vmatpush2.msra.mxu0 0.0
        %1268 = vmatprep.subr.mxu0 0.0
        %1269 = vmatpush2.msra.mxu0 0.0
        %1270 = vmatprep.subr.mxu0 0.0
        %1271 = vmatpush2.msra.mxu0 0.0
        %1272 = vmatprep.subr.mxu0 0.0
        %1273 = vmatpush2.msra.mxu0 0.0
        %1274 = vmatprep.subr.mxu0 0.0
        %1275 = vmatpush2.msra.mxu0 0.0
        %1276 = vmatprep.subr.mxu0 0.0
        %1277 = vmatpush2.msra.mxu0 0.0
        %1278 = vmatprep.subr.mxu0 0.0
        %1279 = vmatpush2.msra.mxu0 0.0
        %1280 = vmatprep.subr.mxu0 0.0
        %1281 = vmatpush2.msra.mxu0 0.0
        %1282 = vmatprep.mubr.f32.mxu0 0.0
        %1283 = vmatmul.mubr.f32.gmra.mxu0 %v1216
        %v1284 = vpop.f32.mrf.mxu0
        %v1285 = vadd.f32 0.0, %v1284
        %v1286 = vpop.f32.mrf.mxu0
        %1287 = vdwg.mxu0
        %1289 = vrot.lane.b32.xlu0 %v1133, 8
        %v1290 = vpop.permute.xlu0 %1289
        %1293 = vrot.lane.b32.xlu0 %v1209, 16
        %v1294 = vpop.permute.xlu0 %1293
        %1297 = vrot.lane.b32.xlu0 %v1285, 24
        %v1298 = vpop.permute.xlu0 %1297
        %v1300 = vsel %vm629, %v1057, %v1290
        %vm1301 = vcmask 130048
        %v1302 = vsel %vm1301, %v1300, %v1294
        %vm1303 = vcmask 195584
        %v1304 = vsel %vm1303, %v1302, %v1298
        %v1305 = vpack.c.bf16 %v1304, %v1304
        %v1306 = vld [vmem:[%s4] sm:$0xf]
        %v1307 = vld [vmem:[%s4 + $0x4] sm:$0xf]
        %v1308 = vld [vmem:[%s4 + $0x8] sm:$0xf]
        %v1309 = vld [vmem:[%s4 + $0xc] sm:$0xf]
        %v1310 = vlaneseq
        %v1311 = vshrl.u32 %v1310, 7
        %v1312 = vsub.s32 1, %v1311
        %v1313 = vrot.slane %v555, %v1312
        %v1318 = vunpack.c.l.b16 %v1306
        %v1319 = vunpack.c.l.b16 %v1307
        %v1320 = vunpack.c.l.b16 %v1308
        %v1321 = vunpack.c.l.b16 %v1309
        %v1322 = vpack.c.b16 %v1319, %v1318
        %v1323 = vpack.c.b16 %v1321, %v1320
        %v1327 = vsel %vm519, %v1305, 0
        %1329 = vmatprep.subr.bf16.mxu0 0
        %1330 = vmatpush1.bf16.msra.mxu0 0
        %1331 = vmatprep.subr.bf16.mxu0 0
        %1332 = vmatpush1.bf16.msra.mxu0 0
        %1333 = vmatprep.subr.bf16.mxu0 0
        %1334 = vmatpush1.bf16.msra.mxu0 0
        %1335 = vmatprep.subr.bf16.mxu0 0
        %1336 = vmatpush1.bf16.msra.mxu0 0
        %1337 = vmatprep.subr.bf16.mxu0 0
        %1338 = vmatpush1.bf16.msra.mxu0 0
        %1339 = vmatprep.subr.bf16.mxu0 0
        %1340 = vmatpush1.bf16.msra.mxu0 0
        %1341 = vmatprep.subr.bf16.mxu0 0
        %1342 = vmatpush1.bf16.msra.mxu0 %v1323
        %1343 = vmatprep.subr.bf16.mxu0 0
        %1344 = vmatpush1.bf16.msra.mxu0 %v1322
        %1345 = vmatprep.subr.bf16.mxu0 0
        %1346 = vmatpush2.bf16.msra.mxu0 0
        %1347 = vmatprep.subr.bf16.mxu0 0
        %1348 = vmatpush2.bf16.msra.mxu0 0
        %1349 = vmatprep.subr.bf16.mxu0 0
        %1350 = vmatpush2.bf16.msra.mxu0 0
        %1351 = vmatprep.subr.bf16.mxu0 0
        %1352 = vmatpush2.bf16.msra.mxu0 0
        %1353 = vmatprep.subr.bf16.mxu0 0
        %1354 = vmatpush2.bf16.msra.mxu0 0
        %1355 = vmatprep.subr.bf16.mxu0 0
        %1356 = vmatpush2.bf16.msra.mxu0 0
        %1357 = vmatprep.subr.bf16.mxu0 0
        %1358 = vmatpush2.bf16.msra.mxu0 0
        %1359 = vmatprep.subr.bf16.mxu0 0
        %1360 = vmatpush2.bf16.msra.mxu0 0
        %1361 = vmatprep.mubr.bf16.mxu0 0
        %1362 = vmatmul.mubr.bf16.gmra.mxu0 %v1327
        %v1363 = vpop.f32.mrf.mxu0
        %v1364 = vadd.f32 %v1313, %v1363
        %v1365 = vpop.f32.mrf.mxu0
        %v1366 = vpop.f32.mrf.mxu0
        %v1367 = vpop.f32.mrf.mxu0
        %1368 = vdwg.mxu0
        %v1369 = vadd.f32 %v545, %v1364
        %v1370 = vsel %vm519, %v1369, 0.0
        %1371 = vadd.xlane.f32.xlu0 %v1370
        %v1372 = vpop.xlane.xlu0 %1371
        %v1373 = vmul.f32 %v1372, %v523
        %v1374 = vmul.f32 %v1369, %v1369
        %v1375 = vsel %vm519, %v1374, 0.0
        %1376 = vadd.xlane.f32.xlu0 %v1375
        %v1377 = vpop.xlane.xlu0 %1376
        %v1378 = vmul.f32 %v1377, %v523
        %v1379 = vmul.f32 %v1373, %v1373
        %v1380 = vsub.f32 %v1378, %v1379
        %v1381 = vsub.f32 %v1369, %v1373
        %v1382 = vadd.f32 %v1380, 1e-12
        %v1383 = vrsqrt.pop %v1382
        %v1384 = vmul.f32 %v1381, %v1383
        %v1385 = vlaneseq
        %v1386 = vshrl.u32 %v1385, 7
        %v1387 = vsub.s32 4, %v1386
        %v1388 = vrot.slane %v555, %v1387
        %v1389 = vmul.f32 %v1384, %v1388
        %v1390 = vlaneseq
        %v1391 = vshrl.u32 %v1390, 7
        %v1392 = vsub.s32 5, %v1391
        %v1393 = vrot.slane %v555, %v1392
        %v1394 = vadd.f32 %v1389, %v1393
        %v1395 = vpack.c.bf16 %v1394, %v1394
        %v1396 = vld [vmem:[%s5] sm:$0xf]
        %v1397 = vld [vmem:[%s5 + $0x4] sm:$0xf]
        %v1398 = vld [vmem:[%s5 + $0x8] sm:$0xf]
        %v1399 = vld [vmem:[%s5 + $0xc] sm:$0xf]
        %v1400 = vlaneseq
        %v1401 = vshrl.u32 %v1400, 7
        %v1402 = vsub.s32 2, %v1401
        %v1403 = vrot.slane %v555, %v1402
        %v1408 = vunpack.c.l.b16 %v1396
        %v1409 = vunpack.c.l.b16 %v1397
        %v1410 = vunpack.c.l.b16 %v1398
        %v1411 = vunpack.c.l.b16 %v1399
        %v1412 = vpack.c.b16 %v1409, %v1408
        %v1413 = vpack.c.b16 %v1411, %v1410
        %v1417 = vsel %vm519, %v1395, 0
        %1419 = vmatprep.subr.bf16.mxu0 0
        %1420 = vmatpush1.bf16.msra.mxu0 0
        %1421 = vmatprep.subr.bf16.mxu0 0
        %1422 = vmatpush1.bf16.msra.mxu0 0
        %1423 = vmatprep.subr.bf16.mxu0 0
        %1424 = vmatpush1.bf16.msra.mxu0 0
        %1425 = vmatprep.subr.bf16.mxu0 0
        %1426 = vmatpush1.bf16.msra.mxu0 0
        %1427 = vmatprep.subr.bf16.mxu0 0
        %1428 = vmatpush1.bf16.msra.mxu0 0
        %1429 = vmatprep.subr.bf16.mxu0 0
        %1430 = vmatpush1.bf16.msra.mxu0 0
        %1431 = vmatprep.subr.bf16.mxu0 0
        %1432 = vmatpush1.bf16.msra.mxu0 %v1413
        %1433 = vmatprep.subr.bf16.mxu0 0
        %1434 = vmatpush1.bf16.msra.mxu0 %v1412
        %1435 = vmatprep.subr.bf16.mxu0 0
        %1436 = vmatpush2.bf16.msra.mxu0 0
        %1437 = vmatprep.subr.bf16.mxu0 0
        %1438 = vmatpush2.bf16.msra.mxu0 0
        %1439 = vmatprep.subr.bf16.mxu0 0
        %1440 = vmatpush2.bf16.msra.mxu0 0
        %1441 = vmatprep.subr.bf16.mxu0 0
        %1442 = vmatpush2.bf16.msra.mxu0 0
        %1443 = vmatprep.subr.bf16.mxu0 0
        %1444 = vmatpush2.bf16.msra.mxu0 0
        %1445 = vmatprep.subr.bf16.mxu0 0
        %1446 = vmatpush2.bf16.msra.mxu0 0
        %1447 = vmatprep.subr.bf16.mxu0 0
        %1448 = vmatpush2.bf16.msra.mxu0 0
        %1449 = vmatprep.subr.bf16.mxu0 0
        %1450 = vmatpush2.bf16.msra.mxu0 0
        %1451 = vmatprep.mubr.bf16.mxu0 0
        %1452 = vmatmul.mubr.bf16.gmra.mxu0 %v1417
        %v1453 = vpop.f32.mrf.mxu0
        %v1454 = vadd.f32 %v1403, %v1453
        %v1455 = vpop.f32.mrf.mxu0
        %v1456 = vpop.f32.mrf.mxu0
        %v1457 = vpop.f32.mrf.mxu0
        %1458 = vdwg.mxu0
        %v1459 = vmul.f32 %v1454, 0.5
        %v1460 = vmul.f32 %v1454, 0.044715
        %v1461 = vmul.f32 %v1460, %v1454
        %v1462 = vmul.f32 %v1461, %v1454
        %v1463 = vadd.f32 %v1454, %v1462
        %v1464 = vmul.f32 %v1463, 0.7978846
        %v1465 = vtanh.pop %v1464
        %v1466 = vadd.f32 %v1465, 1.0
        %v1467 = vmul.f32 %v1459, %v1466
        %v1468 = vpack.c.bf16 %v1467, %v1467
        %v1469 = vld [vmem:[%s6] sm:$0xf]
        %v1470 = vld [vmem:[%s6 + $0x4] sm:$0xf]
        %v1471 = vld [vmem:[%s6 + $0x8] sm:$0xf]
        %v1472 = vld [vmem:[%s6 + $0xc] sm:$0xf]
        %v1473 = vld [vmem:[%s6 + $0x10] sm:$0xf]
        %v1474 = vld [vmem:[%s6 + $0x14] sm:$0xf]
        %v1475 = vld [vmem:[%s6 + $0x18] sm:$0xf]
        %v1476 = vld [vmem:[%s6 + $0x1c] sm:$0xf]
        %v1477 = vlaneseq
        %v1478 = vshrl.u32 %v1477, 7
        %v1479 = vsub.s32 3, %v1478
        %v1480 = vrot.slane %v555, %v1479
        %v1489 = vunpack.c.l.b16 %v1469
        %v1490 = vunpack.c.l.b16 %v1470
        %v1491 = vunpack.c.l.b16 %v1471
        %v1492 = vunpack.c.l.b16 %v1472
        %v1493 = vunpack.c.l.b16 %v1473
        %v1494 = vunpack.c.l.b16 %v1474
        %v1495 = vunpack.c.l.b16 %v1475
        %v1496 = vunpack.c.l.b16 %v1476
        %v1497 = vpack.c.b16 %v1490, %v1489
        %v1498 = vpack.c.b16 %v1492, %v1491
        %v1499 = vpack.c.b16 %v1494, %v1493
        %v1500 = vpack.c.b16 %v1496, %v1495
        %v1506 = vsel %vm445, %v1468, 0
        %1508 = vmatprep.subr.bf16.mxu0 0
        %1509 = vmatpush1.bf16.msra.mxu0 0
        %1510 = vmatprep.subr.bf16.mxu0 0
        %1511 = vmatpush1.bf16.msra.mxu0 0
        %1512 = vmatprep.subr.bf16.mxu0 0
        %1513 = vmatpush1.bf16.msra.mxu0 0
        %1514 = vmatprep.subr.bf16.mxu0 0
        %1515 = vmatpush1.bf16.msra.mxu0 0
        %1516 = vmatprep.subr.bf16.mxu0 0
        %1517 = vmatpush1.bf16.msra.mxu0 %v1500
        %1518 = vmatprep.subr.bf16.mxu0 0
        %1519 = vmatpush1.bf16.msra.mxu0 %v1499
        %1520 = vmatprep.subr.bf16.mxu0 0
        %1521 = vmatpush1.bf16.msra.mxu0 %v1498
        %1522 = vmatprep.subr.bf16.mxu0 0
        %1523 = vmatpush1.bf16.msra.mxu0 %v1497
        %1524 = vmatprep.subr.bf16.mxu0 0
        %1525 = vmatpush2.bf16.msra.mxu0 0
        %1526 = vmatprep.subr.bf16.mxu0 0
        %1527 = vmatpush2.bf16.msra.mxu0 0
        %1528 = vmatprep.subr.bf16.mxu0 0
        %1529 = vmatpush2.bf16.msra.mxu0 0
        %1530 = vmatprep.subr.bf16.mxu0 0
        %1531 = vmatpush2.bf16.msra.mxu0 0
        %1532 = vmatprep.subr.bf16.mxu0 0
        %1533 = vmatpush2.bf16.msra.mxu0 0
        %1534 = vmatprep.subr.bf16.mxu0 0
        %1535 = vmatpush2.bf16.msra.mxu0 0
        %1536 = vmatprep.subr.bf16.mxu0 0
        %1537 = vmatpush2.bf16.msra.mxu0 0
        %1538 = vmatprep.subr.bf16.mxu0 0
        %1539 = vmatpush2.bf16.msra.mxu0 0
        %1540 = vmatprep.mubr.bf16.mxu0 0
        %1541 = vmatmul.mubr.bf16.gmra.mxu0 %v1506
        %v1542 = vpop.f32.mrf.mxu0
        %v1543 = vadd.f32 %v1480, %v1542
        %v1544 = vpop.f32.mrf.mxu0
        %v1545 = vpop.f32.mrf.mxu0
        %v1546 = vpop.f32.mrf.mxu0
        %1547 = vdwg.mxu0
        %v1548 = vadd.f32 %v1394, %v1543
        %v1549 = vsel %vm519, %v1548, 0.0
        %1550 = vadd.xlane.f32.xlu0 %v1549
        %v1551 = vpop.xlane.xlu0 %1550
        %v1552 = vmul.f32 %v1551, %v523
        %v1553 = vmul.f32 %v1548, %v1548
        %v1554 = vsel %vm519, %v1553, 0.0
        %1555 = vadd.xlane.f32.xlu0 %v1554
        %v1556 = vpop.xlane.xlu0 %1555
        %v1557 = vmul.f32 %v1556, %v523
        %v1558 = vmul.f32 %v1552, %v1552
        %v1559 = vsub.f32 %v1557, %v1558
        %v1560 = vsub.f32 %v1548, %v1552
        %v1561 = vadd.f32 %v1559, 1e-12
        %v1562 = vrsqrt.pop %v1561
        %v1563 = vmul.f32 %v1560, %v1562
        %v1564 = vlaneseq
        %v1565 = vshrl.u32 %v1564, 7
        %v1566 = vsub.s32 6, %v1565
        %v1567 = vrot.slane %v555, %v1566
        %v1568 = vmul.f32 %v1563, %v1567
        %v1569 = vlaneseq
        %v1570 = vshrl.u32 %v1569, 7
        %v1571 = vsub.s32 7, %v1570
        %v1572 = vrot.slane %v555, %v1571
        %v1573 = vadd.f32 %v1568, %v1572
        %s1574 = scalar_lea.vmem %s7, 8
        %v1575 = vld [vmem:[%s1574] sm:$0xff]
        %v1576 = vpack.c.bf16 %v1573, %v1573
        %s1577 = scalar_lea.vmem %s3, 16
        %v1578 = vld [vmem:[%s1577] sm:$0xf]
        %v1579 = vld [vmem:[%s1577 + $0x4] sm:$0xf]
        %v1580 = vld [vmem:[%s1577 + $0x8] sm:$0xf]
        %v1581 = vld [vmem:[%s1577 + $0xc] sm:$0xf]
        %v1582 = vlaneseq
        %v1583 = vshrl.u32 %v1582, 7
        %v1584 = vsub.s32 0, %v1583
        %v1585 = vrot.slane %v1575, %v1584
        %v1590 = vunpack.c.l.b16 %v1578
        %v1591 = vunpack.c.l.b16 %v1579
        %v1592 = vunpack.c.l.b16 %v1580
        %v1593 = vunpack.c.l.b16 %v1581
        %v1594 = vpack.c.b16 %v1591, %v1590
        %v1595 = vpack.c.b16 %v1593, %v1592
        %v1599 = vsel %vm519, %v1576, 0
        %1601 = vmatprep.subr.bf16.mxu0 0
        %1602 = vmatpush1.bf16.msra.mxu0 0
        %1603 = vmatprep.subr.bf16.mxu0 0
        %1604 = vmatpush1.bf16.msra.mxu0 0
        %1605 = vmatprep.subr.bf16.mxu0 0
        %1606 = vmatpush1.bf16.msra.mxu0 0
        %1607 = vmatprep.subr.bf16.mxu0 0
        %1608 = vmatpush1.bf16.msra.mxu0 0
        %1609 = vmatprep.subr.bf16.mxu0 0
        %1610 = vmatpush1.bf16.msra.mxu0 0
        %1611 = vmatprep.subr.bf16.mxu0 0
        %1612 = vmatpush1.bf16.msra.mxu0 0
        %1613 = vmatprep.subr.bf16.mxu0 0
        %1614 = vmatpush1.bf16.msra.mxu0 %v1595
        %1615 = vmatprep.subr.bf16.mxu0 0
        %1616 = vmatpush1.bf16.msra.mxu0 %v1594
        %1617 = vmatprep.subr.bf16.mxu0 0
        %1618 = vmatpush2.bf16.msra.mxu0 0
        %1619 = vmatprep.subr.bf16.mxu0 0
        %1620 = vmatpush2.bf16.msra.mxu0 0
        %1621 = vmatprep.subr.bf16.mxu0 0
        %1622 = vmatpush2.bf16.msra.mxu0 0
        %1623 = vmatprep.subr.bf16.mxu0 0
        %1624 = vmatpush2.bf16.msra.mxu0 0
        %1625 = vmatprep.subr.bf16.mxu0 0
        %1626 = vmatpush2.bf16.msra.mxu0 0
        %1627 = vmatprep.subr.bf16.mxu0 0
        %1628 = vmatpush2.bf16.msra.mxu0 0
        %1629 = vmatprep.subr.bf16.mxu0 0
        %1630 = vmatpush2.bf16.msra.mxu0 0
        %1631 = vmatprep.subr.bf16.mxu0 0
        %1632 = vmatpush2.bf16.msra.mxu0 0
        %1633 = vmatprep.mubr.bf16.mxu0 0
        %1634 = vmatmul.mubr.bf16.gmra.mxu0 %v1599
        %v1635 = vpop.f32.mrf.mxu0
        %v1636 = vadd.f32 %v1585, %v1635
        %v1637 = vpop.f32.mrf.mxu0
        %v1638 = vpop.f32.mrf.mxu0
        %v1639 = vpop.f32.mrf.mxu0
        %1640 = vdwg.mxu0
        %1642 = vrot.lane.b32.xlu0 %v1636, 120
        %v1643 = vpop.permute.xlu0 %1642
        %1644 = vrot.lane.b32.xlu0 %v1636, 112
        %v1645 = vpop.permute.xlu0 %1644
        %1646 = vrot.lane.b32.xlu0 %v1636, 104
        %v1647 = vpop.permute.xlu0 %1646
        %1648 = vrot.lane.b32.xlu0 %v1636, 96
        %v1649 = vpop.permute.xlu0 %1648
        %v1650 = vsel %vm629, %v1636, 0
        %v1652 = vsel %vm629, %v1649, 0
        %1654 = vmatprep.subr.mxu0 0.0
        %1655 = vmatpush1.xpose.msra.mxu0 0.0
        %1656 = vmatprep.subr.mxu0 0.0
        %1657 = vmatpush1.xpose.msra.mxu0 0.0
        %1658 = vmatprep.subr.mxu0 0.0
        %1659 = vmatpush1.xpose.msra.mxu0 0.0
        %1660 = vmatprep.subr.mxu0 0.0
        %1661 = vmatpush1.xpose.msra.mxu0 0.0
        %1662 = vmatprep.subr.mxu0 0.0
        %1663 = vmatpush1.xpose.msra.mxu0 0.0
        %1664 = vmatprep.subr.mxu0 0.0
        %1665 = vmatpush1.xpose.msra.mxu0 0.0
        %1666 = vmatprep.subr.mxu0 0.0
        %1667 = vmatpush1.xpose.msra.mxu0 0.0
        %1668 = vmatprep.subr.mxu0 0.0
        %1669 = vmatpush1.xpose.msra.mxu0 0.0
        %1670 = vmatprep.subr.mxu0 0.0
        %1671 = vmatpush1.xpose.msra.mxu0 0.0
        %1672 = vmatprep.subr.mxu0 0.0
        %1673 = vmatpush1.xpose.msra.mxu0 0.0
        %1674 = vmatprep.subr.mxu0 0.0
        %1675 = vmatpush1.xpose.msra.mxu0 0.0
        %1676 = vmatprep.subr.mxu0 0.0
        %1677 = vmatpush1.xpose.msra.mxu0 0.0
        %1678 = vmatprep.subr.mxu0 0.0
        %1679 = vmatpush1.xpose.msra.mxu0 0.0
        %1680 = vmatprep.subr.mxu0 0.0
        %1681 = vmatpush1.xpose.msra.mxu0 0.0
        %1682 = vmatprep.subr.mxu0 0.0
        %1683 = vmatpush1.xpose.msra.mxu0 0.0
        %1684 = vmatprep.subr.mxu0 0.0
        %1685 = vmatpush1.xpose.msra.mxu0 %v1652
        %1686 = vmatprep.subr.mxu0 0.0
        %1687 = vmatpush2.xpose.msra.mxu0 0.0
        %1688 = vmatprep.subr.mxu0 0.0
        %1689 = vmatpush2.xpose.msra.mxu0 0.0
        %1690 = vmatprep.subr.mxu0 0.0
        %1691 = vmatpush2.xpose.msra.mxu0 0.0
        %1692 = vmatprep.subr.mxu0 0.0
        %1693 = vmatpush2.xpose.msra.mxu0 0.0
        %1694 = vmatprep.subr.mxu0 0.0
        %1695 = vmatpush2.xpose.msra.mxu0 0.0
        %1696 = vmatprep.subr.mxu0 0.0
        %1697 = vmatpush2.xpose.msra.mxu0 0.0
        %1698 = vmatprep.subr.mxu0 0.0
        %1699 = vmatpush2.xpose.msra.mxu0 0.0
        %1700 = vmatprep.subr.mxu0 0.0
        %1701 = vmatpush2.xpose.msra.mxu0 0.0
        %1702 = vmatprep.subr.mxu0 0.0
        %1703 = vmatpush2.xpose.msra.mxu0 0.0
        %1704 = vmatprep.subr.mxu0 0.0
        %1705 = vmatpush2.xpose.msra.mxu0 0.0
        %1706 = vmatprep.subr.mxu0 0.0
        %1707 = vmatpush2.xpose.msra.mxu0 0.0
        %1708 = vmatprep.subr.mxu0 0.0
        %1709 = vmatpush2.xpose.msra.mxu0 0.0
        %1710 = vmatprep.subr.mxu0 0.0
        %1711 = vmatpush2.xpose.msra.mxu0 0.0
        %1712 = vmatprep.subr.mxu0 0.0
        %1713 = vmatpush2.xpose.msra.mxu0 0.0
        %1714 = vmatprep.subr.mxu0 0.0
        %1715 = vmatpush2.xpose.msra.mxu0 0.0
        %1716 = vmatprep.subr.mxu0 0.0
        %1717 = vmatpush2.xpose.msra.mxu0 0.0
        %1718 = vmatprep.mubr.f32.mxu0 0.0
        %1719 = vmatmul.mubr.f32.gmra.mxu0 %v1650
        %v1720 = vpop.f32.mrf.mxu0
        %v1721 = vadd.f32 0.0, %v1720
        %v1722 = vpop.f32.mrf.mxu0
        %1723 = vdwg.mxu0
        %1724 = vrot.lane.b32.xlu0 %v1643, 96
        %v1725 = vpop.permute.xlu0 %1724
        %v1726 = vsel %vm629, %v1643, 0
        %v1728 = vsel %vm629, %v1725, 0
        %1730 = vmatprep.subr.mxu0 0.0
        %1731 = vmatpush1.xpose.msra.mxu0 0.0
        %1732 = vmatprep.subr.mxu0 0.0
        %1733 = vmatpush1.xpose.msra.mxu0 0.0
        %1734 = vmatprep.subr.mxu0 0.0
        %1735 = vmatpush1.xpose.msra.mxu0 0.0
        %1736 = vmatprep.subr.mxu0 0.0
        %1737 = vmatpush1.xpose.msra.mxu0 0.0
        %1738 = vmatprep.subr.mxu0 0.0
        %1739 = vmatpush1.xpose.msra.mxu0 0.0
        %1740 = vmatprep.subr.mxu0 0.0
        %1741 = vmatpush1.xpose.msra.mxu0 0.0
        %1742 = vmatprep.subr.mxu0 0.0
        %1743 = vmatpush1.xpose.msra.mxu0 0.0
        %1744 = vmatprep.subr.mxu0 0.0
        %1745 = vmatpush1.xpose.msra.mxu0 0.0
        %1746 = vmatprep.subr.mxu0 0.0
        %1747 = vmatpush1.xpose.msra.mxu0 0.0
        %1748 = vmatprep.subr.mxu0 0.0
        %1749 = vmatpush1.xpose.msra.mxu0 0.0
        %1750 = vmatprep.subr.mxu0 0.0
        %1751 = vmatpush1.xpose.msra.mxu0 0.0
        %1752 = vmatprep.subr.mxu0 0.0
        %1753 = vmatpush1.xpose.msra.mxu0 0.0
        %1754 = vmatprep.subr.mxu0 0.0
        %1755 = vmatpush1.xpose.msra.mxu0 0.0
        %1756 = vmatprep.subr.mxu0 0.0
        %1757 = vmatpush1.xpose.msra.mxu0 0.0
        %1758 = vmatprep.subr.mxu0 0.0
        %1759 = vmatpush1.xpose.msra.mxu0 0.0
        %1760 = vmatprep.subr.mxu0 0.0
        %1761 = vmatpush1.xpose.msra.mxu0 %v1728
        %1762 = vmatprep.subr.mxu0 0.0
        %1763 = vmatpush2.xpose.msra.mxu0 0.0
        %1764 = vmatprep.subr.mxu0 0.0
        %1765 = vmatpush2.xpose.msra.mxu0 0.0
        %1766 = vmatprep.subr.mxu0 0.0
        %1767 = vmatpush2.xpose.msra.mxu0 0.0
        %1768 = vmatprep.subr.mxu0 0.0
        %1769 = vmatpush2.xpose.msra.mxu0 0.0
        %1770 = vmatprep.subr.mxu0 0.0
        %1771 = vmatpush2.xpose.msra.mxu0 0.0
        %1772 = vmatprep.subr.mxu0 0.0
        %1773 = vmatpush2.xpose.msra.mxu0 0.0
        %1774 = vmatprep.subr.mxu0 0.0
        %1775 = vmatpush2.xpose.msra.mxu0 0.0
        %1776 = vmatprep.subr.mxu0 0.0
        %1777 = vmatpush2.xpose.msra.mxu0 0.0
        %1778 = vmatprep.subr.mxu0 0.0
        %1779 = vmatpush2.xpose.msra.mxu0 0.0
        %1780 = vmatprep.subr.mxu0 0.0
        %1781 = vmatpush2.xpose.msra.mxu0 0.0
        %1782 = vmatprep.subr.mxu0 0.0
        %1783 = vmatpush2.xpose.msra.mxu0 0.0
        %1784 = vmatprep.subr.mxu0 0.0
        %1785 = vmatpush2.xpose.msra.mxu0 0.0
        %1786 = vmatprep.subr.mxu0 0.0
        %1787 = vmatpush2.xpose.msra.mxu0 0.0
        %1788 = vmatprep.subr.mxu0 0.0
        %1789 = vmatpush2.xpose.msra.mxu0 0.0
        %1790 = vmatprep.subr.mxu0 0.0
        %1791 = vmatpush2.xpose.msra.mxu0 0.0
        %1792 = vmatprep.subr.mxu0 0.0
        %1793 = vmatpush2.xpose.msra.mxu0 0.0
        %1794 = vmatprep.mubr.f32.mxu0 0.0
        %1795 = vmatmul.mubr.f32.gmra.mxu0 %v1726
        %v1796 = vpop.f32.mrf.mxu0
        %v1797 = vadd.f32 0.0, %v1796
        %v1798 = vpop.f32.mrf.mxu0
        %1799 = vdwg.mxu0
        %1800 = vrot.lane.b32.xlu0 %v1645, 96
        %v1801 = vpop.permute.xlu0 %1800
        %v1802 = vsel %vm629, %v1645, 0
        %v1804 = vsel %vm629, %v1801, 0
        %1806 = vmatprep.subr.mxu0 0.0
        %1807 = vmatpush1.xpose.msra.mxu0 0.0
        %1808 = vmatprep.subr.mxu0 0.0
        %1809 = vmatpush1.xpose.msra.mxu0 0.0
        %1810 = vmatprep.subr.mxu0 0.0
        %1811 = vmatpush1.xpose.msra.mxu0 0.0
        %1812 = vmatprep.subr.mxu0 0.0
        %1813 = vmatpush1.xpose.msra.mxu0 0.0
        %1814 = vmatprep.subr.mxu0 0.0
        %1815 = vmatpush1.xpose.msra.mxu0 0.0
        %1816 = vmatprep.subr.mxu0 0.0
        %1817 = vmatpush1.xpose.msra.mxu0 0.0
        %1818 = vmatprep.subr.mxu0 0.0
        %1819 = vmatpush1.xpose.msra.mxu0 0.0
        %1820 = vmatprep.subr.mxu0 0.0
        %1821 = vmatpush1.xpose.msra.mxu0 0.0
        %1822 = vmatprep.subr.mxu0 0.0
        %1823 = vmatpush1.xpose.msra.mxu0 0.0
        %1824 = vmatprep.subr.mxu0 0.0
        %1825 = vmatpush1.xpose.msra.mxu0 0.0
        %1826 = vmatprep.subr.mxu0 0.0
        %1827 = vmatpush1.xpose.msra.mxu0 0.0
        %1828 = vmatprep.subr.mxu0 0.0
        %1829 = vmatpush1.xpose.msra.mxu0 0.0
        %1830 = vmatprep.subr.mxu0 0.0
        %1831 = vmatpush1.xpose.msra.mxu0 0.0
        %1832 = vmatprep.subr.mxu0 0.0
        %1833 = vmatpush1.xpose.msra.mxu0 0.0
        %1834 = vmatprep.subr.mxu0 0.0
        %1835 = vmatpush1.xpose.msra.mxu0 0.0
        %1836 = vmatprep.subr.mxu0 0.0
        %1837 = vmatpush1.xpose.msra.mxu0 %v1804
        %1838 = vmatprep.subr.mxu0 0.0
        %1839 = vmatpush2.xpose.msra.mxu0 0.0
        %1840 = vmatprep.subr.mxu0 0.0
        %1841 = vmatpush2.xpose.msra.mxu0 0.0
        %1842 = vmatprep.subr.mxu0 0.0
        %1843 = vmatpush2.xpose.msra.mxu0 0.0
        %1844 = vmatprep.subr.mxu0 0.0
        %1845 = vmatpush2.xpose.msra.mxu0 0.0
        %1846 = vmatprep.subr.mxu0 0.0
        %1847 = vmatpush2.xpose.msra.mxu0 0.0
        %1848 = vmatprep.subr.mxu0 0.0
        %1849 = vmatpush2.xpose.msra.mxu0 0.0
        %1850 = vmatprep.subr.mxu0 0.0
        %1851 = vmatpush2.xpose.msra.mxu0 0.0
        %1852 = vmatprep.subr.mxu0 0.0
        %1853 = vmatpush2.xpose.msra.mxu0 0.0
        %1854 = vmatprep.subr.mxu0 0.0
        %1855 = vmatpush2.xpose.msra.mxu0 0.0
        %1856 = vmatprep.subr.mxu0 0.0
        %1857 = vmatpush2.xpose.msra.mxu0 0.0
        %1858 = vmatprep.subr.mxu0 0.0
        %1859 = vmatpush2.xpose.msra.mxu0 0.0
        %1860 = vmatprep.subr.mxu0 0.0
        %1861 = vmatpush2.xpose.msra.mxu0 0.0
        %1862 = vmatprep.subr.mxu0 0.0
        %1863 = vmatpush2.xpose.msra.mxu0 0.0
        %1864 = vmatprep.subr.mxu0 0.0
        %1865 = vmatpush2.xpose.msra.mxu0 0.0
        %1866 = vmatprep.subr.mxu0 0.0
        %1867 = vmatpush2.xpose.msra.mxu0 0.0
        %1868 = vmatprep.subr.mxu0 0.0
        %1869 = vmatpush2.xpose.msra.mxu0 0.0
        %1870 = vmatprep.mubr.f32.mxu0 0.0
        %1871 = vmatmul.mubr.f32.gmra.mxu0 %v1802
        %v1872 = vpop.f32.mrf.mxu0
        %v1873 = vadd.f32 0.0, %v1872
        %v1874 = vpop.f32.mrf.mxu0
        %1875 = vdwg.mxu0
        %1876 = vrot.lane.b32.xlu0 %v1647, 96
        %v1877 = vpop.permute.xlu0 %1876
        %v1878 = vsel %vm629, %v1647, 0
        %v1880 = vsel %vm629, %v1877, 0
        %1882 = vmatprep.subr.mxu0 0.0
        %1883 = vmatpush1.xpose.msra.mxu0 0.0
        %1884 = vmatprep.subr.mxu0 0.0
        %1885 = vmatpush1.xpose.msra.mxu0 0.0
        %1886 = vmatprep.subr.mxu0 0.0
        %1887 = vmatpush1.xpose.msra.mxu0 0.0
        %1888 = vmatprep.subr.mxu0 0.0
        %1889 = vmatpush1.xpose.msra.mxu0 0.0
        %1890 = vmatprep.subr.mxu0 0.0
        %1891 = vmatpush1.xpose.msra.mxu0 0.0
        %1892 = vmatprep.subr.mxu0 0.0
        %1893 = vmatpush1.xpose.msra.mxu0 0.0
        %1894 = vmatprep.subr.mxu0 0.0
        %1895 = vmatpush1.xpose.msra.mxu0 0.0
        %1896 = vmatprep.subr.mxu0 0.0
        %1897 = vmatpush1.xpose.msra.mxu0 0.0
        %1898 = vmatprep.subr.mxu0 0.0
        %1899 = vmatpush1.xpose.msra.mxu0 0.0
        %1900 = vmatprep.subr.mxu0 0.0
        %1901 = vmatpush1.xpose.msra.mxu0 0.0
        %1902 = vmatprep.subr.mxu0 0.0
        %1903 = vmatpush1.xpose.msra.mxu0 0.0
        %1904 = vmatprep.subr.mxu0 0.0
        %1905 = vmatpush1.xpose.msra.mxu0 0.0
        %1906 = vmatprep.subr.mxu0 0.0
        %1907 = vmatpush1.xpose.msra.mxu0 0.0
        %1908 = vmatprep.subr.mxu0 0.0
        %1909 = vmatpush1.xpose.msra.mxu0 0.0
        %1910 = vmatprep.subr.mxu0 0.0
        %1911 = vmatpush1.xpose.msra.mxu0 0.0
        %1912 = vmatprep.subr.mxu0 0.0
        %1913 = vmatpush1.xpose.msra.mxu0 %v1880
        %1914 = vmatprep.subr.mxu0 0.0
        %1915 = vmatpush2.xpose.msra.mxu0 0.0
        %1916 = vmatprep.subr.mxu0 0.0
        %1917 = vmatpush2.xpose.msra.mxu0 0.0
        %1918 = vmatprep.subr.mxu0 0.0
        %1919 = vmatpush2.xpose.msra.mxu0 0.0
        %1920 = vmatprep.subr.mxu0 0.0
        %1921 = vmatpush2.xpose.msra.mxu0 0.0
        %1922 = vmatprep.subr.mxu0 0.0
        %1923 = vmatpush2.xpose.msra.mxu0 0.0
        %1924 = vmatprep.subr.mxu0 0.0
        %1925 = vmatpush2.xpose.msra.mxu0 0.0
        %1926 = vmatprep.subr.mxu0 0.0
        %1927 = vmatpush2.xpose.msra.mxu0 0.0
        %1928 = vmatprep.subr.mxu0 0.0
        %1929 = vmatpush2.xpose.msra.mxu0 0.0
        %1930 = vmatprep.subr.mxu0 0.0
        %1931 = vmatpush2.xpose.msra.mxu0 0.0
        %1932 = vmatprep.subr.mxu0 0.0
        %1933 = vmatpush2.xpose.msra.mxu0 0.0
        %1934 = vmatprep.subr.mxu0 0.0
        %1935 = vmatpush2.xpose.msra.mxu0 0.0
        %1936 = vmatprep.subr.mxu0 0.0
        %1937 = vmatpush2.xpose.msra.mxu0 0.0
        %1938 = vmatprep.subr.mxu0 0.0
        %1939 = vmatpush2.xpose.msra.mxu0 0.0
        %1940 = vmatprep.subr.mxu0 0.0
        %1941 = vmatpush2.xpose.msra.mxu0 0.0
        %1942 = vmatprep.subr.mxu0 0.0
        %1943 = vmatpush2.xpose.msra.mxu0 0.0
        %1944 = vmatprep.subr.mxu0 0.0
        %1945 = vmatpush2.xpose.msra.mxu0 0.0
        %1946 = vmatprep.mubr.f32.mxu0 0.0
        %1947 = vmatmul.mubr.f32.gmra.mxu0 %v1878
        %v1948 = vpop.f32.mrf.mxu0
        %v1949 = vadd.f32 0.0, %v1948
        %v1950 = vpop.f32.mrf.mxu0
        %1951 = vdwg.mxu0
        %v1952 = vmul.f32 %v1721, 0.35355338
        %v1953 = vmul.f32 %v1797, 0.35355338
        %v1954 = vmul.f32 %v1873, 0.35355338
        %v1955 = vmul.f32 %v1949, 0.35355338
        %v1956 = vadd.f32 %v1952, %v553
        %v1957 = vadd.f32 %v1953, %v553
        %v1958 = vadd.f32 %v1954, %v553
        %v1959 = vadd.f32 %v1955, %v553
        %v1960 = vsel %vm629, %v1956, -inf
        %1961 = vmax.xlane.f32.xlu0 %v1960
        %v1962 = vpop.xlane.xlu0 %1961
        %v1963 = vsel %vm629, %v1957, -inf
        %1964 = vmax.xlane.f32.xlu0 %v1963
        %v1965 = vpop.xlane.xlu0 %1964
        %v1966 = vsel %vm629, %v1958, -inf
        %1967 = vmax.xlane.f32.xlu0 %v1966
        %v1968 = vpop.xlane.xlu0 %1967
        %v1969 = vsel %vm629, %v1959, -inf
        %1970 = vmax.xlane.f32.xlu0 %v1969
        %v1971 = vpop.xlane.xlu0 %1970
        %v1972 = vsub.f32 %v1956, %v1962
        %v1973 = vsub.f32 %v1957, %v1965
        %v1974 = vsub.f32 %v1958, %v1968
        %v1975 = vsub.f32 %v1959, %v1971
        %v1976 = vmul.f32 %v1972, 1.442695
        %v1977 = vpow.pop %v1976
        %v1978 = vmul.f32 %v1973, 1.442695
        %v1979 = vpow.pop %v1978
        %v1980 = vmul.f32 %v1974, 1.442695
        %v1981 = vpow.pop %v1980
        %v1982 = vmul.f32 %v1975, 1.442695
        %v1983 = vpow.pop %v1982
        %v1984 = vsel %vm629, %v1977, 0.0
        %1985 = vadd.xlane.f32.xlu0 %v1984
        %v1986 = vpop.xlane.xlu0 %1985
        %v1987 = vsel %vm629, %v1979, 0.0
        %1988 = vadd.xlane.f32.xlu0 %v1987
        %v1989 = vpop.xlane.xlu0 %1988
        %v1990 = vsel %vm629, %v1981, 0.0
        %1991 = vadd.xlane.f32.xlu0 %v1990
        %v1992 = vpop.xlane.xlu0 %1991
        %v1993 = vsel %vm629, %v1983, 0.0
        %1994 = vadd.xlane.f32.xlu0 %v1993
        %v1995 = vpop.xlane.xlu0 %1994
        %v1996 = vrcp.pop %v1986
        %v1997 = vrcp.pop %v1989
        %v1998 = vrcp.pop %v1992
        %v1999 = vrcp.pop %v1995
        %v2000 = vmul.f32 %v1977, %v1996
        %v2001 = vmul.f32 %v1979, %v1997
        %v2002 = vmul.f32 %v1981, %v1998
        %v2003 = vmul.f32 %v1983, %v1999
        %2004 = vrot.lane.b32.xlu0 %v1636, 64
        %v2005 = vpop.permute.xlu0 %2004
        %v2008 = vsel %vm629, %v2000, 0
        %2010 = vmatprep.subr.mxu0 0.0
        %2011 = vmatpush1.msra.mxu0 0.0
        %2012 = vmatprep.subr.mxu0 0.0
        %2013 = vmatpush1.msra.mxu0 0.0
        %2014 = vmatprep.subr.mxu0 0.0
        %2015 = vmatpush1.msra.mxu0 0.0
        %2016 = vmatprep.subr.mxu0 0.0
        %2017 = vmatpush1.msra.mxu0 0.0
        %2018 = vmatprep.subr.mxu0 0.0
        %2019 = vmatpush1.msra.mxu0 0.0
        %2020 = vmatprep.subr.mxu0 0.0
        %2021 = vmatpush1.msra.mxu0 0.0
        %2022 = vmatprep.subr.mxu0 0.0
        %2023 = vmatpush1.msra.mxu0 0.0
        %2024 = vmatprep.subr.mxu0 0.0
        %2025 = vmatpush1.msra.mxu0 0.0
        %2026 = vmatprep.subr.mxu0 0.0
        %2027 = vmatpush1.msra.mxu0 0.0
        %2028 = vmatprep.subr.mxu0 0.0
        %2029 = vmatpush1.msra.mxu0 0.0
        %2030 = vmatprep.subr.mxu0 0.0
        %2031 = vmatpush1.msra.mxu0 0.0
        %2032 = vmatprep.subr.mxu0 0.0
        %2033 = vmatpush1.msra.mxu0 0.0
        %2034 = vmatprep.subr.mxu0 0.0
        %2035 = vmatpush1.msra.mxu0 0.0
        %2036 = vmatprep.subr.mxu0 0.0
        %2037 = vmatpush1.msra.mxu0 0.0
        %2038 = vmatprep.subr.mxu0 0.0
        %2039 = vmatpush1.msra.mxu0 0.0
        %2040 = vmatprep.subr.mxu0 0.0
        %2041 = vmatpush1.msra.mxu0 %v2005
        %2042 = vmatprep.subr.mxu0 0.0
        %2043 = vmatpush2.msra.mxu0 0.0
        %2044 = vmatprep.subr.mxu0 0.0
        %2045 = vmatpush2.msra.mxu0 0.0
        %2046 = vmatprep.subr.mxu0 0.0
        %2047 = vmatpush2.msra.mxu0 0.0
        %2048 = vmatprep.subr.mxu0 0.0
        %2049 = vmatpush2.msra.mxu0 0.0
        %2050 = vmatprep.subr.mxu0 0.0
        %2051 = vmatpush2.msra.mxu0 0.0
        %2052 = vmatprep.subr.mxu0 0.0
        %2053 = vmatpush2.msra.mxu0 0.0
        %2054 = vmatprep.subr.mxu0 0.0
        %2055 = vmatpush2.msra.mxu0 0.0
        %2056 = vmatprep.subr.mxu0 0.0
        %2057 = vmatpush2.msra.mxu0 0.0
        %2058 = vmatprep.subr.mxu0 0.0
        %2059 = vmatpush2.msra.mxu0 0.0
        %2060 = vmatprep.subr.mxu0 0.0
        %2061 = vmatpush2.msra.mxu0 0.0
        %2062 = vmatprep.subr.mxu0 0.0
        %2063 = vmatpush2.msra.mxu0 0.0
        %2064 = vmatprep.subr.mxu0 0.0
        %2065 = vmatpush2.msra.mxu0 0.0
        %2066 = vmatprep.subr.mxu0 0.0
        %2067 = vmatpush2.msra.mxu0 0.0
        %2068 = vmatprep.subr.mxu0 0.0
        %2069 = vmatpush2.msra.mxu0 0.0
        %2070 = vmatprep.subr.mxu0 0.0
        %2071 = vmatpush2.msra.mxu0 0.0
        %2072 = vmatprep.subr.mxu0 0.0
        %2073 = vmatpush2.msra.mxu0 0.0
        %2074 = vmatprep.mubr.f32.mxu0 0.0
        %2075 = vmatmul.mubr.f32.gmra.mxu0 %v2008
        %v2076 = vpop.f32.mrf.mxu0
        %v2077 = vadd.f32 0.0, %v2076
        %v2078 = vpop.f32.mrf.mxu0
        %2079 = vdwg.mxu0
        %2080 = vrot.lane.b32.xlu0 %v1643, 64
        %v2081 = vpop.permute.xlu0 %2080
        %v2084 = vsel %vm629, %v2001, 0
        %2086 = vmatprep.subr.mxu0 0.0
        %2087 = vmatpush1.msra.mxu0 0.0
        %2088 = vmatprep.subr.mxu0 0.0
        %2089 = vmatpush1.msra.mxu0 0.0
        %2090 = vmatprep.subr.mxu0 0.0
        %2091 = vmatpush1.msra.mxu0 0.0
        %2092 = vmatprep.subr.mxu0 0.0
        %2093 = vmatpush1.msra.mxu0 0.0
        %2094 = vmatprep.subr.mxu0 0.0
        %2095 = vmatpush1.msra.mxu0 0.0
        %2096 = vmatprep.subr.mxu0 0.0
        %2097 = vmatpush1.msra.mxu0 0.0
        %2098 = vmatprep.subr.mxu0 0.0
        %2099 = vmatpush1.msra.mxu0 0.0
        %2100 = vmatprep.subr.mxu0 0.0
        %2101 = vmatpush1.msra.mxu0 0.0
        %2102 = vmatprep.subr.mxu0 0.0
        %2103 = vmatpush1.msra.mxu0 0.0
        %2104 = vmatprep.subr.mxu0 0.0
        %2105 = vmatpush1.msra.mxu0 0.0
        %2106 = vmatprep.subr.mxu0 0.0
        %2107 = vmatpush1.msra.mxu0 0.0
        %2108 = vmatprep.subr.mxu0 0.0
        %2109 = vmatpush1.msra.mxu0 0.0
        %2110 = vmatprep.subr.mxu0 0.0
        %2111 = vmatpush1.msra.mxu0 0.0
        %2112 = vmatprep.subr.mxu0 0.0
        %2113 = vmatpush1.msra.mxu0 0.0
        %2114 = vmatprep.subr.mxu0 0.0
        %2115 = vmatpush1.msra.mxu0 0.0
        %2116 = vmatprep.subr.mxu0 0.0
        %2117 = vmatpush1.msra.mxu0 %v2081
        %2118 = vmatprep.subr.mxu0 0.0
        %2119 = vmatpush2.msra.mxu0 0.0
        %2120 = vmatprep.subr.mxu0 0.0
        %2121 = vmatpush2.msra.mxu0 0.0
        %2122 = vmatprep.subr.mxu0 0.0
        %2123 = vmatpush2.msra.mxu0 0.0
        %2124 = vmatprep.subr.mxu0 0.0
        %2125 = vmatpush2.msra.mxu0 0.0
        %2126 = vmatprep.subr.mxu0 0.0
        %2127 = vmatpush2.msra.mxu0 0.0
        %2128 = vmatprep.subr.mxu0 0.0
        %2129 = vmatpush2.msra.mxu0 0.0
        %2130 = vmatprep.subr.mxu0 0.0
        %2131 = vmatpush2.msra.mxu0 0.0
        %2132 = vmatprep.subr.mxu0 0.0
        %2133 = vmatpush2.msra.mxu0 0.0
        %2134 = vmatprep.subr.mxu0 0.0
        %2135 = vmatpush2.msra.mxu0 0.0
        %2136 = vmatprep.subr.mxu0 0.0
        %2137 = vmatpush2.msra.mxu0 0.0
        %2138 = vmatprep.subr.mxu0 0.0
        %2139 = vmatpush2.msra.mxu0 0.0
        %2140 = vmatprep.subr.mxu0 0.0
        %2141 = vmatpush2.msra.mxu0 0.0
        %2142 = vmatprep.subr.mxu0 0.0
        %2143 = vmatpush2.msra.mxu0 0.0
        %2144 = vmatprep.subr.mxu0 0.0
        %2145 = vmatpush2.msra.mxu0 0.0
        %2146 = vmatprep.subr.mxu0 0.0
        %2147 = vmatpush2.msra.mxu0 0.0
        %2148 = vmatprep.subr.mxu0 0.0
        %2149 = vmatpush2.msra.mxu0 0.0
        %2150 = vmatprep.mubr.f32.mxu0 0.0
        %2151 = vmatmul.mubr.f32.gmra.mxu0 %v2084
        %v2152 = vpop.f32.mrf.mxu0
        %v2153 = vadd.f32 0.0, %v2152
        %v2154 = vpop.f32.mrf.mxu0
        %2155 = vdwg.mxu0
        %2156 = vrot.lane.b32.xlu0 %v1645, 64
        %v2157 = vpop.permute.xlu0 %2156
        %v2160 = vsel %vm629, %v2002, 0
        %2162 = vmatprep.subr.mxu0 0.0
        %2163 = vmatpush1.msra.mxu0 0.0
        %2164 = vmatprep.subr.mxu0 0.0
        %2165 = vmatpush1.msra.mxu0 0.0
        %2166 = vmatprep.subr.mxu0 0.0
        %2167 = vmatpush1.msra.mxu0 0.0
        %2168 = vmatprep.subr.mxu0 0.0
        %2169 = vmatpush1.msra.mxu0 0.0
        %2170 = vmatprep.subr.mxu0 0.0
        %2171 = vmatpush1.msra.mxu0 0.0
        %2172 = vmatprep.subr.mxu0 0.0
        %2173 = vmatpush1.msra.mxu0 0.0
        %2174 = vmatprep.subr.mxu0 0.0
        %2175 = vmatpush1.msra.mxu0 0.0
        %2176 = vmatprep.subr.mxu0 0.0
        %2177 = vmatpush1.msra.mxu0 0.0
        %2178 = vmatprep.subr.mxu0 0.0
        %2179 = vmatpush1.msra.mxu0 0.0
        %2180 = vmatprep.subr.mxu0 0.0
        %2181 = vmatpush1.msra.mxu0 0.0
        %2182 = vmatprep.subr.mxu0 0.0
        %2183 = vmatpush1.msra.mxu0 0.0
        %2184 = vmatprep.subr.mxu0 0.0
        %2185 = vmatpush1.msra.mxu0 0.0
        %2186 = vmatprep.subr.mxu0 0.0
        %2187 = vmatpush1.msra.mxu0 0.0
        %2188 = vmatprep.subr.mxu0 0.0
        %2189 = vmatpush1.msra.mxu0 0.0
        %2190 = vmatprep.subr.mxu0 0.0
        %2191 = vmatpush1.msra.mxu0 0.0
        %2192 = vmatprep.subr.mxu0 0.0
        %2193 = vmatpush1.msra.mxu0 %v2157
        %2194 = vmatprep.subr.mxu0 0.0
        %2195 = vmatpush2.msra.mxu0 0.0
        %2196 = vmatprep.subr.mxu0 0.0
        %2197 = vmatpush2.msra.mxu0 0.0
        %2198 = vmatprep.subr.mxu0 0.0
        %2199 = vmatpush2.msra.mxu0 0.0
        %2200 = vmatprep.subr.mxu0 0.0
        %2201 = vmatpush2.msra.mxu0 0.0
        %2202 = vmatprep.subr.mxu0 0.0
        %2203 = vmatpush2.msra.mxu0 0.0
        %2204 = vmatprep.subr.mxu0 0.0
        %2205 = vmatpush2.msra.mxu0 0.0
        %2206 = vmatprep.subr.mxu0 0.0
        %2207 = vmatpush2.msra.mxu0 0.0
        %2208 = vmatprep.subr.mxu0 0.0
        %2209 = vmatpush2.msra.mxu0 0.0
        %2210 = vmatprep.subr.mxu0 0.0
        %2211 = vmatpush2.msra.mxu0 0.0
        %2212 = vmatprep.subr.mxu0 0.0
        %2213 = vmatpush2.msra.mxu0 0.0
        %2214 = vmatprep.subr.mxu0 0.0
        %2215 = vmatpush2.msra.mxu0 0.0
        %2216 = vmatprep.subr.mxu0 0.0
        %2217 = vmatpush2.msra.mxu0 0.0
        %2218 = vmatprep.subr.mxu0 0.0
        %2219 = vmatpush2.msra.mxu0 0.0
        %2220 = vmatprep.subr.mxu0 0.0
        %2221 = vmatpush2.msra.mxu0 0.0
        %2222 = vmatprep.subr.mxu0 0.0
        %2223 = vmatpush2.msra.mxu0 0.0
        %2224 = vmatprep.subr.mxu0 0.0
        %2225 = vmatpush2.msra.mxu0 0.0
        %2226 = vmatprep.mubr.f32.mxu0 0.0
        %2227 = vmatmul.mubr.f32.gmra.mxu0 %v2160
        %v2228 = vpop.f32.mrf.mxu0
        %v2229 = vadd.f32 0.0, %v2228
        %v2230 = vpop.f32.mrf.mxu0
        %2231 = vdwg.mxu0
        %2232 = vrot.lane.b32.xlu0 %v1647, 64
        %v2233 = vpop.permute.xlu0 %2232
        %v2236 = vsel %vm629, %v2003, 0
        %2238 = vmatprep.subr.mxu0 0.0
        %2239 = vmatpush1.msra.mxu0 0.0
        %2240 = vmatprep.subr.mxu0 0.0
        %2241 = vmatpush1.msra.mxu0 0.0
        %2242 = vmatprep.subr.mxu0 0.0
        %2243 = vmatpush1.msra.mxu0 0.0
        %2244 = vmatprep.subr.mxu0 0.0
        %2245 = vmatpush1.msra.mxu0 0.0
        %2246 = vmatprep.subr.mxu0 0.0
        %2247 = vmatpush1.msra.mxu0 0.0
        %2248 = vmatprep.subr.mxu0 0.0
        %2249 = vmatpush1.msra.mxu0 0.0
        %2250 = vmatprep.subr.mxu0 0.0
        %2251 = vmatpush1.msra.mxu0 0.0
        %2252 = vmatprep.subr.mxu0 0.0
        %2253 = vmatpush1.msra.mxu0 0.0
        %2254 = vmatprep.subr.mxu0 0.0
        %2255 = vmatpush1.msra.mxu0 0.0
        %2256 = vmatprep.subr.mxu0 0.0
        %2257 = vmatpush1.msra.mxu0 0.0
        %2258 = vmatprep.subr.mxu0 0.0
        %2259 = vmatpush1.msra.mxu0 0.0
        %2260 = vmatprep.subr.mxu0 0.0
        %2261 = vmatpush1.msra.mxu0 0.0
        %2262 = vmatprep.subr.mxu0 0.0
        %2263 = vmatpush1.msra.mxu0 0.0
        %2264 = vmatprep.subr.mxu0 0.0
        %2265 = vmatpush1.msra.mxu0 0.0
        %2266 = vmatprep.subr.mxu0 0.0
        %2267 = vmatpush1.msra.mxu0 0.0
        %2268 = vmatprep.subr.mxu0 0.0
        %2269 = vmatpush1.msra.mxu0 %v2233
        %2270 = vmatprep.subr.mxu0 0.0
        %2271 = vmatpush2.msra.mxu0 0.0
        %2272 = vmatprep.subr.mxu0 0.0
        %2273 = vmatpush2.msra.mxu0 0.0
        %2274 = vmatprep.subr.mxu0 0.0
        %2275 = vmatpush2.msra.mxu0 0.0
        %2276 = vmatprep.subr.mxu0 0.0
        %2277 = vmatpush2.msra.mxu0 0.0
        %2278 = vmatprep.subr.mxu0 0.0
        %2279 = vmatpush2.msra.mxu0 0.0
        %2280 = vmatprep.subr.mxu0 0.0
        %2281 = vmatpush2.msra.mxu0 0.0
        %2282 = vmatprep.subr.mxu0 0.0
        %2283 = vmatpush2.msra.mxu0 0.0
        %2284 = vmatprep.subr.mxu0 0.0
        %2285 = vmatpush2.msra.mxu0 0.0
        %2286 = vmatprep.subr.mxu0 0.0
        %2287 = vmatpush2.msra.mxu0 0.0
        %2288 = vmatprep.subr.mxu0 0.0
        %2289 = vmatpush2.msra.mxu0 0.0
        %2290 = vmatprep.subr.mxu0 0.0
        %2291 = vmatpush2.msra.mxu0 0.0
        %2292 = vmatprep.subr.mxu0 0.0
        %2293 = vmatpush2.msra.mxu0 0.0
        %2294 = vmatprep.subr.mxu0 0.0
        %2295 = vmatpush2.msra.mxu0 0.0
        %2296 = vmatprep.subr.mxu0 0.0
        %2297 = vmatpush2.msra.mxu0 0.0
        %2298 = vmatprep.subr.mxu0 0.0
        %2299 = vmatpush2.msra.mxu0 0.0
        %2300 = vmatprep.subr.mxu0 0.0
        %2301 = vmatpush2.msra.mxu0 0.0
        %2302 = vmatprep.mubr.f32.mxu0 0.0
        %2303 = vmatmul.mubr.f32.gmra.mxu0 %v2236
        %v2304 = vpop.f32.mrf.mxu0
        %v2305 = vadd.f32 0.0, %v2304
        %v2306 = vpop.f32.mrf.mxu0
        %2307 = vdwg.mxu0
        %2309 = vrot.lane.b32.xlu0 %v2153, 8
        %v2310 = vpop.permute.xlu0 %2309
        %2313 = vrot.lane.b32.xlu0 %v2229, 16
        %v2314 = vpop.permute.xlu0 %2313
        %2317 = vrot.lane.b32.xlu0 %v2305, 24
        %v2318 = vpop.permute.xlu0 %2317
        %v2320 = vsel %vm629, %v2077, %v2310
        %v2321 = vsel %vm1301, %v2320, %v2314
        %v2322 = vsel %vm1303, %v2321, %v2318
        %v2323 = vpack.c.bf16 %v2322, %v2322
        %s2324 = scalar_lea.vmem %s4, 16
        %v2325 = vld [vmem:[%s2324] sm:$0xf]
        %v2326 = vld [vmem:[%s2324 + $0x4] sm:$0xf]
        %v2327 = vld [vmem:[%s2324 + $0x8] sm:$0xf]
        %v2328 = vld [vmem:[%s2324 + $0xc] sm:$0xf]
        %v2329 = vlaneseq
        %v2330 = vshrl.u32 %v2329, 7
        %v2331 = vsub.s32 1, %v2330
        %v2332 = vrot.slane %v1575, %v2331
        %v2337 = vunpack.c.l.b16 %v2325
        %v2338 = vunpack.c.l.b16 %v2326
        %v2339 = vunpack.c.l.b16 %v2327
        %v2340 = vunpack.c.l.b16 %v2328
        %v2341 = vpack.c.b16 %v2338, %v2337
        %v2342 = vpack.c.b16 %v2340, %v2339
        %v2346 = vsel %vm519, %v2323, 0
        %2348 = vmatprep.subr.bf16.mxu0 0
        %2349 = vmatpush1.bf16.msra.mxu0 0
        %2350 = vmatprep.subr.bf16.mxu0 0
        %2351 = vmatpush1.bf16.msra.mxu0 0
        %2352 = vmatprep.subr.bf16.mxu0 0
        %2353 = vmatpush1.bf16.msra.mxu0 0
        %2354 = vmatprep.subr.bf16.mxu0 0
        %2355 = vmatpush1.bf16.msra.mxu0 0
        %2356 = vmatprep.subr.bf16.mxu0 0
        %2357 = vmatpush1.bf16.msra.mxu0 0
        %2358 = vmatprep.subr.bf16.mxu0 0
        %2359 = vmatpush1.bf16.msra.mxu0 0
        %2360 = vmatprep.subr.bf16.mxu0 0
        %2361 = vmatpush1.bf16.msra.mxu0 %v2342
        %2362 = vmatprep.subr.bf16.mxu0 0
        %2363 = vmatpush1.bf16.msra.mxu0 %v2341
        %2364 = vmatprep.subr.bf16.mxu0 0
        %2365 = vmatpush2.bf16.msra.mxu0 0
        %2366 = vmatprep.subr.bf16.mxu0 0
        %2367 = vmatpush2.bf16.msra.mxu0 0
        %2368 = vmatprep.subr.bf16.mxu0 0
        %2369 = vmatpush2.bf16.msra.mxu0 0
        %2370 = vmatprep.subr.bf16.mxu0 0
        %2371 = vmatpush2.bf16.msra.mxu0 0
        %2372 = vmatprep.subr.bf16.mxu0 0
        %2373 = vmatpush2.bf16.msra.mxu0 0
        %2374 = vmatprep.subr.bf16.mxu0 0
        %2375 = vmatpush2.bf16.msra.mxu0 0
        %2376 = vmatprep.subr.bf16.mxu0 0
        %2377 = vmatpush2.bf16.msra.mxu0 0
        %2378 = vmatprep.subr.bf16.mxu0 0
        %2379 = vmatpush2.bf16.msra.mxu0 0
        %2380 = vmatprep.mubr.bf16.mxu0 0
        %2381 = vmatmul.mubr.bf16.gmra.mxu0 %v2346
        %v2382 = vpop.f32.mrf.mxu0
        %v2383 = vadd.f32 %v2332, %v2382
        %v2384 = vpop.f32.mrf.mxu0
        %v2385 = vpop.f32.mrf.mxu0
        %v2386 = vpop.f32.mrf.mxu0
        %2387 = vdwg.mxu0
        %v2388 = vadd.f32 %v1573, %v2383
        %v2389 = vsel %vm519, %v2388, 0.0
        %2390 = vadd.xlane.f32.xlu0 %v2389
        %v2391 = vpop.xlane.xlu0 %2390
        %v2392 = vmul.f32 %v2391, %v523
        %v2393 = vmul.f32 %v2388, %v2388
        %v2394 = vsel %vm519, %v2393, 0.0
        %2395 = vadd.xlane.f32.xlu0 %v2394
        %v2396 = vpop.xlane.xlu0 %2395
        %v2397 = vmul.f32 %v2396, %v523
        %v2398 = vmul.f32 %v2392, %v2392
        %v2399 = vsub.f32 %v2397, %v2398
        %v2400 = vsub.f32 %v2388, %v2392
        %v2401 = vadd.f32 %v2399, 1e-12
        %v2402 = vrsqrt.pop %v2401
        %v2403 = vmul.f32 %v2400, %v2402
        %v2404 = vlaneseq
        %v2405 = vshrl.u32 %v2404, 7
        %v2406 = vsub.s32 4, %v2405
        %v2407 = vrot.slane %v1575, %v2406
        %v2408 = vmul.f32 %v2403, %v2407
        %v2409 = vlaneseq
        %v2410 = vshrl.u32 %v2409, 7
        %v2411 = vsub.s32 5, %v2410
        %v2412 = vrot.slane %v1575, %v2411
        %v2413 = vadd.f32 %v2408, %v2412
        %v2414 = vpack.c.bf16 %v2413, %v2413
        %s2415 = scalar_lea.vmem %s5, 16
        %v2416 = vld [vmem:[%s2415] sm:$0xf]
        %v2417 = vld [vmem:[%s2415 + $0x4] sm:$0xf]
        %v2418 = vld [vmem:[%s2415 + $0x8] sm:$0xf]
        %v2419 = vld [vmem:[%s2415 + $0xc] sm:$0xf]
        %v2420 = vlaneseq
        %v2421 = vshrl.u32 %v2420, 7
        %v2422 = vsub.s32 2, %v2421
        %v2423 = vrot.slane %v1575, %v2422
        %v2428 = vunpack.c.l.b16 %v2416
        %v2429 = vunpack.c.l.b16 %v2417
        %v2430 = vunpack.c.l.b16 %v2418
        %v2431 = vunpack.c.l.b16 %v2419
        %v2432 = vpack.c.b16 %v2429, %v2428
        %v2433 = vpack.c.b16 %v2431, %v2430
        %v2437 = vsel %vm519, %v2414, 0
        %2439 = vmatprep.subr.bf16.mxu0 0
        %2440 = vmatpush1.bf16.msra.mxu0 0
        %2441 = vmatprep.subr.bf16.mxu0 0
        %2442 = vmatpush1.bf16.msra.mxu0 0
        %2443 = vmatprep.subr.bf16.mxu0 0
        %2444 = vmatpush1.bf16.msra.mxu0 0
        %2445 = vmatprep.subr.bf16.mxu0 0
        %2446 = vmatpush1.bf16.msra.mxu0 0
        %2447 = vmatprep.subr.bf16.mxu0 0
        %2448 = vmatpush1.bf16.msra.mxu0 0
        %2449 = vmatprep.subr.bf16.mxu0 0
        %2450 = vmatpush1.bf16.msra.mxu0 0
        %2451 = vmatprep.subr.bf16.mxu0 0
        %2452 = vmatpush1.bf16.msra.mxu0 %v2433
        %2453 = vmatprep.subr.bf16.mxu0 0
        %2454 = vmatpush1.bf16.msra.mxu0 %v2432
        %2455 = vmatprep.subr.bf16.mxu0 0
        %2456 = vmatpush2.bf16.msra.mxu0 0
        %2457 = vmatprep.subr.bf16.mxu0 0
        %2458 = vmatpush2.bf16.msra.mxu0 0
        %2459 = vmatprep.subr.bf16.mxu0 0
        %2460 = vmatpush2.bf16.msra.mxu0 0
        %2461 = vmatprep.subr.bf16.mxu0 0
        %2462 = vmatpush2.bf16.msra.mxu0 0
        %2463 = vmatprep.subr.bf16.mxu0 0
        %2464 = vmatpush2.bf16.msra.mxu0 0
        %2465 = vmatprep.subr.bf16.mxu0 0
        %2466 = vmatpush2.bf16.msra.mxu0 0
        %2467 = vmatprep.subr.bf16.mxu0 0
        %2468 = vmatpush2.bf16.msra.mxu0 0
        %2469 = vmatprep.subr.bf16.mxu0 0
        %2470 = vmatpush2.bf16.msra.mxu0 0
        %2471 = vmatprep.mubr.bf16.mxu0 0
        %2472 = vmatmul.mubr.bf16.gmra.mxu0 %v2437
        %v2473 = vpop.f32.mrf.mxu0
        %v2474 = vadd.f32 %v2423, %v2473
        %v2475 = vpop.f32.mrf.mxu0
        %v2476 = vpop.f32.mrf.mxu0
        %v2477 = vpop.f32.mrf.mxu0
        %2478 = vdwg.mxu0
        %v2479 = vmul.f32 %v2474, 0.5
        %v2480 = vmul.f32 %v2474, 0.044715
        %v2481 = vmul.f32 %v2480, %v2474
        %v2482 = vmul.f32 %v2481, %v2474
        %v2483 = vadd.f32 %v2474, %v2482
        %v2484 = vmul.f32 %v2483, 0.7978846
        %v2485 = vtanh.pop %v2484
        %v2486 = vadd.f32 %v2485, 1.0
        %v2487 = vmul.f32 %v2479, %v2486
        %v2488 = vpack.c.bf16 %v2487, %v2487
        %s2489 = scalar_lea.vmem %s6, 32
        %v2490 = vld [vmem:[%s2489] sm:$0xf]
        %v2491 = vld [vmem:[%s2489 + $0x4] sm:$0xf]
        %v2492 = vld [vmem:[%s2489 + $0x8] sm:$0xf]
        %v2493 = vld [vmem:[%s2489 + $0xc] sm:$0xf]
        %v2494 = vld [vmem:[%s2489 + $0x10] sm:$0xf]
        %v2495 = vld [vmem:[%s2489 + $0x14] sm:$0xf]
        %v2496 = vld [vmem:[%s2489 + $0x18] sm:$0xf]
        %v2497 = vld [vmem:[%s2489 + $0x1c] sm:$0xf]
        %v2498 = vlaneseq
        %v2499 = vshrl.u32 %v2498, 7
        %v2500 = vsub.s32 3, %v2499
        %v2501 = vrot.slane %v1575, %v2500
        %v2510 = vunpack.c.l.b16 %v2490
        %v2511 = vunpack.c.l.b16 %v2491
        %v2512 = vunpack.c.l.b16 %v2492
        %v2513 = vunpack.c.l.b16 %v2493
        %v2514 = vunpack.c.l.b16 %v2494
        %v2515 = vunpack.c.l.b16 %v2495
        %v2516 = vunpack.c.l.b16 %v2496
        %v2517 = vunpack.c.l.b16 %v2497
        %v2518 = vpack.c.b16 %v2511, %v2510
        %v2519 = vpack.c.b16 %v2513, %v2512
        %v2520 = vpack.c.b16 %v2515, %v2514
        %v2521 = vpack.c.b16 %v2517, %v2516
        %v2527 = vsel %vm445, %v2488, 0
        %2529 = vmatprep.subr.bf16.mxu0 0
        %2530 = vmatpush1.bf16.msra.mxu0 0
        %2531 = vmatprep.subr.bf16.mxu0 0
        %2532 = vmatpush1.bf16.msra.mxu0 0
        %2533 = vmatprep.subr.bf16.mxu0 0
        %2534 = vmatpush1.bf16.msra.mxu0 0
        %2535 = vmatprep.subr.bf16.mxu0 0
        %2536 = vmatpush1.bf16.msra.mxu0 0
        %2537 = vmatprep.subr.bf16.mxu0 0
        %2538 = vmatpush1.bf16.msra.mxu0 %v2521
        %2539 = vmatprep.subr.bf16.mxu0 0
        %2540 = vmatpush1.bf16.msra.mxu0 %v2520
        %2541 = vmatprep.subr.bf16.mxu0 0
        %2542 = vmatpush1.bf16.msra.mxu0 %v2519
        %2543 = vmatprep.subr.bf16.mxu0 0
        %2544 = vmatpush1.bf16.msra.mxu0 %v2518
        %2545 = vmatprep.subr.bf16.mxu0 0
        %2546 = vmatpush2.bf16.msra.mxu0 0
        %2547 = vmatprep.subr.bf16.mxu0 0
        %2548 = vmatpush2.bf16.msra.mxu0 0
        %2549 = vmatprep.subr.bf16.mxu0 0
        %2550 = vmatpush2.bf16.msra.mxu0 0
        %2551 = vmatprep.subr.bf16.mxu0 0
        %2552 = vmatpush2.bf16.msra.mxu0 0
        %2553 = vmatprep.subr.bf16.mxu0 0
        %2554 = vmatpush2.bf16.msra.mxu0 0
        %2555 = vmatprep.subr.bf16.mxu0 0
        %2556 = vmatpush2.bf16.msra.mxu0 0
        %2557 = vmatprep.subr.bf16.mxu0 0
        %2558 = vmatpush2.bf16.msra.mxu0 0
        %2559 = vmatprep.subr.bf16.mxu0 0
        %2560 = vmatpush2.bf16.msra.mxu0 0
        %2561 = vmatprep.mubr.bf16.mxu0 0
        %2562 = vmatmul.mubr.bf16.gmra.mxu0 %v2527
        %v2563 = vpop.f32.mrf.mxu0
        %v2564 = vadd.f32 %v2501, %v2563
        %v2565 = vpop.f32.mrf.mxu0
        %v2566 = vpop.f32.mrf.mxu0
        %v2567 = vpop.f32.mrf.mxu0
        %2568 = vdwg.mxu0
        %v2569 = vadd.f32 %v2413, %v2564
        %v2570 = vsel %vm519, %v2569, 0.0
        %2571 = vadd.xlane.f32.xlu0 %v2570
        %v2572 = vpop.xlane.xlu0 %2571
        %v2573 = vmul.f32 %v2572, %v523
        %v2574 = vmul.f32 %v2569, %v2569
        %v2575 = vsel %vm519, %v2574, 0.0
        %2576 = vadd.xlane.f32.xlu0 %v2575
        %v2577 = vpop.xlane.xlu0 %2576
        %v2578 = vmul.f32 %v2577, %v523
        %v2579 = vmul.f32 %v2573, %v2573
        %v2580 = vsub.f32 %v2578, %v2579
        %v2581 = vsub.f32 %v2569, %v2573
        %v2582 = vadd.f32 %v2580, 1e-12
        %v2583 = vrsqrt.pop %v2582
        %v2584 = vmul.f32 %v2581, %v2583
        %v2585 = vlaneseq
        %v2586 = vshrl.u32 %v2585, 7
        %v2587 = vsub.s32 6, %v2586
        %v2588 = vrot.slane %v1575, %v2587
        %v2589 = vmul.f32 %v2584, %v2588
        %v2590 = vlaneseq
        %v2591 = vshrl.u32 %v2590, 7
        %v2592 = vsub.s32 7, %v2591
        %v2593 = vrot.slane %v1575, %v2592
        %v2594 = vadd.f32 %v2589, %v2593
        %v2595 = vpack.c.bf16 %v2594, %v2594
        %v2596 = vld [vmem:[%s9] sm:$0xf]
        %v2597 = vld [vmem:[%s9 + $0x4] sm:$0xf]
        %v2598 = vld [vmem:[%s9 + $0x8] sm:$0xf]
        %v2599 = vld [vmem:[%s9 + $0xc] sm:$0xf]
        %v2604 = vunpack.c.l.b16 %v2596
        %v2605 = vunpack.c.l.b16 %v2597
        %v2606 = vunpack.c.l.b16 %v2598
        %v2607 = vunpack.c.l.b16 %v2599
        %v2608 = vpack.c.b16 %v2605, %v2604
        %v2609 = vpack.c.b16 %v2607, %v2606
        %v2613 = vrot.slane %v359, 2
        %v2616 = vsel %vm519, %v2595, 0
        %2618 = vmatprep.subr.bf16.mxu0 0
        %2619 = vmatpush1.bf16.msra.mxu0 0
        %2620 = vmatprep.subr.bf16.mxu0 0
        %2621 = vmatpush1.bf16.msra.mxu0 0
        %2622 = vmatprep.subr.bf16.mxu0 0
        %2623 = vmatpush1.bf16.msra.mxu0 0
        %2624 = vmatprep.subr.bf16.mxu0 0
        %2625 = vmatpush1.bf16.msra.mxu0 0
        %2626 = vmatprep.subr.bf16.mxu0 0
        %2627 = vmatpush1.bf16.msra.mxu0 0
        %2628 = vmatprep.subr.bf16.mxu0 0
        %2629 = vmatpush1.bf16.msra.mxu0 0
        %2630 = vmatprep.subr.bf16.mxu0 0
        %2631 = vmatpush1.bf16.msra.mxu0 %v2609
        %2632 = vmatprep.subr.bf16.mxu0 0
        %2633 = vmatpush1.bf16.msra.mxu0 %v2608
        %2634 = vmatprep.subr.bf16.mxu0 0
        %2635 = vmatpush2.bf16.msra.mxu0 0
        %2636 = vmatprep.subr.bf16.mxu0 0
        %2637 = vmatpush2.bf16.msra.mxu0 0
        %2638 = vmatprep.subr.bf16.mxu0 0
        %2639 = vmatpush2.bf16.msra.mxu0 0
        %2640 = vmatprep.subr.bf16.mxu0 0
        %2641 = vmatpush2.bf16.msra.mxu0 0
        %2642 = vmatprep.subr.bf16.mxu0 0
        %2643 = vmatpush2.bf16.msra.mxu0 0
        %2644 = vmatprep.subr.bf16.mxu0 0
        %2645 = vmatpush2.bf16.msra.mxu0 0
        %2646 = vmatprep.subr.bf16.mxu0 0
        %2647 = vmatpush2.bf16.msra.mxu0 0
        %2648 = vmatprep.subr.bf16.mxu0 0
        %2649 = vmatpush2.bf16.msra.mxu0 0
        %2650 = vmatprep.mubr.bf16.mxu0 0
        %2651 = vmatmul.mubr.bf16.gmra.mxu0 %v2616
        %v2652 = vpop.f32.mrf.mxu0
        %v2653 = vadd.f32 %v2613, %v2652
        %v2654 = vpop.f32.mrf.mxu0
        %v2655 = vpop.f32.mrf.mxu0
        %v2656 = vpop.f32.mrf.mxu0
        %2657 = vdwg.mxu0
        %v2658 = vtanh.pop %v2653
        %v2659 = vpack.c.bf16 %v2658, %v2658
        %v2660 = vld [vmem:[%s10] sm:$0xf]
        %v2661 = vld [vmem:[%s10 + $0x4] sm:$0xf]
        %v2662 = vld [vmem:[%s10 + $0x8] sm:$0xf]
        %v2663 = vld [vmem:[%s10 + $0xc] sm:$0xf]
        %v2668 = vunpack.c.l.b16 %v2660
        %v2669 = vunpack.c.l.b16 %v2661
        %v2670 = vunpack.c.l.b16 %v2662
        %v2671 = vunpack.c.l.b16 %v2663
        %v2672 = vpack.c.b16 %v2669, %v2668
        %v2673 = vpack.c.b16 %v2671, %v2670
        %v2676 = vrot.slane %v359, 3
        %v2679 = vsel %vm519, %v2659, 0
        %2681 = vmatprep.subr.bf16.mxu0 0
        %2682 = vmatpush1.bf16.msra.mxu0 0
        %2683 = vmatprep.subr.bf16.mxu0 0
        %2684 = vmatpush1.bf16.msra.mxu0 0
        %2685 = vmatprep.subr.bf16.mxu0 0
        %2686 = vmatpush1.bf16.msra.mxu0 0
        %2687 = vmatprep.subr.bf16.mxu0 0
        %2688 = vmatpush1.bf16.msra.mxu0 0
        %2689 = vmatprep.subr.bf16.mxu0 0
        %2690 = vmatpush1.bf16.msra.mxu0 0
        %2691 = vmatprep.subr.bf16.mxu0 0
        %2692 = vmatpush1.bf16.msra.mxu0 0
        %2693 = vmatprep.subr.bf16.mxu0 0
        %2694 = vmatpush1.bf16.msra.mxu0 %v2673
        %2695 = vmatprep.subr.bf16.mxu0 0
        %2696 = vmatpush1.bf16.msra.mxu0 %v2672
        %2697 = vmatprep.subr.bf16.mxu0 0
        %2698 = vmatpush2.bf16.msra.mxu0 0
        %2699 = vmatprep.subr.bf16.mxu0 0
        %2700 = vmatpush2.bf16.msra.mxu0 0
        %2701 = vmatprep.subr.bf16.mxu0 0
        %2702 = vmatpush2.bf16.msra.mxu0 0
        %2703 = vmatprep.subr.bf16.mxu0 0
        %2704 = vmatpush2.bf16.msra.mxu0 0
        %2705 = vmatprep.subr.bf16.mxu0 0
        %2706 = vmatpush2.bf16.msra.mxu0 0
        %2707 = vmatprep.subr.bf16.mxu0 0
        %2708 = vmatpush2.bf16.msra.mxu0 0
        %2709 = vmatprep.subr.bf16.mxu0 0
        %2710 = vmatpush2.bf16.msra.mxu0 0
        %2711 = vmatprep.subr.bf16.mxu0 0
        %2712 = vmatpush2.bf16.msra.mxu0 0
        %2713 = vmatprep.mubr.bf16.mxu0 0
        %2714 = vmatmul.mubr.bf16.gmra.mxu0 %v2679
        %v2715 = vpop.f32.mrf.mxu0
        %v2716 = vadd.f32 %v2676, %v2715
        %v2717 = vpop.f32.mrf.mxu0
        %v2718 = vpop.f32.mrf.mxu0
        %v2719 = vpop.f32.mrf.mxu0
        %2720 = vdwg.mxu0
        %2721 = vst [vmem:[%s354] sm:$0x1] %v2716
        %s2722 = sand.u32 %s254, 1
        %s2723 = scalar_lea.sflag [#allocation5], %s2722
        %s2724 = sand.u32 %s254, 1
        %s2725 = scalar_lea.vmem [#allocation4], %s2724
        // Predicated region
        $region61: #{sentiment_classifier_forward.1} parent=59 // pred_check
          %p2726 = pneg %p264
        $region62: #{sentiment_classifier_forward.1} parent=59 // pred_check_branch
          %2728 = sbr.rel (%p2726) target = $region64
        $region63: #{sentiment_classifier_forward.1} parent=59 // pred_region
          %s2730 = ssub.s32 16, 16
          %2731 = vsyncadd %s2723, %s2730
          %s2732 = smul.addr %s31, 16
          %s2733 = scalar_lea.hbm %s11, %s2732
          %s2735 = sshll.u32 %s2725, 4
          %s2736 = int_to_ptr.vmem [resolvable:$true] %s2735
          %2738 = dma.vmem_to_hbm [thread:$0]  %s2736, 16, %s2733, %s2723
        $region64: #{sentiment_classifier_forward.1} parent=59 // pred_fallthru
          _
      $region60: #{sentiment_classifier_forward.1} parent=5 // pred_fallthru
        _
      %p2739 = scmp.le.s32.totalorder 2, %s26
      // Predicated region
      $region65: #{sentiment_classifier_forward.1} parent=5 // pred_check
        %p2740 = pneg %p2739
      $region66: #{sentiment_classifier_forward.1} parent=5 // pred_check_branch
        %2742 = sbr.rel (%p2740) target = $region68
      $region67: #{sentiment_classifier_forward.1} parent=5 // pred_region
        %s2743 = ssub.s32 %s26, 2
        // Predicated region
        $region69: #{sentiment_classifier_forward.1} parent=67 // pred_check
          %p2744 = pneg %p270
        $region70: #{sentiment_classifier_forward.1} parent=67 // pred_check_branch
          %2746 = sbr.rel (%p2744) target = $region72
        $region71: #{sentiment_classifier_forward.1} parent=67 // pred_region
          %s2747 = sand.u32 %s255, 1
          %s2748 = scalar_lea.sflag [#allocation5], %s2747
          %s2749 = sand.u32 %s255, 1
          %s2750 = scalar_lea.vmem [#allocation4], %s2749
          %2751 = dma.done %s2748, 16
        $region72: #{sentiment_classifier_forward.1} parent=67 // pred_fallthru
          _
      $region68: #{sentiment_classifier_forward.1} parent=5 // pred_fallthru
        _
    $region6: #{sentiment_classifier_forward.1} parent=1 // loop_footer
      %s30 = sadd.s32 1, %s26
    $region7: #{sentiment_classifier_forward.1} parent=1 // loop_footer_branch
      %25 = sbr.rel target = $region3
    $region8: #{sentiment_classifier_forward.1} parent=1 // loop_exit
      _
    %2752 = vsyncpa [#allocation5], 1
    %s2753 = scalar_lea.sflag [#allocation5], 1
    %2754 = vsyncpa %s2753, 1

</llo_original>
